<compile_context>
chip_gen: v6e
topology: v6e:2x2x1
jax: 0.10.0
libtpu: 0.0.40
codegen_flags: <defaults>
</compile_context>

<pallas_src>
import jax
import jax.numpy as jnp
from jax.experimental import pallas as pl
from jax.experimental.pallas import tpu as pltpu


# ------------------------------ static dims ---------------------------------

IMG = 28            # input spatial size (1 channel)
K = 5               # conv kernel size
C1_OUT = 6
CONV1_W = IMG - K + 1          # 24
POOL1_W = CONV1_W // 2         # 12
C2_OUT = 16
CONV2_W = POOL1_W - K + 1      # 8
POOL2_W = CONV2_W // 2         # 4
FC1, FC2, NCLS = 120, 84, 10

PAD1 = 256                     # conv1 activation lane width (6*24=144 -> 256)
CONV2_COLS = C2_OUT * CONV2_W  # 128 (already lane aligned)

WDT = jnp.bfloat16             # MXU operand dtype (f32 accumulation)
MAX_TB = 8                     # per-program batch tile


# ------------------------------ fused kernel --------------------------------

def _lenet_kernel(x_ref, w1_ref, b1_ref, se1_ref, w2_ref, b2_ref, se2_ref,
                  wf1_ref, bf1_ref, wf2_ref, bf2_ref, wf3_ref, bf3_ref,
                  out_ref):
    f32 = jnp.float32

    def mm(a, b):
        return jnp.dot(a, b, preferred_element_type=f32)

    nb = x_ref.shape[0]        # batch tile (static)

    # ---- hoisted invariants (small; big weights stream from VMEM at use) ----
    b1b = jnp.broadcast_to(b1_ref[...], (CONV1_W, PAD1))            # (24,256) f32
    b2b = jnp.broadcast_to(b2_ref[...], (CONV2_W, CONV2_COLS))      # (8,128)  f32
    se1 = se1_ref[...]                                              # (12,24)  bf16
    se2 = se2_ref[...]                                              # (4,8)    bf16

    q2_rows = []
    for n in range(nb):        # small static unroll (nb <= MAX_TB)
        xb = x_ref[n]          # (28, 28) bf16 (cast once in the wrapper)

        # -- conv1 (1->6, 5x5, VALID): 5 banded MXU matmuls, f32 accumulation.
        #    Bias is the accumulator init; ReLU only after the tap loop so the
        #    chain stays pure dot-accumulate (v7x MRB friendly).
        acc1 = b1b
        for kh in range(K):
            acc1 = acc1 + mm(xb[kh:kh + CONV1_W, :], w1_ref[kh])    # (24,256)
        a1 = jnp.maximum(acc1, 0.0)

        # -- 2x2 max-pool #1: pair maxes via XLU rolls (shift = size-1 == -1),
        #    even-row compaction via one tiny selection matmul; even-column
        #    compaction is folded into w2_band at pack time (odd / wrapped
        #    columns multiply zero weight rows).
        hv = jnp.maximum(a1, pltpu.roll(a1, shift=CONV1_W - 1, axis=0))
        hw = jnp.maximum(hv, pltpu.roll(hv, shift=PAD1 - 1, axis=1))
        q1 = mm(se1, hw.astype(WDT)).astype(WDT)                    # (12,256)

        # -- conv2 (6->16, 5x5) against the pool1-folded band weights.
        acc2 = b2b
        for kh in range(K):
            acc2 = acc2 + mm(q1[kh:kh + CONV2_W, :], w2_ref[kh])    # (8,128)
        a2 = jnp.maximum(acc2, 0.0)

        # -- 2x2 max-pool #2 (column compaction folded into wf1).
        hv2 = jnp.maximum(a2, pltpu.roll(a2, shift=CONV2_W - 1, axis=0))
        hw2 = jnp.maximum(hv2, pltpu.roll(hv2, shift=CONV2_COLS - 1, axis=1))
        q2_rows.append(mm(se2, hw2.astype(WDT)))                    # (4,128) f32

    # ---- batch-stacked FC tail: one matmul chain with M = nb, single store --
    h = jnp.broadcast_to(bf1_ref[...], (nb, FC1))                   # (nb,120) f32
    for r in range(POOL2_W):
        p2r = jnp.concatenate([q2_rows[n][r:r + 1, :] for n in range(nb)],
                              axis=0)                               # (nb,128)
        h = h + mm(p2r.astype(WDT), wf1_ref[r])
    h = jnp.maximum(h, 0.0).astype(WDT)

    h = jnp.maximum(mm(h, wf2_ref[...]) + bf2_ref[...], 0.0).astype(WDT)

    logits = mm(h, wf3_ref[...]) + bf3_ref[...]                     # (nb,10) f32
    z = logits - jnp.max(logits, axis=-1, keepdims=True)
    e = jnp.exp(z)
    probs = e * pl.reciprocal(jnp.sum(e, axis=-1, keepdims=True), approx=True)
    out_ref[...] = probs


# ------------------------------ kernel wrapper -------------------------------

def _const_index_map(ndim):
    return lambda i, _nd=ndim: (0,) * _nd


def lenet_forward(x_nchw, packed):
    """x_nchw: (N, 1, 28, 28) f32; packed: dict from pack_params()."""
    n, c, h, w = x_nchw.shape
    assert c == 1 and h == IMG and w == IMG
    x3 = x_nchw.reshape(n, IMG, IMG).astype(WDT)   # squeeze channel, cast once

    # Batch tile: full batch if small, else 8 (keeps block sublane dims legal).
    if n <= MAX_TB:
        tb, n_pad = n, n
    else:
        tb = MAX_TB
        n_pad = ((n + tb - 1) // tb) * tb
    if n_pad != n:
        x3 = jnp.pad(x3, ((0, n_pad - n), (0, 0), (0, 0)))

    args = (x3,
            packed["w1_band"], packed["b1_row"], packed["se1"],
            packed["w2_band"], packed["b2_row"], packed["se2"],
            packed["wf1"], packed["bf1"],
            packed["wf2"], packed["bf2"],
            packed["wf3"], packed["bf3"])

    x_spec = pl.BlockSpec((tb, IMG, IMG), lambda i: (i, 0, 0))
    w_specs = [pl.BlockSpec(a.shape, _const_index_map(a.ndim)) for a in args[1:]]

    out = pl.pallas_call(
        _lenet_kernel,
        out_shape=jax.ShapeDtypeStruct((n_pad, NCLS), jnp.float32),
        grid=(n_pad // tb,),
        in_specs=[x_spec] + w_specs,
        out_specs=pl.BlockSpec((tb, NCLS), lambda i: (i, 0)),
        compiler_params=pltpu.CompilerParams(
            dimension_semantics=("parallel",),       # v7x: split batch over TCs
            vmem_limit_bytes=32 * 1024 * 1024),
    )(*args)
    return out[:n]


# --------------------- host-side one-time weight packing ---------------------

def pack_params(params):
    """Pack PyTorch-layout LeNet weights into the kernel's matmul form."""
    f32 = jnp.float32

    def band_matrix(w_oihw, in_w, out_w):
        # band[kh, c*in_w + wi, o*out_w + j] = w[o, c, kh, wi - j] if 0<=wi-j<KW
        o_, c_, kh_, kw_ = w_oihw.shape
        wi = jnp.arange(in_w)[:, None]
        jo = jnp.arange(out_w)[None, :]
        dw = wi - jo
        valid = (dw >= 0) & (dw < kw_)
        dwc = jnp.clip(dw, 0, kw_ - 1)
        b = jnp.where(valid[None, None, None, :, :],
                      w_oihw[:, :, :, dwc], 0.0)        # (O, C, KH, in_w, out_w)
        b = jnp.transpose(b, (2, 1, 3, 0, 4))           # (KH, C, in_w, O, out_w)
        return b.reshape(kh_, c_ * in_w, o_ * out_w)

    def even_row_selector(out_rows, in_rows):
        r = jnp.arange(out_rows)[:, None]
        c = jnp.arange(in_rows)[None, :]
        return (c == 2 * r).astype(f32)

    def even_col_selector(n_ch, in_w):
        # (n_ch*in_w, n_ch*(in_w//2)) 0/1: picks even columns within a channel.
        out_w = in_w // 2
        ri = jnp.arange(n_ch * in_w)
        ci = jnp.arange(n_ch * out_w)
        same = (ri // in_w)[:, None] == (ci // out_w)[None, :]
        even = same & ((ri % in_w)[:, None] == 2 * (ci % out_w)[None, :])
        return even.astype(f32)

    # conv1 band, columns padded 144 -> 256 (lane aligned).
    w1b = band_matrix(params["conv1_w"], IMG, CONV1_W)              # (5,28,144)
    w1b = jnp.pad(w1b, ((0, 0), (0, 0), (0, PAD1 - C1_OUT * CONV1_W)))
    b1_row = jnp.pad(jnp.repeat(params["conv1_b"], CONV1_W),
                     (0, PAD1 - C1_OUT * CONV1_W)).reshape(1, PAD1).astype(f32)

    # conv2 band with pool1's even-column selector folded in, rows padded.
    w2b = band_matrix(params["conv2_w"], POOL1_W, CONV2_W)          # (5,72,128)
    tce1 = even_col_selector(C1_OUT, CONV1_W)                       # (144,72)
    w2f = jnp.einsum("vc,kco->kvo", tce1, w2b)                      # (5,144,128)
    w2f = jnp.pad(w2f, ((0, 0), (0, PAD1 - C1_OUT * CONV1_W), (0, 0)))
    b2_row = jnp.repeat(params["conv2_b"], CONV2_W).reshape(1, CONV2_COLS).astype(f32)

    # fc1: fold the PyTorch (C,H,W) flatten order AND pool2's even-column
    # selector into the weight so the kernel consumes the uncompacted (4,128)
    # pooled slab directly.
    wf1 = jnp.transpose(
        params["fc1_w"].reshape(FC1, C2_OUT, POOL2_W, POOL2_W),
        (2, 1, 3, 0)).reshape(POOL2_W, C2_OUT * POOL2_W, FC1)       # (4,64,120)
    tce2 = even_col_selector(C2_OUT, CONV2_W)                       # (128,64)
    wf1u = jnp.einsum("vc,rco->rvo", tce2, wf1)                     # (4,128,120)

    return {
        "w1_band": w1b.astype(WDT),
        "b1_row": b1_row,
        "se1": even_row_selector(POOL1_W, CONV1_W).astype(WDT),     # (12,24)
        "w2_band": w2f.astype(WDT),
        "b2_row": b2_row,
        "se2": even_row_selector(POOL2_W, CONV2_W).astype(WDT),     # (4,8)
        "wf1": wf1u.astype(WDT),
        "bf1": params["fc1_b"].reshape(1, FC1).astype(f32),
        "wf2": params["fc2_w"].T.astype(WDT),
        "bf2": params["fc2_b"].reshape(1, FC2).astype(f32),
        "wf3": params["fc3_w"].T.astype(WDT),
        "bf3": params["fc3_b"].reshape(1, NCLS).astype(f32),
    }


# ------------------------------ params & reference ---------------------------

def init_params(key):
    """Deterministic synthetic parameters in PyTorch layout."""
    ks = jax.random.split(key, 10)

    def w(k, shape, fan_in):
        return jax.random.normal(k, shape, jnp.float32) / jnp.sqrt(fan_in)

    return {
        "conv1_w": w(ks[0], (C1_OUT, 1, K, K), 25.0),
        "conv1_b": 0.01 * jax.random.normal(ks[1], (C1_OUT,), jnp.float32),
        "conv2_w": w(ks[2], (C2_OUT, C1_OUT, K, K), 150.0),
        "conv2_b": 0.01 * jax.random.normal(ks[3], (C2_OUT,), jnp.float32),
        "fc1_w": w(ks[4], (FC1, C2_OUT * POOL2_W * POOL2_W), 256.0),
        "fc1_b": 0.01 * jax.random.normal(ks[5], (FC1,), jnp.float32),
        "fc2_w": w(ks[6], (FC2, FC1), float(FC1)),
        "fc2_b": 0.01 * jax.random.normal(ks[7], (FC2,), jnp.float32),
        "fc3_w": w(ks[8], (NCLS, FC2), float(FC2)),
        "fc3_b": 0.01 * jax.random.normal(ks[9], (NCLS,), jnp.float32),
    }


def reference_forward(x_nchw, params):
    """Plain-JAX reference (PyTorch semantics) for numerical validation."""
    hi = jax.lax.Precision.HIGHEST

    def conv_valid(x, w, b):
        o_, c_, kh_, kw_ = w.shape
        n_, _, h_, w_in = x.shape
        oh, ow = h_ - kh_ + 1, w_in - kw_ + 1
        out = jnp.zeros((n_, o_, oh, ow), jnp.float32)
        for kh in range(kh_):
            for kw in range(kw_):
                patch = x[:, :, kh:kh + oh, kw:kw + ow]
                out = out + jnp.einsum("nchw,oc->nohw", patch, w[:, :, kh, kw],
                                       precision=hi)
        return out + b[None, :, None, None]

    def pool(x):
        return jnp.maximum(
            jnp.maximum(x[:, :, 0::2, 0::2], x[:, :, 0::2, 1::2]),
            jnp.maximum(x[:, :, 1::2, 0::2], x[:, :, 1::2, 1::2]))

    y = pool(jax.nn.relu(conv_valid(x_nchw, params["conv1_w"], params["conv1_b"])))
    y = pool(jax.nn.relu(conv_valid(y, params["conv2_w"], params["conv2_b"])))
    flat = y.reshape(y.shape[0], -1)                     # (N, 256) in (C,H,W) order
    h = jax.nn.relu(jnp.dot(flat, params["fc1_w"].T, precision=hi) + params["fc1_b"])
    h = jax.nn.relu(jnp.dot(h, params["fc2_w"].T, precision=hi) + params["fc2_b"])
    logits = jnp.dot(h, params["fc3_w"].T, precision=hi) + params["fc3_b"]
    return jax.nn.softmax(logits, axis=-1)


# ----------------------------------- main -------------------------------------

if __name__ == "__main__":
    key = jax.random.PRNGKey(0)
    k_x, k_p = jax.random.split(key)

    # MNIST-like input: batch=2, channels=1, 28x28 spatial, 10 classes.
    x = jax.random.normal(k_x, (2, 1, IMG, IMG), jnp.float32)
    params = init_params(k_p)
    packed = pack_params(params)          # one-time host-side weight packing

    fwd = jax.jit(lenet_forward)
    out = jax.block_until_ready(fwd(x, packed))

    assert out.shape == (2, NCLS), out.shape
    row_sums = jnp.sum(out, axis=-1)
    assert bool(jnp.all(jnp.abs(row_sums - 1.0) < 5e-3)), row_sums

    ref = jax.jit(reference_forward)(x, params)
    max_err = float(jnp.max(jnp.abs(out - ref)))
    assert max_err < 3e-2, ("mismatch vs reference", max_err)

    print("KERNEL_OK")
</pallas_src>

<mosaic_0001>
module attributes {stable_mosaic.version = 11 : i64} {
  func.func @_lenet_kernel(%arg0: i32, %arg1: memref<2x28x28xbf16, #tpu.memory_space<vmem>>, %arg2: memref<5x28x256xbf16, #tpu.memory_space<vmem>>, %arg3: memref<1x256xf32, #tpu.memory_space<vmem>>, %arg4: memref<12x24xbf16, #tpu.memory_space<vmem>>, %arg5: memref<5x256x128xbf16, #tpu.memory_space<vmem>>, %arg6: memref<1x128xf32, #tpu.memory_space<vmem>>, %arg7: memref<4x8xbf16, #tpu.memory_space<vmem>>, %arg8: memref<4x128x120xbf16, #tpu.memory_space<vmem>>, %arg9: memref<1x120xf32, #tpu.memory_space<vmem>>, %arg10: memref<120x84xbf16, #tpu.memory_space<vmem>>, %arg11: memref<1x84xf32, #tpu.memory_space<vmem>>, %arg12: memref<84x10xbf16, #tpu.memory_space<vmem>>, %arg13: memref<1x10xf32, #tpu.memory_space<vmem>>, %arg14: memref<2x10xf32, #tpu.memory_space<vmem>>) attributes {dimension_semantics = [#tpu.dimension_semantics<parallel>], iteration_bounds = array<i64: 1>, scalar_prefetch = 0 : i64, scratch_operands = 0 : i64, tpu.core_type = #tpu.core_type<tc>, window_params = [{transform_indices = @transform_0, window_bounds = array<i64: 2, 28, 28>}, {pipeline_mode = #tpu.pipeline_mode<synchronous>, transform_indices = @transform_1, window_bounds = array<i64: 5, 28, 256>}, {pipeline_mode = #tpu.pipeline_mode<synchronous>, transform_indices = @transform_2, window_bounds = array<i64: 1, 256>}, {pipeline_mode = #tpu.pipeline_mode<synchronous>, transform_indices = @transform_3, window_bounds = array<i64: 12, 24>}, {pipeline_mode = #tpu.pipeline_mode<synchronous>, transform_indices = @transform_4, window_bounds = array<i64: 5, 256, 128>}, {pipeline_mode = #tpu.pipeline_mode<synchronous>, transform_indices = @transform_5, window_bounds = array<i64: 1, 128>}, {pipeline_mode = #tpu.pipeline_mode<synchronous>, transform_indices = @transform_6, window_bounds = array<i64: 4, 8>}, {pipeline_mode = #tpu.pipeline_mode<synchronous>, transform_indices = @transform_7, window_bounds = array<i64: 4, 128, 120>}, {pipeline_mode = #tpu.pipeline_mode<synchronous>, transform_indices = @transform_8, window_bounds = array<i64: 1, 120>}, {pipeline_mode = #tpu.pipeline_mode<synchronous>, transform_indices = @transform_9, window_bounds = array<i64: 120, 84>}, {pipeline_mode = #tpu.pipeline_mode<synchronous>, transform_indices = @transform_10, window_bounds = array<i64: 1, 84>}, {pipeline_mode = #tpu.pipeline_mode<synchronous>, transform_indices = @transform_11, window_bounds = array<i64: 84, 10>}, {pipeline_mode = #tpu.pipeline_mode<synchronous>, transform_indices = @transform_12, window_bounds = array<i64: 1, 10>}, {transform_indices = @transform_13, window_bounds = array<i64: 2, 10>}]} {
    %c0 = arith.constant 0 : index
    %c0_0 = arith.constant 0 : index
    %0 = vector.load %arg3[%c0, %c0_0] : memref<1x256xf32, #tpu.memory_space<vmem>>, vector<1x256xf32>
    %1 = vector.shape_cast %0 : vector<1x256xf32> to vector<1x256xf32>
    %2 = vector.broadcast %1 : vector<1x256xf32> to vector<24x256xf32>
    %c0_1 = arith.constant 0 : index
    %c0_2 = arith.constant 0 : index
    %3 = vector.load %arg6[%c0_1, %c0_2] : memref<1x128xf32, #tpu.memory_space<vmem>>, vector<1x128xf32>
    %4 = vector.shape_cast %3 : vector<1x128xf32> to vector<1x128xf32>
    %5 = vector.broadcast %4 : vector<1x128xf32> to vector<8x128xf32>
    %c0_3 = arith.constant 0 : index
    %c0_4 = arith.constant 0 : index
    %6 = vector.load %arg4[%c0_3, %c0_4] : memref<12x24xbf16, #tpu.memory_space<vmem>>, vector<12x24xbf16>
    %c0_5 = arith.constant 0 : index
    %c0_6 = arith.constant 0 : index
    %7 = vector.load %arg7[%c0_5, %c0_6] : memref<4x8xbf16, #tpu.memory_space<vmem>>, vector<4x8xbf16>
    %c0_7 = arith.constant 0 : index
    %c0_8 = arith.constant 0 : index
    %c0_9 = arith.constant 0 : index
    %8 = vector.load %arg1[%c0_7, %c0_8, %c0_9] : memref<2x28x28xbf16, #tpu.memory_space<vmem>>, vector<1x28x28xbf16>
    %9 = vector.shape_cast %8 : vector<1x28x28xbf16> to vector<28x28xbf16>
    %10 = vector.extract_strided_slice %9 {offsets = [0, 0], sizes = [24, 28], strides = [1, 1]} : vector<28x28xbf16> to vector<24x28xbf16>
    %c0_10 = arith.constant 0 : index
    %c0_11 = arith.constant 0 : index
    %c0_12 = arith.constant 0 : index
    %11 = vector.load %arg2[%c0_10, %c0_11, %c0_12] : memref<5x28x256xbf16, #tpu.memory_space<vmem>>, vector<1x28x256xbf16>
    %12 = vector.shape_cast %11 : vector<1x28x256xbf16> to vector<28x256xbf16>
    %cst = arith.constant dense<0.000000e+00> : vector<24x256xf32>
    %13 = tpu.matmul %10, %12, %cst {dimension_numbers = #tpu.dot_dimension_numbers<[1], [0], [0], [1], [0, 0, 1, 1], [], []>} : vector<24x28xbf16>, vector<28x256xbf16>, vector<24x256xf32> -> vector<24x256xf32>
    %14 = arith.addf %2, %13 : vector<24x256xf32>
    %15 = vector.extract_strided_slice %9 {offsets = [1, 0], sizes = [24, 28], strides = [1, 1]} : vector<28x28xbf16> to vector<24x28xbf16>
    %c1 = arith.constant 1 : index
    %c0_13 = arith.constant 0 : index
    %c0_14 = arith.constant 0 : index
    %16 = vector.load %arg2[%c1, %c0_13, %c0_14] : memref<5x28x256xbf16, #tpu.memory_space<vmem>>, vector<1x28x256xbf16>
    %17 = vector.shape_cast %16 : vector<1x28x256xbf16> to vector<28x256xbf16>
    %cst_15 = arith.constant dense<0.000000e+00> : vector<24x256xf32>
    %18 = tpu.matmul %15, %17, %cst_15 {dimension_numbers = #tpu.dot_dimension_numbers<[1], [0], [0], [1], [0, 0, 1, 1], [], []>} : vector<24x28xbf16>, vector<28x256xbf16>, vector<24x256xf32> -> vector<24x256xf32>
    %19 = arith.addf %14, %18 : vector<24x256xf32>
    %20 = vector.extract_strided_slice %9 {offsets = [2, 0], sizes = [24, 28], strides = [1, 1]} : vector<28x28xbf16> to vector<24x28xbf16>
    %c2 = arith.constant 2 : index
    %c0_16 = arith.constant 0 : index
    %c0_17 = arith.constant 0 : index
    %21 = vector.load %arg2[%c2, %c0_16, %c0_17] : memref<5x28x256xbf16, #tpu.memory_space<vmem>>, vector<1x28x256xbf16>
    %22 = vector.shape_cast %21 : vector<1x28x256xbf16> to vector<28x256xbf16>
    %cst_18 = arith.constant dense<0.000000e+00> : vector<24x256xf32>
    %23 = tpu.matmul %20, %22, %cst_18 {dimension_numbers = #tpu.dot_dimension_numbers<[1], [0], [0], [1], [0, 0, 1, 1], [], []>} : vector<24x28xbf16>, vector<28x256xbf16>, vector<24x256xf32> -> vector<24x256xf32>
    %24 = arith.addf %19, %23 : vector<24x256xf32>
    %25 = vector.extract_strided_slice %9 {offsets = [3, 0], sizes = [24, 28], strides = [1, 1]} : vector<28x28xbf16> to vector<24x28xbf16>
    %c3 = arith.constant 3 : index
    %c0_19 = arith.constant 0 : index
    %c0_20 = arith.constant 0 : index
    %26 = vector.load %arg2[%c3, %c0_19, %c0_20] : memref<5x28x256xbf16, #tpu.memory_space<vmem>>, vector<1x28x256xbf16>
    %27 = vector.shape_cast %26 : vector<1x28x256xbf16> to vector<28x256xbf16>
    %cst_21 = arith.constant dense<0.000000e+00> : vector<24x256xf32>
    %28 = tpu.matmul %25, %27, %cst_21 {dimension_numbers = #tpu.dot_dimension_numbers<[1], [0], [0], [1], [0, 0, 1, 1], [], []>} : vector<24x28xbf16>, vector<28x256xbf16>, vector<24x256xf32> -> vector<24x256xf32>
    %29 = arith.addf %24, %28 : vector<24x256xf32>
    %30 = vector.extract_strided_slice %9 {offsets = [4, 0], sizes = [24, 28], strides = [1, 1]} : vector<28x28xbf16> to vector<24x28xbf16>
    %c4 = arith.constant 4 : index
    %c0_22 = arith.constant 0 : index
    %c0_23 = arith.constant 0 : index
    %31 = vector.load %arg2[%c4, %c0_22, %c0_23] : memref<5x28x256xbf16, #tpu.memory_space<vmem>>, vector<1x28x256xbf16>
    %32 = vector.shape_cast %31 : vector<1x28x256xbf16> to vector<28x256xbf16>
    %cst_24 = arith.constant dense<0.000000e+00> : vector<24x256xf32>
    %33 = tpu.matmul %30, %32, %cst_24 {dimension_numbers = #tpu.dot_dimension_numbers<[1], [0], [0], [1], [0, 0, 1, 1], [], []>} : vector<24x28xbf16>, vector<28x256xbf16>, vector<24x256xf32> -> vector<24x256xf32>
    %34 = arith.addf %29, %33 : vector<24x256xf32>
    %cst_25 = arith.constant 0.000000e+00 : f32
    %35 = vector.broadcast %cst_25 : f32 to vector<24x256xf32>
    %36 = arith.maximumf %34, %35 : vector<24x256xf32>
    %c23_i32 = arith.constant 23 : i32
    %37 = tpu.dynamic_rotate %36 by %c23_i32 dim 0 : vector<24x256xf32>, i32 -> vector<24x256xf32>
    %38 = arith.maximumf %36, %37 : vector<24x256xf32>
    %c255_i32 = arith.constant 255 : i32
    %39 = tpu.dynamic_rotate %38 by %c255_i32 dim 1 : vector<24x256xf32>, i32 -> vector<24x256xf32>
    %40 = arith.maximumf %38, %39 : vector<24x256xf32>
    %41 = arith.truncf %40 : vector<24x256xf32> to vector<24x256xbf16>
    %cst_26 = arith.constant dense<0.000000e+00> : vector<12x256xf32>
    %42 = tpu.matmul %6, %41, %cst_26 {dimension_numbers = #tpu.dot_dimension_numbers<[1], [0], [0], [1], [0, 0, 1, 1], [], []>} : vector<12x24xbf16>, vector<24x256xbf16>, vector<12x256xf32> -> vector<12x256xf32>
    %43 = arith.truncf %42 : vector<12x256xf32> to vector<12x256xbf16>
    %44 = vector.extract_strided_slice %43 {offsets = [0, 0], sizes = [8, 256], strides = [1, 1]} : vector<12x256xbf16> to vector<8x256xbf16>
    %c0_27 = arith.constant 0 : index
    %c0_28 = arith.constant 0 : index
    %c0_29 = arith.constant 0 : index
    %45 = vector.load %arg5[%c0_27, %c0_28, %c0_29] : memref<5x256x128xbf16, #tpu.memory_space<vmem>>, vector<1x256x128xbf16>
    %46 = vector.shape_cast %45 : vector<1x256x128xbf16> to vector<256x128xbf16>
    %cst_30 = arith.constant dense<0.000000e+00> : vector<8x128xf32>
    %47 = tpu.matmul %44, %46, %cst_30 {dimension_numbers = #tpu.dot_dimension_numbers<[1], [0], [0], [1], [0, 0, 1, 1], [], []>} : vector<8x256xbf16>, vector<256x128xbf16>, vector<8x128xf32> -> vector<8x128xf32>
    %48 = arith.addf %5, %47 : vector<8x128xf32>
    %49 = vector.extract_strided_slice %43 {offsets = [1, 0], sizes = [8, 256], strides = [1, 1]} : vector<12x256xbf16> to vector<8x256xbf16>
    %c1_31 = arith.constant 1 : index
    %c0_32 = arith.constant 0 : index
    %c0_33 = arith.constant 0 : index
    %50 = vector.load %arg5[%c1_31, %c0_32, %c0_33] : memref<5x256x128xbf16, #tpu.memory_space<vmem>>, vector<1x256x128xbf16>
    %51 = vector.shape_cast %50 : vector<1x256x128xbf16> to vector<256x128xbf16>
    %cst_34 = arith.constant dense<0.000000e+00> : vector<8x128xf32>
    %52 = tpu.matmul %49, %51, %cst_34 {dimension_numbers = #tpu.dot_dimension_numbers<[1], [0], [0], [1], [0, 0, 1, 1], [], []>} : vector<8x256xbf16>, vector<256x128xbf16>, vector<8x128xf32> -> vector<8x128xf32>
    %53 = arith.addf %48, %52 : vector<8x128xf32>
    %54 = vector.extract_strided_slice %43 {offsets = [2, 0], sizes = [8, 256], strides = [1, 1]} : vector<12x256xbf16> to vector<8x256xbf16>
    %c2_35 = arith.constant 2 : index
    %c0_36 = arith.constant 0 : index
    %c0_37 = arith.constant 0 : index
    %55 = vector.load %arg5[%c2_35, %c0_36, %c0_37] : memref<5x256x128xbf16, #tpu.memory_space<vmem>>, vector<1x256x128xbf16>
    %56 = vector.shape_cast %55 : vector<1x256x128xbf16> to vector<256x128xbf16>
    %cst_38 = arith.constant dense<0.000000e+00> : vector<8x128xf32>
    %57 = tpu.matmul %54, %56, %cst_38 {dimension_numbers = #tpu.dot_dimension_numbers<[1], [0], [0], [1], [0, 0, 1, 1], [], []>} : vector<8x256xbf16>, vector<256x128xbf16>, vector<8x128xf32> -> vector<8x128xf32>
    %58 = arith.addf %53, %57 : vector<8x128xf32>
    %59 = vector.extract_strided_slice %43 {offsets = [3, 0], sizes = [8, 256], strides = [1, 1]} : vector<12x256xbf16> to vector<8x256xbf16>
    %c3_39 = arith.constant 3 : index
    %c0_40 = arith.constant 0 : index
    %c0_41 = arith.constant 0 : index
    %60 = vector.load %arg5[%c3_39, %c0_40, %c0_41] : memref<5x256x128xbf16, #tpu.memory_space<vmem>>, vector<1x256x128xbf16>
    %61 = vector.shape_cast %60 : vector<1x256x128xbf16> to vector<256x128xbf16>
    %cst_42 = arith.constant dense<0.000000e+00> : vector<8x128xf32>
    %62 = tpu.matmul %59, %61, %cst_42 {dimension_numbers = #tpu.dot_dimension_numbers<[1], [0], [0], [1], [0, 0, 1, 1], [], []>} : vector<8x256xbf16>, vector<256x128xbf16>, vector<8x128xf32> -> vector<8x128xf32>
    %63 = arith.addf %58, %62 : vector<8x128xf32>
    %64 = vector.extract_strided_slice %43 {offsets = [4, 0], sizes = [8, 256], strides = [1, 1]} : vector<12x256xbf16> to vector<8x256xbf16>
    %c4_43 = arith.constant 4 : index
    %c0_44 = arith.constant 0 : index
    %c0_45 = arith.constant 0 : index
    %65 = vector.load %arg5[%c4_43, %c0_44, %c0_45] : memref<5x256x128xbf16, #tpu.memory_space<vmem>>, vector<1x256x128xbf16>
    %66 = vector.shape_cast %65 : vector<1x256x128xbf16> to vector<256x128xbf16>
    %cst_46 = arith.constant dense<0.000000e+00> : vector<8x128xf32>
    %67 = tpu.matmul %64, %66, %cst_46 {dimension_numbers = #tpu.dot_dimension_numbers<[1], [0], [0], [1], [0, 0, 1, 1], [], []>} : vector<8x256xbf16>, vector<256x128xbf16>, vector<8x128xf32> -> vector<8x128xf32>
    %68 = arith.addf %63, %67 : vector<8x128xf32>
    %cst_47 = arith.constant 0.000000e+00 : f32
    %69 = vector.broadcast %cst_47 : f32 to vector<8x128xf32>
    %70 = arith.maximumf %68, %69 : vector<8x128xf32>
    %c7_i32 = arith.constant 7 : i32
    %71 = tpu.dynamic_rotate %70 by %c7_i32 dim 0 : vector<8x128xf32>, i32 -> vector<8x128xf32>
    %72 = arith.maximumf %70, %71 : vector<8x128xf32>
    %c127_i32 = arith.constant 127 : i32
    %73 = tpu.dynamic_rotate %72 by %c127_i32 dim 1 : vector<8x128xf32>, i32 -> vector<8x128xf32>
    %74 = arith.maximumf %72, %73 : vector<8x128xf32>
    %75 = arith.truncf %74 : vector<8x128xf32> to vector<8x128xbf16>
    %cst_48 = arith.constant dense<0.000000e+00> : vector<4x128xf32>
    %76 = tpu.matmul %7, %75, %cst_48 {dimension_numbers = #tpu.dot_dimension_numbers<[1], [0], [0], [1], [0, 0, 1, 1], [], []>} : vector<4x8xbf16>, vector<8x128xbf16>, vector<4x128xf32> -> vector<4x128xf32>
    %c1_49 = arith.constant 1 : index
    %c0_50 = arith.constant 0 : index
    %c0_51 = arith.constant 0 : index
    %77 = vector.load %arg1[%c1_49, %c0_50, %c0_51] : memref<2x28x28xbf16, #tpu.memory_space<vmem>>, vector<1x28x28xbf16>
    %78 = vector.shape_cast %77 : vector<1x28x28xbf16> to vector<28x28xbf16>
    %79 = vector.extract_strided_slice %78 {offsets = [0, 0], sizes = [24, 28], strides = [1, 1]} : vector<28x28xbf16> to vector<24x28xbf16>
    %c0_52 = arith.constant 0 : index
    %c0_53 = arith.constant 0 : index
    %c0_54 = arith.constant 0 : index
    %80 = vector.load %arg2[%c0_52, %c0_53, %c0_54] : memref<5x28x256xbf16, #tpu.memory_space<vmem>>, vector<1x28x256xbf16>
    %81 = vector.shape_cast %80 : vector<1x28x256xbf16> to vector<28x256xbf16>
    %cst_55 = arith.constant dense<0.000000e+00> : vector<24x256xf32>
    %82 = tpu.matmul %79, %81, %cst_55 {dimension_numbers = #tpu.dot_dimension_numbers<[1], [0], [0], [1], [0, 0, 1, 1], [], []>} : vector<24x28xbf16>, vector<28x256xbf16>, vector<24x256xf32> -> vector<24x256xf32>
    %83 = arith.addf %2, %82 : vector<24x256xf32>
    %84 = vector.extract_strided_slice %78 {offsets = [1, 0], sizes = [24, 28], strides = [1, 1]} : vector<28x28xbf16> to vector<24x28xbf16>
    %c1_56 = arith.constant 1 : index
    %c0_57 = arith.constant 0 : index
    %c0_58 = arith.constant 0 : index
    %85 = vector.load %arg2[%c1_56, %c0_57, %c0_58] : memref<5x28x256xbf16, #tpu.memory_space<vmem>>, vector<1x28x256xbf16>
    %86 = vector.shape_cast %85 : vector<1x28x256xbf16> to vector<28x256xbf16>
    %cst_59 = arith.constant dense<0.000000e+00> : vector<24x256xf32>
    %87 = tpu.matmul %84, %86, %cst_59 {dimension_numbers = #tpu.dot_dimension_numbers<[1], [0], [0], [1], [0, 0, 1, 1], [], []>} : vector<24x28xbf16>, vector<28x256xbf16>, vector<24x256xf32> -> vector<24x256xf32>
    %88 = arith.addf %83, %87 : vector<24x256xf32>
    %89 = vector.extract_strided_slice %78 {offsets = [2, 0], sizes = [24, 28], strides = [1, 1]} : vector<28x28xbf16> to vector<24x28xbf16>
    %c2_60 = arith.constant 2 : index
    %c0_61 = arith.constant 0 : index
    %c0_62 = arith.constant 0 : index
    %90 = vector.load %arg2[%c2_60, %c0_61, %c0_62] : memref<5x28x256xbf16, #tpu.memory_space<vmem>>, vector<1x28x256xbf16>
    %91 = vector.shape_cast %90 : vector<1x28x256xbf16> to vector<28x256xbf16>
    %cst_63 = arith.constant dense<0.000000e+00> : vector<24x256xf32>
    %92 = tpu.matmul %89, %91, %cst_63 {dimension_numbers = #tpu.dot_dimension_numbers<[1], [0], [0], [1], [0, 0, 1, 1], [], []>} : vector<24x28xbf16>, vector<28x256xbf16>, vector<24x256xf32> -> vector<24x256xf32>
    %93 = arith.addf %88, %92 : vector<24x256xf32>
    %94 = vector.extract_strided_slice %78 {offsets = [3, 0], sizes = [24, 28], strides = [1, 1]} : vector<28x28xbf16> to vector<24x28xbf16>
    %c3_64 = arith.constant 3 : index
    %c0_65 = arith.constant 0 : index
    %c0_66 = arith.constant 0 : index
    %95 = vector.load %arg2[%c3_64, %c0_65, %c0_66] : memref<5x28x256xbf16, #tpu.memory_space<vmem>>, vector<1x28x256xbf16>
    %96 = vector.shape_cast %95 : vector<1x28x256xbf16> to vector<28x256xbf16>
    %cst_67 = arith.constant dense<0.000000e+00> : vector<24x256xf32>
    %97 = tpu.matmul %94, %96, %cst_67 {dimension_numbers = #tpu.dot_dimension_numbers<[1], [0], [0], [1], [0, 0, 1, 1], [], []>} : vector<24x28xbf16>, vector<28x256xbf16>, vector<24x256xf32> -> vector<24x256xf32>
    %98 = arith.addf %93, %97 : vector<24x256xf32>
    %99 = vector.extract_strided_slice %78 {offsets = [4, 0], sizes = [24, 28], strides = [1, 1]} : vector<28x28xbf16> to vector<24x28xbf16>
    %c4_68 = arith.constant 4 : index
    %c0_69 = arith.constant 0 : index
    %c0_70 = arith.constant 0 : index
    %100 = vector.load %arg2[%c4_68, %c0_69, %c0_70] : memref<5x28x256xbf16, #tpu.memory_space<vmem>>, vector<1x28x256xbf16>
    %101 = vector.shape_cast %100 : vector<1x28x256xbf16> to vector<28x256xbf16>
    %cst_71 = arith.constant dense<0.000000e+00> : vector<24x256xf32>
    %102 = tpu.matmul %99, %101, %cst_71 {dimension_numbers = #tpu.dot_dimension_numbers<[1], [0], [0], [1], [0, 0, 1, 1], [], []>} : vector<24x28xbf16>, vector<28x256xbf16>, vector<24x256xf32> -> vector<24x256xf32>
    %103 = arith.addf %98, %102 : vector<24x256xf32>
    %cst_72 = arith.constant 0.000000e+00 : f32
    %104 = vector.broadcast %cst_72 : f32 to vector<24x256xf32>
    %105 = arith.maximumf %103, %104 : vector<24x256xf32>
    %c23_i32_73 = arith.constant 23 : i32
    %106 = tpu.dynamic_rotate %105 by %c23_i32_73 dim 0 : vector<24x256xf32>, i32 -> vector<24x256xf32>
    %107 = arith.maximumf %105, %106 : vector<24x256xf32>
    %c255_i32_74 = arith.constant 255 : i32
    %108 = tpu.dynamic_rotate %107 by %c255_i32_74 dim 1 : vector<24x256xf32>, i32 -> vector<24x256xf32>
    %109 = arith.maximumf %107, %108 : vector<24x256xf32>
    %110 = arith.truncf %109 : vector<24x256xf32> to vector<24x256xbf16>
    %cst_75 = arith.constant dense<0.000000e+00> : vector<12x256xf32>
    %111 = tpu.matmul %6, %110, %cst_75 {dimension_numbers = #tpu.dot_dimension_numbers<[1], [0], [0], [1], [0, 0, 1, 1], [], []>} : vector<12x24xbf16>, vector<24x256xbf16>, vector<12x256xf32> -> vector<12x256xf32>
    %112 = arith.truncf %111 : vector<12x256xf32> to vector<12x256xbf16>
    %113 = vector.extract_strided_slice %112 {offsets = [0, 0], sizes = [8, 256], strides = [1, 1]} : vector<12x256xbf16> to vector<8x256xbf16>
    %c0_76 = arith.constant 0 : index
    %c0_77 = arith.constant 0 : index
    %c0_78 = arith.constant 0 : index
    %114 = vector.load %arg5[%c0_76, %c0_77, %c0_78] : memref<5x256x128xbf16, #tpu.memory_space<vmem>>, vector<1x256x128xbf16>
    %115 = vector.shape_cast %114 : vector<1x256x128xbf16> to vector<256x128xbf16>
    %cst_79 = arith.constant dense<0.000000e+00> : vector<8x128xf32>
    %116 = tpu.matmul %113, %115, %cst_79 {dimension_numbers = #tpu.dot_dimension_numbers<[1], [0], [0], [1], [0, 0, 1, 1], [], []>} : vector<8x256xbf16>, vector<256x128xbf16>, vector<8x128xf32> -> vector<8x128xf32>
    %117 = arith.addf %5, %116 : vector<8x128xf32>
    %118 = vector.extract_strided_slice %112 {offsets = [1, 0], sizes = [8, 256], strides = [1, 1]} : vector<12x256xbf16> to vector<8x256xbf16>
    %c1_80 = arith.constant 1 : index
    %c0_81 = arith.constant 0 : index
    %c0_82 = arith.constant 0 : index
    %119 = vector.load %arg5[%c1_80, %c0_81, %c0_82] : memref<5x256x128xbf16, #tpu.memory_space<vmem>>, vector<1x256x128xbf16>
    %120 = vector.shape_cast %119 : vector<1x256x128xbf16> to vector<256x128xbf16>
    %cst_83 = arith.constant dense<0.000000e+00> : vector<8x128xf32>
    %121 = tpu.matmul %118, %120, %cst_83 {dimension_numbers = #tpu.dot_dimension_numbers<[1], [0], [0], [1], [0, 0, 1, 1], [], []>} : vector<8x256xbf16>, vector<256x128xbf16>, vector<8x128xf32> -> vector<8x128xf32>
    %122 = arith.addf %117, %121 : vector<8x128xf32>
    %123 = vector.extract_strided_slice %112 {offsets = [2, 0], sizes = [8, 256], strides = [1, 1]} : vector<12x256xbf16> to vector<8x256xbf16>
    %c2_84 = arith.constant 2 : index
    %c0_85 = arith.constant 0 : index
    %c0_86 = arith.constant 0 : index
    %124 = vector.load %arg5[%c2_84, %c0_85, %c0_86] : memref<5x256x128xbf16, #tpu.memory_space<vmem>>, vector<1x256x128xbf16>
    %125 = vector.shape_cast %124 : vector<1x256x128xbf16> to vector<256x128xbf16>
    %cst_87 = arith.constant dense<0.000000e+00> : vector<8x128xf32>
    %126 = tpu.matmul %123, %125, %cst_87 {dimension_numbers = #tpu.dot_dimension_numbers<[1], [0], [0], [1], [0, 0, 1, 1], [], []>} : vector<8x256xbf16>, vector<256x128xbf16>, vector<8x128xf32> -> vector<8x128xf32>
    %127 = arith.addf %122, %126 : vector<8x128xf32>
    %128 = vector.extract_strided_slice %112 {offsets = [3, 0], sizes = [8, 256], strides = [1, 1]} : vector<12x256xbf16> to vector<8x256xbf16>
    %c3_88 = arith.constant 3 : index
    %c0_89 = arith.constant 0 : index
    %c0_90 = arith.constant 0 : index
    %129 = vector.load %arg5[%c3_88, %c0_89, %c0_90] : memref<5x256x128xbf16, #tpu.memory_space<vmem>>, vector<1x256x128xbf16>
    %130 = vector.shape_cast %129 : vector<1x256x128xbf16> to vector<256x128xbf16>
    %cst_91 = arith.constant dense<0.000000e+00> : vector<8x128xf32>
    %131 = tpu.matmul %128, %130, %cst_91 {dimension_numbers = #tpu.dot_dimension_numbers<[1], [0], [0], [1], [0, 0, 1, 1], [], []>} : vector<8x256xbf16>, vector<256x128xbf16>, vector<8x128xf32> -> vector<8x128xf32>
    %132 = arith.addf %127, %131 : vector<8x128xf32>
    %133 = vector.extract_strided_slice %112 {offsets = [4, 0], sizes = [8, 256], strides = [1, 1]} : vector<12x256xbf16> to vector<8x256xbf16>
    %c4_92 = arith.constant 4 : index
    %c0_93 = arith.constant 0 : index
    %c0_94 = arith.constant 0 : index
    %134 = vector.load %arg5[%c4_92, %c0_93, %c0_94] : memref<5x256x128xbf16, #tpu.memory_space<vmem>>, vector<1x256x128xbf16>
    %135 = vector.shape_cast %134 : vector<1x256x128xbf16> to vector<256x128xbf16>
    %cst_95 = arith.constant dense<0.000000e+00> : vector<8x128xf32>
    %136 = tpu.matmul %133, %135, %cst_95 {dimension_numbers = #tpu.dot_dimension_numbers<[1], [0], [0], [1], [0, 0, 1, 1], [], []>} : vector<8x256xbf16>, vector<256x128xbf16>, vector<8x128xf32> -> vector<8x128xf32>
    %137 = arith.addf %132, %136 : vector<8x128xf32>
    %cst_96 = arith.constant 0.000000e+00 : f32
    %138 = vector.broadcast %cst_96 : f32 to vector<8x128xf32>
    %139 = arith.maximumf %137, %138 : vector<8x128xf32>
    %c7_i32_97 = arith.constant 7 : i32
    %140 = tpu.dynamic_rotate %139 by %c7_i32_97 dim 0 : vector<8x128xf32>, i32 -> vector<8x128xf32>
    %141 = arith.maximumf %139, %140 : vector<8x128xf32>
    %c127_i32_98 = arith.constant 127 : i32
    %142 = tpu.dynamic_rotate %141 by %c127_i32_98 dim 1 : vector<8x128xf32>, i32 -> vector<8x128xf32>
    %143 = arith.maximumf %141, %142 : vector<8x128xf32>
    %144 = arith.truncf %143 : vector<8x128xf32> to vector<8x128xbf16>
    %cst_99 = arith.constant dense<0.000000e+00> : vector<4x128xf32>
    %145 = tpu.matmul %7, %144, %cst_99 {dimension_numbers = #tpu.dot_dimension_numbers<[1], [0], [0], [1], [0, 0, 1, 1], [], []>} : vector<4x8xbf16>, vector<8x128xbf16>, vector<4x128xf32> -> vector<4x128xf32>
    %c0_100 = arith.constant 0 : index
    %c0_101 = arith.constant 0 : index
    %146 = vector.load %arg9[%c0_100, %c0_101] : memref<1x120xf32, #tpu.memory_space<vmem>>, vector<1x120xf32>
    %147 = vector.shape_cast %146 : vector<1x120xf32> to vector<1x120xf32>
    %148 = vector.broadcast %147 : vector<1x120xf32> to vector<2x120xf32>
    %149 = vector.extract_strided_slice %76 {offsets = [0, 0], sizes = [1, 128], strides = [1, 1]} : vector<4x128xf32> to vector<1x128xf32>
    %150 = vector.extract_strided_slice %145 {offsets = [0, 0], sizes = [1, 128], strides = [1, 1]} : vector<4x128xf32> to vector<1x128xf32>
    %151 = tpu.concatenate %149, %150 in 0 : vector<1x128xf32>, vector<1x128xf32> -> vector<2x128xf32>
    %152 = arith.truncf %151 : vector<2x128xf32> to vector<2x128xbf16>
    %c0_102 = arith.constant 0 : index
    %c0_103 = arith.constant 0 : index
    %c0_104 = arith.constant 0 : index
    %153 = vector.load %arg8[%c0_102, %c0_103, %c0_104] : memref<4x128x120xbf16, #tpu.memory_space<vmem>>, vector<1x128x120xbf16>
    %154 = vector.shape_cast %153 : vector<1x128x120xbf16> to vector<128x120xbf16>
    %cst_105 = arith.constant dense<0.000000e+00> : vector<2x120xf32>
    %155 = tpu.matmul %152, %154, %cst_105 {dimension_numbers = #tpu.dot_dimension_numbers<[1], [0], [0], [1], [0, 0, 1, 1], [], []>} : vector<2x128xbf16>, vector<128x120xbf16>, vector<2x120xf32> -> vector<2x120xf32>
    %156 = arith.addf %148, %155 : vector<2x120xf32>
    %157 = vector.extract_strided_slice %76 {offsets = [1, 0], sizes = [1, 128], strides = [1, 1]} : vector<4x128xf32> to vector<1x128xf32>
    %158 = vector.extract_strided_slice %145 {offsets = [1, 0], sizes = [1, 128], strides = [1, 1]} : vector<4x128xf32> to vector<1x128xf32>
    %159 = tpu.concatenate %157, %158 in 0 : vector<1x128xf32>, vector<1x128xf32> -> vector<2x128xf32>
    %160 = arith.truncf %159 : vector<2x128xf32> to vector<2x128xbf16>
    %c1_106 = arith.constant 1 : index
    %c0_107 = arith.constant 0 : index
    %c0_108 = arith.constant 0 : index
    %161 = vector.load %arg8[%c1_106, %c0_107, %c0_108] : memref<4x128x120xbf16, #tpu.memory_space<vmem>>, vector<1x128x120xbf16>
    %162 = vector.shape_cast %161 : vector<1x128x120xbf16> to vector<128x120xbf16>
    %cst_109 = arith.constant dense<0.000000e+00> : vector<2x120xf32>
    %163 = tpu.matmul %160, %162, %cst_109 {dimension_numbers = #tpu.dot_dimension_numbers<[1], [0], [0], [1], [0, 0, 1, 1], [], []>} : vector<2x128xbf16>, vector<128x120xbf16>, vector<2x120xf32> -> vector<2x120xf32>
    %164 = arith.addf %156, %163 : vector<2x120xf32>
    %165 = vector.extract_strided_slice %76 {offsets = [2, 0], sizes = [1, 128], strides = [1, 1]} : vector<4x128xf32> to vector<1x128xf32>
    %166 = vector.extract_strided_slice %145 {offsets = [2, 0], sizes = [1, 128], strides = [1, 1]} : vector<4x128xf32> to vector<1x128xf32>
    %167 = tpu.concatenate %165, %166 in 0 : vector<1x128xf32>, vector<1x128xf32> -> vector<2x128xf32>
    %168 = arith.truncf %167 : vector<2x128xf32> to vector<2x128xbf16>
    %c2_110 = arith.constant 2 : index
    %c0_111 = arith.constant 0 : index
    %c0_112 = arith.constant 0 : index
    %169 = vector.load %arg8[%c2_110, %c0_111, %c0_112] : memref<4x128x120xbf16, #tpu.memory_space<vmem>>, vector<1x128x120xbf16>
    %170 = vector.shape_cast %169 : vector<1x128x120xbf16> to vector<128x120xbf16>
    %cst_113 = arith.constant dense<0.000000e+00> : vector<2x120xf32>
    %171 = tpu.matmul %168, %170, %cst_113 {dimension_numbers = #tpu.dot_dimension_numbers<[1], [0], [0], [1], [0, 0, 1, 1], [], []>} : vector<2x128xbf16>, vector<128x120xbf16>, vector<2x120xf32> -> vector<2x120xf32>
    %172 = arith.addf %164, %171 : vector<2x120xf32>
    %173 = vector.extract_strided_slice %76 {offsets = [3, 0], sizes = [1, 128], strides = [1, 1]} : vector<4x128xf32> to vector<1x128xf32>
    %174 = vector.extract_strided_slice %145 {offsets = [3, 0], sizes = [1, 128], strides = [1, 1]} : vector<4x128xf32> to vector<1x128xf32>
    %175 = tpu.concatenate %173, %174 in 0 : vector<1x128xf32>, vector<1x128xf32> -> vector<2x128xf32>
    %176 = arith.truncf %175 : vector<2x128xf32> to vector<2x128xbf16>
    %c3_114 = arith.constant 3 : index
    %c0_115 = arith.constant 0 : index
    %c0_116 = arith.constant 0 : index
    %177 = vector.load %arg8[%c3_114, %c0_115, %c0_116] : memref<4x128x120xbf16, #tpu.memory_space<vmem>>, vector<1x128x120xbf16>
    %178 = vector.shape_cast %177 : vector<1x128x120xbf16> to vector<128x120xbf16>
    %cst_117 = arith.constant dense<0.000000e+00> : vector<2x120xf32>
    %179 = tpu.matmul %176, %178, %cst_117 {dimension_numbers = #tpu.dot_dimension_numbers<[1], [0], [0], [1], [0, 0, 1, 1], [], []>} : vector<2x128xbf16>, vector<128x120xbf16>, vector<2x120xf32> -> vector<2x120xf32>
    %180 = arith.addf %172, %179 : vector<2x120xf32>
    %cst_118 = arith.constant 0.000000e+00 : f32
    %181 = vector.broadcast %cst_118 : f32 to vector<2x120xf32>
    %182 = arith.maximumf %180, %181 : vector<2x120xf32>
    %183 = arith.truncf %182 : vector<2x120xf32> to vector<2x120xbf16>
    %c0_119 = arith.constant 0 : index
    %c0_120 = arith.constant 0 : index
    %184 = vector.load %arg10[%c0_119, %c0_120] : memref<120x84xbf16, #tpu.memory_space<vmem>>, vector<120x84xbf16>
    %cst_121 = arith.constant dense<0.000000e+00> : vector<2x84xf32>
    %185 = tpu.matmul %183, %184, %cst_121 {dimension_numbers = #tpu.dot_dimension_numbers<[1], [0], [0], [1], [0, 0, 1, 1], [], []>} : vector<2x120xbf16>, vector<120x84xbf16>, vector<2x84xf32> -> vector<2x84xf32>
    %c0_122 = arith.constant 0 : index
    %c0_123 = arith.constant 0 : index
    %186 = vector.load %arg11[%c0_122, %c0_123] : memref<1x84xf32, #tpu.memory_space<vmem>>, vector<1x84xf32>
    %187 = vector.broadcast %186 : vector<1x84xf32> to vector<2x84xf32>
    %188 = arith.addf %185, %187 : vector<2x84xf32>
    %cst_124 = arith.constant 0.000000e+00 : f32
    %189 = vector.broadcast %cst_124 : f32 to vector<2x84xf32>
    %190 = arith.maximumf %188, %189 : vector<2x84xf32>
    %191 = arith.truncf %190 : vector<2x84xf32> to vector<2x84xbf16>
    %c0_125 = arith.constant 0 : index
    %c0_126 = arith.constant 0 : index
    %192 = vector.load %arg12[%c0_125, %c0_126] : memref<84x10xbf16, #tpu.memory_space<vmem>>, vector<84x10xbf16>
    %cst_127 = arith.constant dense<0.000000e+00> : vector<2x10xf32>
    %193 = tpu.matmul %191, %192, %cst_127 {dimension_numbers = #tpu.dot_dimension_numbers<[1], [0], [0], [1], [0, 0, 1, 1], [], []>} : vector<2x84xbf16>, vector<84x10xbf16>, vector<2x10xf32> -> vector<2x10xf32>
    %c0_128 = arith.constant 0 : index
    %c0_129 = arith.constant 0 : index
    %194 = vector.load %arg13[%c0_128, %c0_129] : memref<1x10xf32, #tpu.memory_space<vmem>>, vector<1x10xf32>
    %195 = vector.broadcast %194 : vector<1x10xf32> to vector<2x10xf32>
    %196 = arith.addf %193, %195 : vector<2x10xf32>
    %cst_130 = arith.constant dense<0xFF800000> : vector<2xf32>
    %197 = vector.multi_reduction <maximumf>, %196, %cst_130 [1] : vector<2x10xf32> to vector<2xf32>
    %198 = vector.shape_cast %197 : vector<2xf32> to vector<2x1xf32>
    %199 = vector.broadcast %198 : vector<2x1xf32> to vector<2x10xf32>
    %200 = arith.subf %196, %199 : vector<2x10xf32>
    %201 = math.exp %200 : vector<2x10xf32>
    %cst_131 = arith.constant dense<0.000000e+00> : vector<2xf32>
    %202 = vector.multi_reduction <add>, %201, %cst_131 [1] : vector<2x10xf32> to vector<2xf32>
    %203 = vector.shape_cast %202 : vector<2xf32> to vector<2x1xf32>
    %204 = tpu.reciprocal %203 {approx = true} : vector<2x1xf32> -> vector<2x1xf32>
    %205 = vector.broadcast %204 : vector<2x1xf32> to vector<2x10xf32>
    %206 = arith.mulf %201, %205 : vector<2x10xf32>
    %c0_132 = arith.constant 0 : index
    %c0_133 = arith.constant 0 : index
    %207 = vector.load %arg14[%c0_132, %c0_133] : memref<2x10xf32, #tpu.memory_space<vmem>>, vector<2x10xf32>
    tpu.vector_store %arg14[%c0_132, %c0_133], %206 {strides = array<i32>} : memref<2x10xf32, #tpu.memory_space<vmem>>, vector<2x10xf32>,
    return
  }
  func.func @transform_0(%arg0: i32) -> (i32, i32, i32) {
    %c0_i32 = arith.constant 0 : i32
    %c0_i32_0 = arith.constant 0 : i32
    %c0_i32_1 = arith.constant 0 : i32
    return %arg0, %c0_i32, %c0_i32_0 : i32, i32, i32
  }
  func.func @transform_1(%arg0: i32) -> (i32, i32, i32) {
    %c0_i32 = arith.constant 0 : i32
    %c0_i32_0 = arith.constant 0 : i32
    %c0_i32_1 = arith.constant 0 : i32
    %c0_i32_2 = arith.constant 0 : i32
    return %c0_i32, %c0_i32_0, %c0_i32_1 : i32, i32, i32
  }
  func.func @transform_2(%arg0: i32) -> (i32, i32) {
    %c0_i32 = arith.constant 0 : i32
    %c0_i32_0 = arith.constant 0 : i32
    %c0_i32_1 = arith.constant 0 : i32
    return %c0_i32, %c0_i32_0 : i32, i32
  }
  func.func @transform_3(%arg0: i32) -> (i32, i32) {
    %c0_i32 = arith.constant 0 : i32
    %c0_i32_0 = arith.constant 0 : i32
    %c0_i32_1 = arith.constant 0 : i32
    return %c0_i32, %c0_i32_0 : i32, i32
  }
  func.func @transform_4(%arg0: i32) -> (i32, i32, i32) {
    %c0_i32 = arith.constant 0 : i32
    %c0_i32_0 = arith.constant 0 : i32
    %c0_i32_1 = arith.constant 0 : i32
    %c0_i32_2 = arith.constant 0 : i32
    return %c0_i32, %c0_i32_0, %c0_i32_1 : i32, i32, i32
  }
  func.func @transform_5(%arg0: i32) -> (i32, i32) {
    %c0_i32 = arith.constant 0 : i32
    %c0_i32_0 = arith.constant 0 : i32
    %c0_i32_1 = arith.constant 0 : i32
    return %c0_i32, %c0_i32_0 : i32, i32
  }
  func.func @transform_6(%arg0: i32) -> (i32, i32) {
    %c0_i32 = arith.constant 0 : i32
    %c0_i32_0 = arith.constant 0 : i32
    %c0_i32_1 = arith.constant 0 : i32
    return %c0_i32, %c0_i32_0 : i32, i32
  }
  func.func @transform_7(%arg0: i32) -> (i32, i32, i32) {
    %c0_i32 = arith.constant 0 : i32
    %c0_i32_0 = arith.constant 0 : i32
    %c0_i32_1 = arith.constant 0 : i32
    %c0_i32_2 = arith.constant 0 : i32
    return %c0_i32, %c0_i32_0, %c0_i32_1 : i32, i32, i32
  }
  func.func @transform_8(%arg0: i32) -> (i32, i32) {
    %c0_i32 = arith.constant 0 : i32
    %c0_i32_0 = arith.constant 0 : i32
    %c0_i32_1 = arith.constant 0 : i32
    return %c0_i32, %c0_i32_0 : i32, i32
  }
  func.func @transform_9(%arg0: i32) -> (i32, i32) {
    %c0_i32 = arith.constant 0 : i32
    %c0_i32_0 = arith.constant 0 : i32
    %c0_i32_1 = arith.constant 0 : i32
    return %c0_i32, %c0_i32_0 : i32, i32
  }
  func.func @transform_10(%arg0: i32) -> (i32, i32) {
    %c0_i32 = arith.constant 0 : i32
    %c0_i32_0 = arith.constant 0 : i32
    %c0_i32_1 = arith.constant 0 : i32
    return %c0_i32, %c0_i32_0 : i32, i32
  }
  func.func @transform_11(%arg0: i32) -> (i32, i32) {
    %c0_i32 = arith.constant 0 : i32
    %c0_i32_0 = arith.constant 0 : i32
    %c0_i32_1 = arith.constant 0 : i32
    return %c0_i32, %c0_i32_0 : i32, i32
  }
  func.func @transform_12(%arg0: i32) -> (i32, i32) {
    %c0_i32 = arith.constant 0 : i32
    %c0_i32_0 = arith.constant 0 : i32
    %c0_i32_1 = arith.constant 0 : i32
    return %c0_i32, %c0_i32_0 : i32, i32
  }
  func.func @transform_13(%arg0: i32) -> (i32, i32) {
    %c0_i32 = arith.constant 0 : i32
    %c0_i32_0 = arith.constant 0 : i32
    return %arg0, %c0_i32 : i32, i32
  }
}

</mosaic_0001>

<llo_original>
// kernel: lenet_forward.1
$region0: #{lenet_forward.1}
  #allocation0 [shape = 'u32[]', space=smem, size = 0x4, offset = 0x4, fixed_abs, tag = 'smem constant byte address 0x4 - core index']
  #allocation1 [shape = 'u32[144,128]{1,0:T(1,128)}', space=vmem, size = 0x12000, scoped, tag = 'internal scratch']
  %s0 = inlined_call_operand.vmem [shape: bf16[2,28,28], index: 0, kind: input, shape index: {}]
  %s1 = inlined_call_operand.hbm [shape: bf16[5,28,256], index: 1, kind: input, shape index: {}]
  %s2 = inlined_call_operand.vmem [shape: f32[1,256], index: 2, kind: input, shape index: {}]
  %s3 = inlined_call_operand.vmem [shape: bf16[12,24], index: 3, kind: input, shape index: {}]
  %s4 = inlined_call_operand.vmem [shape: bf16[5,256,128], index: 4, kind: input, shape index: {}]
  %s5 = inlined_call_operand.vmem [shape: f32[1,128], index: 5, kind: input, shape index: {}]
  %s6 = inlined_call_operand.vmem [shape: bf16[4,8], index: 6, kind: input, shape index: {}]
  %s7 = inlined_call_operand.vmem [shape: bf16[4,128,120], index: 7, kind: input, shape index: {}]
  %s8 = inlined_call_operand.vmem [shape: f32[1,120], index: 8, kind: input, shape index: {}]
  %s9 = inlined_call_operand.vmem [shape: bf16[120,84], index: 9, kind: input, shape index: {}]
  %s10 = inlined_call_operand.vmem [shape: f32[1,84], index: 10, kind: input, shape index: {}]
  %s11 = inlined_call_operand.vmem [shape: bf16[84,10], index: 11, kind: input, shape index: {}]
  %s12 = inlined_call_operand.vmem [shape: f32[1,10], index: 12, kind: input, shape index: {}]
  %s13 = inlined_call_operand.hbm [shape: f32[2,10], index: 13, kind: output, shape index: {}]
  %s14 = sld [smem:[#allocation0]]
  $region66: #{lenet_forward.1} parent=0
    _
  %s16 = ssub.s32 1, %s14
  %s17 = scalar_select 0, %s16, %s14
  $region1: #{lenet_forward.1} parent=0
    #allocation2 [shape = 'u8[81920]{0}', space=vmem, size = 0x14000, scoped, tag = 'input window, operand 1, single buffered']
    #allocation3 [shape = 's32[1]{0}', space=sflag, size = 0x4, scoped, tag = 'scoped memory for lenet_forward.1']
    #allocation4 [shape = 's32[1]{0}', space=sflag, size = 0x4, scoped, tag = 'scoped memory for lenet_forward.1']
    #allocation5 [shape = 'u8[1024]{0}', space=vmem, size = 0x400, scoped, tag = 'output window, operand 0, single buffered']
    %18 = vsyncpa [#allocation3], 0
    %19 = vsyncpa [#allocation4], 0
    // Predicated region
    $region2: #{lenet_forward.1} parent=1 // pred_check
      _
    $region3: #{lenet_forward.1} parent=1 // pred_check_branch
      %21 = sbr.rel (0) target = $region5
    $region4: #{lenet_forward.1} parent=1 // pred_region
      _
    $region5: #{lenet_forward.1} parent=1 // pred_fallthru
      _
    // Predicated region
    $region6: #{lenet_forward.1} parent=1 // pred_check
      _
    $region7: #{lenet_forward.1} parent=1 // pred_check_branch
      %23 = sbr.rel (0) target = $region9
    $region8: #{lenet_forward.1} parent=1 // pred_region
      %s25 = ssub.s32 2560, 2560
      %26 = vsyncadd [#allocation3], %s25
      %s27 = sshll.u32 [#allocation2], 4
      %s28 = int_to_ptr.vmem [resolvable:$true] %s27
      %33 = dma.hbm_to_vmem [thread:$0]  %s1, 2560, %s28, [#allocation3], 128, 128, 8
    $region9: #{lenet_forward.1} parent=1 // pred_fallthru
      _
    // Predicated region
    $region10: #{lenet_forward.1} parent=1 // pred_check
      _
    $region11: #{lenet_forward.1} parent=1 // pred_check_branch
      %35 = sbr.rel (0) target = $region13
    $region12: #{lenet_forward.1} parent=1 // pred_region
      _
    $region13: #{lenet_forward.1} parent=1 // pred_fallthru
      _
    // Predicated region
    $region14: #{lenet_forward.1} parent=1 // pred_check
      _
    $region15: #{lenet_forward.1} parent=1 // pred_check_branch
      %37 = sbr.rel (0) target = $region17
    $region16: #{lenet_forward.1} parent=1 // pred_region
      _
    $region17: #{lenet_forward.1} parent=1 // pred_fallthru
      _
    // Predicated region
    $region18: #{lenet_forward.1} parent=1 // pred_check
      _
    $region19: #{lenet_forward.1} parent=1 // pred_check_branch
      %39 = sbr.rel (0) target = $region21
    $region20: #{lenet_forward.1} parent=1 // pred_region
      _
    $region21: #{lenet_forward.1} parent=1 // pred_fallthru
      _
    // Predicated region
    $region22: #{lenet_forward.1} parent=1 // pred_check
      _
    $region23: #{lenet_forward.1} parent=1 // pred_check_branch
      %41 = sbr.rel (0) target = $region25
    $region24: #{lenet_forward.1} parent=1 // pred_region
      _
    $region25: #{lenet_forward.1} parent=1 // pred_fallthru
      _
    // Predicated region
    $region26: #{lenet_forward.1} parent=1 // pred_check
      _
    $region27: #{lenet_forward.1} parent=1 // pred_check_branch
      %43 = sbr.rel (0) target = $region29
    $region28: #{lenet_forward.1} parent=1 // pred_region
      _
    $region29: #{lenet_forward.1} parent=1 // pred_fallthru
      _
    // Predicated region
    $region30: #{lenet_forward.1} parent=1 // pred_check
      _
    $region31: #{lenet_forward.1} parent=1 // pred_check_branch
      %45 = sbr.rel (0) target = $region33
    $region32: #{lenet_forward.1} parent=1 // pred_region
      _
    $region33: #{lenet_forward.1} parent=1 // pred_fallthru
      _
    // Predicated region
    $region34: #{lenet_forward.1} parent=1 // pred_check
      _
    $region35: #{lenet_forward.1} parent=1 // pred_check_branch
      %47 = sbr.rel (0) target = $region37
    $region36: #{lenet_forward.1} parent=1 // pred_region
      _
    $region37: #{lenet_forward.1} parent=1 // pred_fallthru
      _
    // Predicated region
    $region38: #{lenet_forward.1} parent=1 // pred_check
      _
    $region39: #{lenet_forward.1} parent=1 // pred_check_branch
      %49 = sbr.rel (0) target = $region41
    $region40: #{lenet_forward.1} parent=1 // pred_region
      _
    $region41: #{lenet_forward.1} parent=1 // pred_fallthru
      _
    // Predicated region
    $region42: #{lenet_forward.1} parent=1 // pred_check
      _
    $region43: #{lenet_forward.1} parent=1 // pred_check_branch
      %51 = sbr.rel (0) target = $region45
    $region44: #{lenet_forward.1} parent=1 // pred_region
      _
    $region45: #{lenet_forward.1} parent=1 // pred_fallthru
      _
    // Predicated region
    $region46: #{lenet_forward.1} parent=1 // pred_check
      _
    $region47: #{lenet_forward.1} parent=1 // pred_check_branch
      %53 = sbr.rel (0) target = $region49
    $region48: #{lenet_forward.1} parent=1 // pred_region
      _
    $region49: #{lenet_forward.1} parent=1 // pred_fallthru
      _
    // Predicated region
    $region50: #{lenet_forward.1} parent=1 // pred_check
      _
    $region51: #{lenet_forward.1} parent=1 // pred_check_branch
      %55 = sbr.rel (0) target = $region53
    $region52: #{lenet_forward.1} parent=1 // pred_region
      _
    $region53: #{lenet_forward.1} parent=1 // pred_fallthru
      _
    // Predicated region
    $region54: #{lenet_forward.1} parent=1 // pred_check
      _
    $region55: #{lenet_forward.1} parent=1 // pred_check_branch
      %57 = sbr.rel (0) target = $region57
    $region56: #{lenet_forward.1} parent=1 // pred_region
      %58 = dma.done [#allocation3], 2560
    $region57: #{lenet_forward.1} parent=1 // pred_fallthru
      _
    %v60 = vld [vmem:[%s2] sm:$0x3]
    %v62 = vlaneseq
    %v63 = vshrl.u32 %v62, 7
    %v64 = vsub.s32 0, %v63
    %v65 = vrot.slane %v60, %v64
    %v66 = vlaneseq
    %v67 = vshrl.u32 %v66, 7
    %v68 = vsub.s32 1, %v67
    %v69 = vrot.slane %v60, %v68
    %v72 = vld [vmem:[%s5] sm:$0x1]
    %v74 = vlaneseq
    %v75 = vshrl.u32 %v74, 7
    %v76 = vsub.s32 0, %v75
    %v77 = vrot.slane %v72, %v76
    %v79 = vld [vmem:[%s3] sm:$0xf]
    %v80 = vld [vmem:[%s3 + $0x4] sm:$0x3]
    %v81 = vld [vmem:[%s6] sm:$0x3]
    %v82 = vld [vmem:[%s0] sm:$0xf]
    %v83 = vld [vmem:[%s0 + $0x4] sm:$0xf]
    %v84 = vld [vmem:[%s0 + $0x8] sm:$0xf]
    %v85 = vld [vmem:[%s0 + $0xc] sm:$0x3]
    %v86 = vld [vmem:[#allocation2] sm:$0xff]
    %v87 = vld [vmem:[#allocation2 + $0x8] sm:$0xff]
    %v88 = vld [vmem:[#allocation2 + $0x10] sm:$0xff]
    %v89 = vld [vmem:[#allocation2 + $0x18] sm:$0x33]
    %v93 = vunpack.c.l.b16 %v82
    %v94 = vunpack.c.l.b16 %v83
    %v95 = vunpack.c.l.b16 %v84
    %v96 = vpack.c.b16 %v94, %v93
    %v97 = vpack.c.b16 %v95, %v95
    %v102 = vunpack.c.l.b16 %v86
    %v103 = vunpack.c.h.b16 %v86
    %v104 = vunpack.c.l.b16 %v87
    %v105 = vunpack.c.h.b16 %v87
    %v106 = vunpack.c.l.b16 %v88
    %v107 = vunpack.c.h.b16 %v88
    %v108 = vunpack.c.l.b16 %v89
    %v109 = vunpack.c.h.b16 %v89
    %v110 = vpack.c.b16 %v104, %v102
    %v111 = vpack.c.b16 %v105, %v103
    %v112 = vpack.c.b16 %v108, %v106
    %v113 = vpack.c.b16 %v109, %v107
    %vm116 = vcmask 228352
    %v118 = vsel %vm116, %v96, 0
    %v121 = vsel %vm116, %v97, 0
    %vm123 = vcmask 1045504
    %v125 = vsel %vm123, %v112, 0
    %v128 = vsel %vm123, %v113, 0
    %130 = vmatprep.subr.bf16.mxu0 0
    %131 = vmatpush1.bf16.msra.mxu0 0
    %132 = vmatprep.subr.bf16.mxu0 0
    %133 = vmatpush1.bf16.msra.mxu0 0
    %134 = vmatprep.subr.bf16.mxu0 0
    %135 = vmatpush1.bf16.msra.mxu0 0
    %136 = vmatprep.subr.bf16.mxu0 0
    %137 = vmatpush1.bf16.msra.mxu0 0
    %138 = vmatprep.subr.bf16.mxu0 0
    %139 = vmatpush1.bf16.msra.mxu0 0
    %140 = vmatprep.subr.bf16.mxu0 0
    %141 = vmatpush1.bf16.msra.mxu0 0
    %142 = vmatprep.subr.bf16.mxu0 %v128
    %143 = vmatpush1.bf16.msra.mxu0 %v125
    %144 = vmatprep.subr.bf16.mxu0 %v111
    %145 = vmatpush1.bf16.msra.mxu0 %v110
    %146 = vmatprep.subr.bf16.mxu0 0
    %147 = vmatpush2.bf16.msra.mxu0 0
    %148 = vmatprep.subr.bf16.mxu0 0
    %149 = vmatpush2.bf16.msra.mxu0 0
    %150 = vmatprep.subr.bf16.mxu0 0
    %151 = vmatpush2.bf16.msra.mxu0 0
    %152 = vmatprep.subr.bf16.mxu0 0
    %153 = vmatpush2.bf16.msra.mxu0 0
    %154 = vmatprep.subr.bf16.mxu0 0
    %155 = vmatpush2.bf16.msra.mxu0 0
    %156 = vmatprep.subr.bf16.mxu0 0
    %157 = vmatpush2.bf16.msra.mxu0 0
    %158 = vmatprep.subr.bf16.mxu0 0
    %159 = vmatpush2.bf16.msra.mxu0 0
    %160 = vmatprep.subr.bf16.mxu0 0
    %161 = vmatpush2.bf16.msra.mxu0 0
    %162 = vmatprep.mubr.bf16.mxu0 0
    %163 = vmatmul.mubr.bf16.gmra.mxu0 %v118
    %v164 = vpop.f32.mrf.mxu0
    %v165 = vadd.f32 0.0, %v164
    %v166 = vpop.f32.mrf.mxu0
    %v167 = vadd.f32 0.0, %v166
    %v168 = vpop.f32.mrf.mxu0
    %v169 = vadd.f32 0.0, %v168
    %v170 = vpop.f32.mrf.mxu0
    %v171 = vadd.f32 0.0, %v170
    %172 = vmatprep.mubr.bf16.mxu0 0
    %173 = vmatmul.mubr.bf16.gmra.mxu0 %v121
    %v174 = vpop.f32.mrf.mxu0
    %v175 = vadd.f32 0.0, %v174
    %v176 = vpop.f32.mrf.mxu0
    %v177 = vadd.f32 0.0, %v176
    %v178 = vpop.f32.mrf.mxu0
    %v179 = vpop.f32.mrf.mxu0
    %180 = vdwg.mxu0
    %v181 = vadd.f32 %v65, %v165
    %v182 = vadd.f32 %v69, %v167
    %v183 = vadd.f32 %v65, %v169
    %v184 = vadd.f32 %v69, %v171
    %v185 = vadd.f32 %v65, %v175
    %v186 = vadd.f32 %v69, %v177
    %s187 = scalar_lea.vmem [#allocation2], 32
    %v188 = vld [vmem:[%s187] sm:$0xff]
    %v189 = vld [vmem:[%s187 + $0x8] sm:$0xff]
    %v190 = vld [vmem:[%s187 + $0x10] sm:$0xff]
    %v191 = vld [vmem:[%s187 + $0x18] sm:$0x33]
    %v193 = vunpack.c.l.b16 %v85
    %v194 = vpack.c.b16 %v193, %v95
    %vm195 = vsmask.f32 7424
    %v196 = vshrl.u32 %v96, 16
    %v198 = vshll.u32 %v96, 16
    %v200 = vrot.slane %v198, 1
    %v201 = vor.u32 %v196, %v200
    %v203 = vshll.u32 %v194, 16
    %v205 = vrot.slane %v203, 1
    %v206 = vsel %vm195, %v201, %v205
    %v207 = vshrl.u32 %v194, 16
    %v209 = vor.u32 %v207, %v205
    %v214 = vunpack.c.l.b16 %v188
    %v215 = vunpack.c.h.b16 %v188
    %v216 = vunpack.c.l.b16 %v189
    %v217 = vunpack.c.h.b16 %v189
    %v218 = vunpack.c.l.b16 %v190
    %v219 = vunpack.c.h.b16 %v190
    %v220 = vunpack.c.l.b16 %v191
    %v221 = vunpack.c.h.b16 %v191
    %v222 = vpack.c.b16 %v216, %v214
    %v223 = vpack.c.b16 %v217, %v215
    %v224 = vpack.c.b16 %v220, %v218
    %v225 = vpack.c.b16 %v221, %v219
    %v229 = vsel %vm116, %v206, 0
    %v232 = vsel %vm116, %v209, 0
    %v235 = vsel %vm123, %v224, 0
    %v238 = vsel %vm123, %v225, 0
    %240 = vmatprep.subr.bf16.mxu0 0
    %241 = vmatpush1.bf16.msra.mxu0 0
    %242 = vmatprep.subr.bf16.mxu0 0
    %243 = vmatpush1.bf16.msra.mxu0 0
    %244 = vmatprep.subr.bf16.mxu0 0
    %245 = vmatpush1.bf16.msra.mxu0 0
    %246 = vmatprep.subr.bf16.mxu0 0
    %247 = vmatpush1.bf16.msra.mxu0 0
    %248 = vmatprep.subr.bf16.mxu0 0
    %249 = vmatpush1.bf16.msra.mxu0 0
    %250 = vmatprep.subr.bf16.mxu0 0
    %251 = vmatpush1.bf16.msra.mxu0 0
    %252 = vmatprep.subr.bf16.mxu0 %v238
    %253 = vmatpush1.bf16.msra.mxu0 %v235
    %254 = vmatprep.subr.bf16.mxu0 %v223
    %255 = vmatpush1.bf16.msra.mxu0 %v222
    %256 = vmatprep.subr.bf16.mxu0 0
    %257 = vmatpush2.bf16.msra.mxu0 0
    %258 = vmatprep.subr.bf16.mxu0 0
    %259 = vmatpush2.bf16.msra.mxu0 0
    %260 = vmatprep.subr.bf16.mxu0 0
    %261 = vmatpush2.bf16.msra.mxu0 0
    %262 = vmatprep.subr.bf16.mxu0 0
    %263 = vmatpush2.bf16.msra.mxu0 0
    %264 = vmatprep.subr.bf16.mxu0 0
    %265 = vmatpush2.bf16.msra.mxu0 0
    %266 = vmatprep.subr.bf16.mxu0 0
    %267 = vmatpush2.bf16.msra.mxu0 0
    %268 = vmatprep.subr.bf16.mxu0 0
    %269 = vmatpush2.bf16.msra.mxu0 0
    %270 = vmatprep.subr.bf16.mxu0 0
    %271 = vmatpush2.bf16.msra.mxu0 0
    %272 = vmatprep.mubr.bf16.mxu0 0
    %273 = vmatmul.mubr.bf16.gmra.mxu0 %v229
    %v274 = vpop.f32.mrf.mxu0
    %v275 = vadd.f32 0.0, %v274
    %v276 = vpop.f32.mrf.mxu0
    %v277 = vadd.f32 0.0, %v276
    %v278 = vpop.f32.mrf.mxu0
    %v279 = vadd.f32 0.0, %v278
    %v280 = vpop.f32.mrf.mxu0
    %v281 = vadd.f32 0.0, %v280
    %282 = vmatprep.mubr.bf16.mxu0 0
    %283 = vmatmul.mubr.bf16.gmra.mxu0 %v232
    %v284 = vpop.f32.mrf.mxu0
    %v285 = vadd.f32 0.0, %v284
    %v286 = vpop.f32.mrf.mxu0
    %v287 = vadd.f32 0.0, %v286
    %v288 = vpop.f32.mrf.mxu0
    %v289 = vpop.f32.mrf.mxu0
    %290 = vdwg.mxu0
    %v291 = vadd.f32 %v181, %v275
    %v292 = vadd.f32 %v182, %v277
    %v293 = vadd.f32 %v183, %v279
    %v294 = vadd.f32 %v184, %v281
    %v295 = vadd.f32 %v185, %v285
    %v296 = vadd.f32 %v186, %v287
    %s297 = scalar_lea.vmem [#allocation2], 64
    %v298 = vld [vmem:[%s297] sm:$0xff]
    %v299 = vld [vmem:[%s297 + $0x8] sm:$0xff]
    %v300 = vld [vmem:[%s297 + $0x10] sm:$0xff]
    %v301 = vld [vmem:[%s297 + $0x18] sm:$0x33]
    %vm302 = vcmask 1046528
    %v303 = vrot.slane %v96, 1
    %v304 = vrot.slane %v194, 1
    %v305 = vsel %vm302, %v303, %v304
    %v310 = vunpack.c.l.b16 %v298
    %v311 = vunpack.c.h.b16 %v298
    %v312 = vunpack.c.l.b16 %v299
    %v313 = vunpack.c.h.b16 %v299
    %v314 = vunpack.c.l.b16 %v300
    %v315 = vunpack.c.h.b16 %v300
    %v316 = vunpack.c.l.b16 %v301
    %v317 = vunpack.c.h.b16 %v301
    %v318 = vpack.c.b16 %v312, %v310
    %v319 = vpack.c.b16 %v313, %v311
    %v320 = vpack.c.b16 %v316, %v314
    %v321 = vpack.c.b16 %v317, %v315
    %v325 = vsel %vm116, %v305, 0
    %v328 = vsel %vm116, %v304, 0
    %v331 = vsel %vm123, %v320, 0
    %v334 = vsel %vm123, %v321, 0
    %336 = vmatprep.subr.bf16.mxu0 0
    %337 = vmatpush1.bf16.msra.mxu0 0
    %338 = vmatprep.subr.bf16.mxu0 0
    %339 = vmatpush1.bf16.msra.mxu0 0
    %340 = vmatprep.subr.bf16.mxu0 0
    %341 = vmatpush1.bf16.msra.mxu0 0
    %342 = vmatprep.subr.bf16.mxu0 0
    %343 = vmatpush1.bf16.msra.mxu0 0
    %344 = vmatprep.subr.bf16.mxu0 0
    %345 = vmatpush1.bf16.msra.mxu0 0
    %346 = vmatprep.subr.bf16.mxu0 0
    %347 = vmatpush1.bf16.msra.mxu0 0
    %348 = vmatprep.subr.bf16.mxu0 %v334
    %349 = vmatpush1.bf16.msra.mxu0 %v331
    %350 = vmatprep.subr.bf16.mxu0 %v319
    %351 = vmatpush1.bf16.msra.mxu0 %v318
    %352 = vmatprep.subr.bf16.mxu0 0
    %353 = vmatpush2.bf16.msra.mxu0 0
    %354 = vmatprep.subr.bf16.mxu0 0
    %355 = vmatpush2.bf16.msra.mxu0 0
    %356 = vmatprep.subr.bf16.mxu0 0
    %357 = vmatpush2.bf16.msra.mxu0 0
    %358 = vmatprep.subr.bf16.mxu0 0
    %359 = vmatpush2.bf16.msra.mxu0 0
    %360 = vmatprep.subr.bf16.mxu0 0
    %361 = vmatpush2.bf16.msra.mxu0 0
    %362 = vmatprep.subr.bf16.mxu0 0
    %363 = vmatpush2.bf16.msra.mxu0 0
    %364 = vmatprep.subr.bf16.mxu0 0
    %365 = vmatpush2.bf16.msra.mxu0 0
    %366 = vmatprep.subr.bf16.mxu0 0
    %367 = vmatpush2.bf16.msra.mxu0 0
    %368 = vmatprep.mubr.bf16.mxu0 0
    %369 = vmatmul.mubr.bf16.gmra.mxu0 %v325
    %v370 = vpop.f32.mrf.mxu0
    %v371 = vadd.f32 0.0, %v370
    %v372 = vpop.f32.mrf.mxu0
    %v373 = vadd.f32 0.0, %v372
    %v374 = vpop.f32.mrf.mxu0
    %v375 = vadd.f32 0.0, %v374
    %v376 = vpop.f32.mrf.mxu0
    %v377 = vadd.f32 0.0, %v376
    %378 = vmatprep.mubr.bf16.mxu0 0
    %379 = vmatmul.mubr.bf16.gmra.mxu0 %v328
    %v380 = vpop.f32.mrf.mxu0
    %v381 = vadd.f32 0.0, %v380
    %v382 = vpop.f32.mrf.mxu0
    %v383 = vadd.f32 0.0, %v382
    %v384 = vpop.f32.mrf.mxu0
    %v385 = vpop.f32.mrf.mxu0
    %386 = vdwg.mxu0
    %v387 = vadd.f32 %v291, %v371
    %v388 = vadd.f32 %v292, %v373
    %v389 = vadd.f32 %v293, %v375
    %v390 = vadd.f32 %v294, %v377
    %v391 = vadd.f32 %v295, %v381
    %v392 = vadd.f32 %v296, %v383
    %s393 = scalar_lea.vmem [#allocation2], 96
    %v394 = vld [vmem:[%s393] sm:$0xff]
    %v395 = vld [vmem:[%s393 + $0x8] sm:$0xff]
    %v396 = vld [vmem:[%s393 + $0x10] sm:$0xff]
    %v397 = vld [vmem:[%s393 + $0x18] sm:$0x33]
    %vm398 = vsmask.f32 6400
    %v399 = vrot.slane %v196, 1
    %v400 = vrot.slane %v198, 2
    %v401 = vor.u32 %v399, %v400
    %v402 = vrot.slane %v207, 1
    %v403 = vrot.slane %v203, 2
    %v404 = vor.u32 %v402, %v403
    %v405 = vsel %vm398, %v401, %v404
    %v410 = vunpack.c.l.b16 %v394
    %v411 = vunpack.c.h.b16 %v394
    %v412 = vunpack.c.l.b16 %v395
    %v413 = vunpack.c.h.b16 %v395
    %v414 = vunpack.c.l.b16 %v396
    %v415 = vunpack.c.h.b16 %v396
    %v416 = vunpack.c.l.b16 %v397
    %v417 = vunpack.c.h.b16 %v397
    %v418 = vpack.c.b16 %v412, %v410
    %v419 = vpack.c.b16 %v413, %v411
    %v420 = vpack.c.b16 %v416, %v414
    %v421 = vpack.c.b16 %v417, %v415
    %v425 = vsel %vm116, %v405, 0
    %v428 = vsel %vm116, %v404, 0
    %v431 = vsel %vm123, %v420, 0
    %v434 = vsel %vm123, %v421, 0
    %436 = vmatprep.subr.bf16.mxu0 0
    %437 = vmatpush1.bf16.msra.mxu0 0
    %438 = vmatprep.subr.bf16.mxu0 0
    %439 = vmatpush1.bf16.msra.mxu0 0
    %440 = vmatprep.subr.bf16.mxu0 0
    %441 = vmatpush1.bf16.msra.mxu0 0
    %442 = vmatprep.subr.bf16.mxu0 0
    %443 = vmatpush1.bf16.msra.mxu0 0
    %444 = vmatprep.subr.bf16.mxu0 0
    %445 = vmatpush1.bf16.msra.mxu0 0
    %446 = vmatprep.subr.bf16.mxu0 0
    %447 = vmatpush1.bf16.msra.mxu0 0
    %448 = vmatprep.subr.bf16.mxu0 %v434
    %449 = vmatpush1.bf16.msra.mxu0 %v431
    %450 = vmatprep.subr.bf16.mxu0 %v419
    %451 = vmatpush1.bf16.msra.mxu0 %v418
    %452 = vmatprep.subr.bf16.mxu0 0
    %453 = vmatpush2.bf16.msra.mxu0 0
    %454 = vmatprep.subr.bf16.mxu0 0
    %455 = vmatpush2.bf16.msra.mxu0 0
    %456 = vmatprep.subr.bf16.mxu0 0
    %457 = vmatpush2.bf16.msra.mxu0 0
    %458 = vmatprep.subr.bf16.mxu0 0
    %459 = vmatpush2.bf16.msra.mxu0 0
    %460 = vmatprep.subr.bf16.mxu0 0
    %461 = vmatpush2.bf16.msra.mxu0 0
    %462 = vmatprep.subr.bf16.mxu0 0
    %463 = vmatpush2.bf16.msra.mxu0 0
    %464 = vmatprep.subr.bf16.mxu0 0
    %465 = vmatpush2.bf16.msra.mxu0 0
    %466 = vmatprep.subr.bf16.mxu0 0
    %467 = vmatpush2.bf16.msra.mxu0 0
    %468 = vmatprep.mubr.bf16.mxu0 0
    %469 = vmatmul.mubr.bf16.gmra.mxu0 %v425
    %v470 = vpop.f32.mrf.mxu0
    %v471 = vadd.f32 0.0, %v470
    %v472 = vpop.f32.mrf.mxu0
    %v473 = vadd.f32 0.0, %v472
    %v474 = vpop.f32.mrf.mxu0
    %v475 = vadd.f32 0.0, %v474
    %v476 = vpop.f32.mrf.mxu0
    %v477 = vadd.f32 0.0, %v476
    %478 = vmatprep.mubr.bf16.mxu0 0
    %479 = vmatmul.mubr.bf16.gmra.mxu0 %v428
    %v480 = vpop.f32.mrf.mxu0
    %v481 = vadd.f32 0.0, %v480
    %v482 = vpop.f32.mrf.mxu0
    %v483 = vadd.f32 0.0, %v482
    %v484 = vpop.f32.mrf.mxu0
    %v485 = vpop.f32.mrf.mxu0
    %486 = vdwg.mxu0
    %v487 = vadd.f32 %v387, %v471
    %v488 = vadd.f32 %v388, %v473
    %v489 = vadd.f32 %v389, %v475
    %v490 = vadd.f32 %v390, %v477
    %v491 = vadd.f32 %v391, %v481
    %v492 = vadd.f32 %v392, %v483
    %s493 = scalar_lea.vmem [#allocation2], 128
    %v494 = vld [vmem:[%s493] sm:$0xff]
    %v495 = vld [vmem:[%s493 + $0x8] sm:$0xff]
    %v496 = vld [vmem:[%s493 + $0x10] sm:$0xff]
    %v497 = vld [vmem:[%s493 + $0x18] sm:$0x33]
    %vm498 = vcmask 1045504
    %v499 = vrot.slane %v96, 2
    %v500 = vrot.slane %v194, 2
    %v501 = vsel %vm498, %v499, %v500
    %v506 = vunpack.c.l.b16 %v494
    %v507 = vunpack.c.h.b16 %v494
    %v508 = vunpack.c.l.b16 %v495
    %v509 = vunpack.c.h.b16 %v495
    %v510 = vunpack.c.l.b16 %v496
    %v511 = vunpack.c.h.b16 %v496
    %v512 = vunpack.c.l.b16 %v497
    %v513 = vunpack.c.h.b16 %v497
    %v514 = vpack.c.b16 %v508, %v506
    %v515 = vpack.c.b16 %v509, %v507
    %v516 = vpack.c.b16 %v512, %v510
    %v517 = vpack.c.b16 %v513, %v511
    %v521 = vsel %vm116, %v501, 0
    %v524 = vsel %vm116, %v500, 0
    %v527 = vsel %vm123, %v516, 0
    %v530 = vsel %vm123, %v517, 0
    %532 = vmatprep.subr.bf16.mxu0 0
    %533 = vmatpush1.bf16.msra.mxu0 0
    %534 = vmatprep.subr.bf16.mxu0 0
    %535 = vmatpush1.bf16.msra.mxu0 0
    %536 = vmatprep.subr.bf16.mxu0 0
    %537 = vmatpush1.bf16.msra.mxu0 0
    %538 = vmatprep.subr.bf16.mxu0 0
    %539 = vmatpush1.bf16.msra.mxu0 0
    %540 = vmatprep.subr.bf16.mxu0 0
    %541 = vmatpush1.bf16.msra.mxu0 0
    %542 = vmatprep.subr.bf16.mxu0 0
    %543 = vmatpush1.bf16.msra.mxu0 0
    %544 = vmatprep.subr.bf16.mxu0 %v530
    %545 = vmatpush1.bf16.msra.mxu0 %v527
    %546 = vmatprep.subr.bf16.mxu0 %v515
    %547 = vmatpush1.bf16.msra.mxu0 %v514
    %548 = vmatprep.subr.bf16.mxu0 0
    %549 = vmatpush2.bf16.msra.mxu0 0
    %550 = vmatprep.subr.bf16.mxu0 0
    %551 = vmatpush2.bf16.msra.mxu0 0
    %552 = vmatprep.subr.bf16.mxu0 0
    %553 = vmatpush2.bf16.msra.mxu0 0
    %554 = vmatprep.subr.bf16.mxu0 0
    %555 = vmatpush2.bf16.msra.mxu0 0
    %556 = vmatprep.subr.bf16.mxu0 0
    %557 = vmatpush2.bf16.msra.mxu0 0
    %558 = vmatprep.subr.bf16.mxu0 0
    %559 = vmatpush2.bf16.msra.mxu0 0
    %560 = vmatprep.subr.bf16.mxu0 0
    %561 = vmatpush2.bf16.msra.mxu0 0
    %562 = vmatprep.subr.bf16.mxu0 0
    %563 = vmatpush2.bf16.msra.mxu0 0
    %564 = vmatprep.mubr.bf16.mxu0 0
    %565 = vmatmul.mubr.bf16.gmra.mxu0 %v521
    %v566 = vpop.f32.mrf.mxu0
    %v567 = vadd.f32 0.0, %v566
    %v568 = vpop.f32.mrf.mxu0
    %v569 = vadd.f32 0.0, %v568
    %v570 = vpop.f32.mrf.mxu0
    %v571 = vadd.f32 0.0, %v570
    %v572 = vpop.f32.mrf.mxu0
    %v573 = vadd.f32 0.0, %v572
    %574 = vmatprep.mubr.bf16.mxu0 0
    %575 = vmatmul.mubr.bf16.gmra.mxu0 %v524
    %v576 = vpop.f32.mrf.mxu0
    %v577 = vadd.f32 0.0, %v576
    %v578 = vpop.f32.mrf.mxu0
    %v579 = vadd.f32 0.0, %v578
    %v580 = vpop.f32.mrf.mxu0
    %v581 = vpop.f32.mrf.mxu0
    %582 = vdwg.mxu0
    %v583 = vadd.f32 %v487, %v567
    %v584 = vadd.f32 %v488, %v569
    %v585 = vadd.f32 %v489, %v571
    %v586 = vadd.f32 %v490, %v573
    %v587 = vadd.f32 %v491, %v577
    %v588 = vadd.f32 %v492, %v579
    %v589 = vmax.f32 %v583, 0.0
    %v590 = vmax.f32 %v584, 0.0
    %v591 = vmax.f32 %v585, 0.0
    %v592 = vmax.f32 %v586, 0.0
    %v593 = vmax.f32 %v587, 0.0
    %v594 = vmax.f32 %v588, 0.0
    %v595 = vrot.slane %v589, 1
    %v596 = vrot.slane %v590, 1
    %v597 = vrot.slane %v591, 1
    %v598 = vrot.slane %v592, 1
    %v599 = vrot.slane %v593, 1
    %v600 = vrot.slane %v594, 1
    %v601 = vlaneseq
    %v602 = vshrl.u32 %v601, 7
    %vm603 = vcmp.lt.s32.totalorder %v602, 7
    %v604 = vsel %vm603, %v597, %v599
    %v605 = vsel %vm603, %v598, %v600
    %v606 = vsel %vm603, %v595, %v597
    %v607 = vsel %vm603, %v596, %v598
    %v608 = vsel %vm603, %v599, %v595
    %v609 = vsel %vm603, %v600, %v596
    %v610 = vmax.f32 %v589, %v606
    %v611 = vmax.f32 %v590, %v607
    %v612 = vmax.f32 %v591, %v604
    %v613 = vmax.f32 %v592, %v605
    %v614 = vmax.f32 %v593, %v608
    %v615 = vmax.f32 %v594, %v609
    %616 = vrot.lane.b32.xlu0 %v610, 127
    %v617 = vpop.permute.xlu0 %616
    %618 = vrot.lane.b32.xlu0 %v612, 127
    %v619 = vpop.permute.xlu0 %618
    %620 = vrot.lane.b32.xlu0 %v614, 127
    %v621 = vpop.permute.xlu0 %620
    %622 = vrot.lane.b32.xlu0 %v611, 127
    %v623 = vpop.permute.xlu0 %622
    %624 = vrot.lane.b32.xlu0 %v613, 127
    %v625 = vpop.permute.xlu0 %624
    %626 = vrot.lane.b32.xlu0 %v615, 127
    %v627 = vpop.permute.xlu0 %626
    %v628 = vlaneseq
    %v629 = vand.u32 %v628, 127
    %vm630 = vcmp.lt.s32.totalorder %v629, 127
    %v631 = vsel %vm630, %v617, %v623
    %v632 = vsel %vm630, %v619, %v625
    %v633 = vsel %vm630, %v621, %v627
    %v634 = vsel %vm630, %v623, %v617
    %v635 = vsel %vm630, %v625, %v619
    %v636 = vsel %vm630, %v627, %v621
    %v637 = vmax.f32 %v610, %v631
    %v638 = vmax.f32 %v611, %v634
    %v639 = vmax.f32 %v612, %v632
    %v640 = vmax.f32 %v613, %v635
    %v641 = vmax.f32 %v614, %v633
    %v642 = vmax.f32 %v615, %v636
    %v643 = vpack.c.bf16 %v639, %v637
    %v644 = vpack.c.bf16 %v640, %v638
    %v645 = vpack.c.bf16 %v641, %v641
    %v646 = vpack.c.bf16 %v642, %v642
    %v649 = vunpack.c.l.b16 %v79
    %v650 = vunpack.c.l.b16 %v80
    %v651 = vpack.c.b16 %v650, %v649
    %vm652 = vcmask 195584
    %v654 = vsel %vm652, %v651, 0
    %vm656 = vcmask 1043456
    %v658 = vsel %vm656, %v645, 0
    %v661 = vsel %vm656, %v646, 0
    %663 = vmatprep.subr.bf16.mxu0 0
    %664 = vmatpush1.bf16.msra.mxu0 0
    %665 = vmatprep.subr.bf16.mxu0 0
    %666 = vmatpush1.bf16.msra.mxu0 0
    %667 = vmatprep.subr.bf16.mxu0 0
    %668 = vmatpush1.bf16.msra.mxu0 0
    %669 = vmatprep.subr.bf16.mxu0 0
    %670 = vmatpush1.bf16.msra.mxu0 0
    %671 = vmatprep.subr.bf16.mxu0 0
    %672 = vmatpush1.bf16.msra.mxu0 0
    %673 = vmatprep.subr.bf16.mxu0 0
    %674 = vmatpush1.bf16.msra.mxu0 0
    %675 = vmatprep.subr.bf16.mxu0 %v661
    %676 = vmatpush1.bf16.msra.mxu0 %v658
    %677 = vmatprep.subr.bf16.mxu0 %v644
    %678 = vmatpush1.bf16.msra.mxu0 %v643
    %679 = vmatprep.subr.bf16.mxu0 0
    %680 = vmatpush2.bf16.msra.mxu0 0
    %681 = vmatprep.subr.bf16.mxu0 0
    %682 = vmatpush2.bf16.msra.mxu0 0
    %683 = vmatprep.subr.bf16.mxu0 0
    %684 = vmatpush2.bf16.msra.mxu0 0
    %685 = vmatprep.subr.bf16.mxu0 0
    %686 = vmatpush2.bf16.msra.mxu0 0
    %687 = vmatprep.subr.bf16.mxu0 0
    %688 = vmatpush2.bf16.msra.mxu0 0
    %689 = vmatprep.subr.bf16.mxu0 0
    %690 = vmatpush2.bf16.msra.mxu0 0
    %691 = vmatprep.subr.bf16.mxu0 0
    %692 = vmatpush2.bf16.msra.mxu0 0
    %693 = vmatprep.subr.bf16.mxu0 0
    %694 = vmatpush2.bf16.msra.mxu0 0
    %695 = vmatprep.mubr.bf16.mxu0 0
    %696 = vmatmul.mubr.bf16.gmra.mxu0 %v654
    %v697 = vpop.f32.mrf.mxu0
    %v698 = vadd.f32 0.0, %v697
    %v699 = vpop.f32.mrf.mxu0
    %v700 = vadd.f32 0.0, %v699
    %v701 = vpop.f32.mrf.mxu0
    %v702 = vadd.f32 0.0, %v701
    %v703 = vpop.f32.mrf.mxu0
    %v704 = vadd.f32 0.0, %v703
    %705 = vdwg.mxu0
    %v706 = vpack.c.bf16 %v702, %v698
    %v707 = vpack.c.bf16 %v704, %v700
    %v708 = vld [vmem:[%s4] sm:$0xf]
    %v709 = vld [vmem:[%s4 + $0x4] sm:$0xf]
    %v710 = vld [vmem:[%s4 + $0x8] sm:$0xf]
    %v711 = vld [vmem:[%s4 + $0xc] sm:$0xf]
    %v712 = vld [vmem:[%s4 + $0x10] sm:$0xf]
    %v713 = vld [vmem:[%s4 + $0x14] sm:$0xf]
    %v714 = vld [vmem:[%s4 + $0x18] sm:$0xf]
    %v715 = vld [vmem:[%s4 + $0x1c] sm:$0xf]
    %v716 = vld [vmem:[%s4 + $0x20] sm:$0xf]
    %v717 = vld [vmem:[%s4 + $0x24] sm:$0xf]
    %v718 = vld [vmem:[%s4 + $0x28] sm:$0xf]
    %v719 = vld [vmem:[%s4 + $0x2c] sm:$0xf]
    %v720 = vld [vmem:[%s4 + $0x30] sm:$0xf]
    %v721 = vld [vmem:[%s4 + $0x34] sm:$0xf]
    %v722 = vld [vmem:[%s4 + $0x38] sm:$0xf]
    %v723 = vld [vmem:[%s4 + $0x3c] sm:$0xf]
    %v724 = vld [vmem:[%s4 + $0x40] sm:$0xf]
    %v725 = vld [vmem:[%s4 + $0x44] sm:$0xf]
    %v726 = vld [vmem:[%s4 + $0x48] sm:$0xf]
    %v727 = vld [vmem:[%s4 + $0x4c] sm:$0xf]
    %v728 = vld [vmem:[%s4 + $0x50] sm:$0xf]
    %v729 = vld [vmem:[%s4 + $0x54] sm:$0xf]
    %v730 = vld [vmem:[%s4 + $0x58] sm:$0xf]
    %v731 = vld [vmem:[%s4 + $0x5c] sm:$0xf]
    %v732 = vld [vmem:[%s4 + $0x60] sm:$0xf]
    %v733 = vld [vmem:[%s4 + $0x64] sm:$0xf]
    %v734 = vld [vmem:[%s4 + $0x68] sm:$0xf]
    %v735 = vld [vmem:[%s4 + $0x6c] sm:$0xf]
    %v736 = vld [vmem:[%s4 + $0x70] sm:$0xf]
    %v737 = vld [vmem:[%s4 + $0x74] sm:$0xf]
    %v738 = vld [vmem:[%s4 + $0x78] sm:$0xf]
    %v739 = vld [vmem:[%s4 + $0x7c] sm:$0xf]
    %v772 = vunpack.c.l.b16 %v708
    %v773 = vunpack.c.l.b16 %v709
    %v774 = vunpack.c.l.b16 %v710
    %v775 = vunpack.c.l.b16 %v711
    %v776 = vunpack.c.l.b16 %v712
    %v777 = vunpack.c.l.b16 %v713
    %v778 = vunpack.c.l.b16 %v714
    %v779 = vunpack.c.l.b16 %v715
    %v780 = vunpack.c.l.b16 %v716
    %v781 = vunpack.c.l.b16 %v717
    %v782 = vunpack.c.l.b16 %v718
    %v783 = vunpack.c.l.b16 %v719
    %v784 = vunpack.c.l.b16 %v720
    %v785 = vunpack.c.l.b16 %v721
    %v786 = vunpack.c.l.b16 %v722
    %v787 = vunpack.c.l.b16 %v723
    %v788 = vunpack.c.l.b16 %v724
    %v789 = vunpack.c.l.b16 %v725
    %v790 = vunpack.c.l.b16 %v726
    %v791 = vunpack.c.l.b16 %v727
    %v792 = vunpack.c.l.b16 %v728
    %v793 = vunpack.c.l.b16 %v729
    %v794 = vunpack.c.l.b16 %v730
    %v795 = vunpack.c.l.b16 %v731
    %v796 = vunpack.c.l.b16 %v732
    %v797 = vunpack.c.l.b16 %v733
    %v798 = vunpack.c.l.b16 %v734
    %v799 = vunpack.c.l.b16 %v735
    %v800 = vunpack.c.l.b16 %v736
    %v801 = vunpack.c.l.b16 %v737
    %v802 = vunpack.c.l.b16 %v738
    %v803 = vunpack.c.l.b16 %v739
    %v804 = vpack.c.b16 %v773, %v772
    %v805 = vpack.c.b16 %v775, %v774
    %v806 = vpack.c.b16 %v777, %v776
    %v807 = vpack.c.b16 %v779, %v778
    %v808 = vpack.c.b16 %v781, %v780
    %v809 = vpack.c.b16 %v783, %v782
    %v810 = vpack.c.b16 %v785, %v784
    %v811 = vpack.c.b16 %v787, %v786
    %v812 = vpack.c.b16 %v789, %v788
    %v813 = vpack.c.b16 %v791, %v790
    %v814 = vpack.c.b16 %v793, %v792
    %v815 = vpack.c.b16 %v795, %v794
    %v816 = vpack.c.b16 %v797, %v796
    %v817 = vpack.c.b16 %v799, %v798
    %v818 = vpack.c.b16 %v801, %v800
    %v819 = vpack.c.b16 %v803, %v802
    %836 = vmatprep.subr.bf16.mxu0 0
    %837 = vmatpush1.bf16.msra.mxu0 %v811
    %838 = vmatprep.subr.bf16.mxu0 0
    %839 = vmatpush1.bf16.msra.mxu0 %v810
    %840 = vmatprep.subr.bf16.mxu0 0
    %841 = vmatpush1.bf16.msra.mxu0 %v809
    %842 = vmatprep.subr.bf16.mxu0 0
    %843 = vmatpush1.bf16.msra.mxu0 %v808
    %844 = vmatprep.subr.bf16.mxu0 0
    %845 = vmatpush1.bf16.msra.mxu0 %v807
    %846 = vmatprep.subr.bf16.mxu0 0
    %847 = vmatpush1.bf16.msra.mxu0 %v806
    %848 = vmatprep.subr.bf16.mxu0 0
    %849 = vmatpush1.bf16.msra.mxu0 %v805
    %850 = vmatprep.subr.bf16.mxu0 0
    %851 = vmatpush1.bf16.msra.mxu0 %v804
    %852 = vmatprep.subr.bf16.mxu0 0
    %853 = vmatpush2.bf16.msra.mxu0 %v819
    %854 = vmatprep.subr.bf16.mxu0 0
    %855 = vmatpush2.bf16.msra.mxu0 %v818
    %856 = vmatprep.subr.bf16.mxu0 0
    %857 = vmatpush2.bf16.msra.mxu0 %v817
    %858 = vmatprep.subr.bf16.mxu0 0
    %859 = vmatpush2.bf16.msra.mxu0 %v816
    %860 = vmatprep.subr.bf16.mxu0 0
    %861 = vmatpush2.bf16.msra.mxu0 %v815
    %862 = vmatprep.subr.bf16.mxu0 0
    %863 = vmatpush2.bf16.msra.mxu0 %v814
    %864 = vmatprep.subr.bf16.mxu0 0
    %865 = vmatpush2.bf16.msra.mxu0 %v813
    %866 = vmatprep.subr.bf16.mxu0 0
    %867 = vmatpush2.bf16.msra.mxu0 %v812
    %868 = vmatprep.mubr.bf16.mxu0 %v707
    %869 = vmatmul.mubr.bf16.gmra.mxu0 %v706
    %v870 = vpop.f32.mrf.mxu0
    %v871 = vadd.f32 0.0, %v870
    %v872 = vpop.f32.mrf.mxu0
    %v873 = vpop.f32.mrf.mxu0
    %v874 = vpop.f32.mrf.mxu0
    %875 = vdwg.mxu0
    %v876 = vadd.f32 %v77, %v871
    %s877 = scalar_lea.vmem %s4, 128
    %v878 = vld [vmem:[%s877] sm:$0xf]
    %v879 = vld [vmem:[%s877 + $0x4] sm:$0xf]
    %v880 = vld [vmem:[%s877 + $0x8] sm:$0xf]
    %v881 = vld [vmem:[%s877 + $0xc] sm:$0xf]
    %v882 = vld [vmem:[%s877 + $0x10] sm:$0xf]
    %v883 = vld [vmem:[%s877 + $0x14] sm:$0xf]
    %v884 = vld [vmem:[%s877 + $0x18] sm:$0xf]
    %v885 = vld [vmem:[%s877 + $0x1c] sm:$0xf]
    %v886 = vld [vmem:[%s877 + $0x20] sm:$0xf]
    %v887 = vld [vmem:[%s877 + $0x24] sm:$0xf]
    %v888 = vld [vmem:[%s877 + $0x28] sm:$0xf]
    %v889 = vld [vmem:[%s877 + $0x2c] sm:$0xf]
    %v890 = vld [vmem:[%s877 + $0x30] sm:$0xf]
    %v891 = vld [vmem:[%s877 + $0x34] sm:$0xf]
    %v892 = vld [vmem:[%s877 + $0x38] sm:$0xf]
    %v893 = vld [vmem:[%s877 + $0x3c] sm:$0xf]
    %v894 = vld [vmem:[%s877 + $0x40] sm:$0xf]
    %v895 = vld [vmem:[%s877 + $0x44] sm:$0xf]
    %v896 = vld [vmem:[%s877 + $0x48] sm:$0xf]
    %v897 = vld [vmem:[%s877 + $0x4c] sm:$0xf]
    %v898 = vld [vmem:[%s877 + $0x50] sm:$0xf]
    %v899 = vld [vmem:[%s877 + $0x54] sm:$0xf]
    %v900 = vld [vmem:[%s877 + $0x58] sm:$0xf]
    %v901 = vld [vmem:[%s877 + $0x5c] sm:$0xf]
    %v902 = vld [vmem:[%s877 + $0x60] sm:$0xf]
    %v903 = vld [vmem:[%s877 + $0x64] sm:$0xf]
    %v904 = vld [vmem:[%s877 + $0x68] sm:$0xf]
    %v905 = vld [vmem:[%s877 + $0x6c] sm:$0xf]
    %v906 = vld [vmem:[%s877 + $0x70] sm:$0xf]
    %v907 = vld [vmem:[%s877 + $0x74] sm:$0xf]
    %v908 = vld [vmem:[%s877 + $0x78] sm:$0xf]
    %v909 = vld [vmem:[%s877 + $0x7c] sm:$0xf]
    %v911 = vshrl.u32 %v706, 16
    %v913 = vshll.u32 %v706, 16
    %v915 = vrot.slane %v913, 1
    %v916 = vor.u32 %v911, %v915
    %v918 = vshrl.u32 %v707, 16
    %v920 = vshll.u32 %v707, 16
    %v922 = vrot.slane %v920, 1
    %v923 = vor.u32 %v918, %v922
    %v958 = vunpack.c.l.b16 %v878
    %v959 = vunpack.c.l.b16 %v879
    %v960 = vunpack.c.l.b16 %v880
    %v961 = vunpack.c.l.b16 %v881
    %v962 = vunpack.c.l.b16 %v882
    %v963 = vunpack.c.l.b16 %v883
    %v964 = vunpack.c.l.b16 %v884
    %v965 = vunpack.c.l.b16 %v885
    %v966 = vunpack.c.l.b16 %v886
    %v967 = vunpack.c.l.b16 %v887
    %v968 = vunpack.c.l.b16 %v888
    %v969 = vunpack.c.l.b16 %v889
    %v970 = vunpack.c.l.b16 %v890
    %v971 = vunpack.c.l.b16 %v891
    %v972 = vunpack.c.l.b16 %v892
    %v973 = vunpack.c.l.b16 %v893
    %v974 = vunpack.c.l.b16 %v894
    %v975 = vunpack.c.l.b16 %v895
    %v976 = vunpack.c.l.b16 %v896
    %v977 = vunpack.c.l.b16 %v897
    %v978 = vunpack.c.l.b16 %v898
    %v979 = vunpack.c.l.b16 %v899
    %v980 = vunpack.c.l.b16 %v900
    %v981 = vunpack.c.l.b16 %v901
    %v982 = vunpack.c.l.b16 %v902
    %v983 = vunpack.c.l.b16 %v903
    %v984 = vunpack.c.l.b16 %v904
    %v985 = vunpack.c.l.b16 %v905
    %v986 = vunpack.c.l.b16 %v906
    %v987 = vunpack.c.l.b16 %v907
    %v988 = vunpack.c.l.b16 %v908
    %v989 = vunpack.c.l.b16 %v909
    %v990 = vpack.c.b16 %v959, %v958
    %v991 = vpack.c.b16 %v961, %v960
    %v992 = vpack.c.b16 %v963, %v962
    %v993 = vpack.c.b16 %v965, %v964
    %v994 = vpack.c.b16 %v967, %v966
    %v995 = vpack.c.b16 %v969, %v968
    %v996 = vpack.c.b16 %v971, %v970
    %v997 = vpack.c.b16 %v973, %v972
    %v998 = vpack.c.b16 %v975, %v974
    %v999 = vpack.c.b16 %v977, %v976
    %v1000 = vpack.c.b16 %v979, %v978
    %v1001 = vpack.c.b16 %v981, %v980
    %v1002 = vpack.c.b16 %v983, %v982
    %v1003 = vpack.c.b16 %v985, %v984
    %v1004 = vpack.c.b16 %v987, %v986
    %v1005 = vpack.c.b16 %v989, %v988
    %1022 = vmatprep.subr.bf16.mxu0 0
    %1023 = vmatpush1.bf16.msra.mxu0 %v997
    %1024 = vmatprep.subr.bf16.mxu0 0
    %1025 = vmatpush1.bf16.msra.mxu0 %v996
    %1026 = vmatprep.subr.bf16.mxu0 0
    %1027 = vmatpush1.bf16.msra.mxu0 %v995
    %1028 = vmatprep.subr.bf16.mxu0 0
    %1029 = vmatpush1.bf16.msra.mxu0 %v994
    %1030 = vmatprep.subr.bf16.mxu0 0
    %1031 = vmatpush1.bf16.msra.mxu0 %v993
    %1032 = vmatprep.subr.bf16.mxu0 0
    %1033 = vmatpush1.bf16.msra.mxu0 %v992
    %1034 = vmatprep.subr.bf16.mxu0 0
    %1035 = vmatpush1.bf16.msra.mxu0 %v991
    %1036 = vmatprep.subr.bf16.mxu0 0
    %1037 = vmatpush1.bf16.msra.mxu0 %v990
    %1038 = vmatprep.subr.bf16.mxu0 0
    %1039 = vmatpush2.bf16.msra.mxu0 %v1005
    %1040 = vmatprep.subr.bf16.mxu0 0
    %1041 = vmatpush2.bf16.msra.mxu0 %v1004
    %1042 = vmatprep.subr.bf16.mxu0 0
    %1043 = vmatpush2.bf16.msra.mxu0 %v1003
    %1044 = vmatprep.subr.bf16.mxu0 0
    %1045 = vmatpush2.bf16.msra.mxu0 %v1002
    %1046 = vmatprep.subr.bf16.mxu0 0
    %1047 = vmatpush2.bf16.msra.mxu0 %v1001
    %1048 = vmatprep.subr.bf16.mxu0 0
    %1049 = vmatpush2.bf16.msra.mxu0 %v1000
    %1050 = vmatprep.subr.bf16.mxu0 0
    %1051 = vmatpush2.bf16.msra.mxu0 %v999
    %1052 = vmatprep.subr.bf16.mxu0 0
    %1053 = vmatpush2.bf16.msra.mxu0 %v998
    %1054 = vmatprep.mubr.bf16.mxu0 %v923
    %1055 = vmatmul.mubr.bf16.gmra.mxu0 %v916
    %v1056 = vpop.f32.mrf.mxu0
    %v1057 = vadd.f32 0.0, %v1056
    %v1058 = vpop.f32.mrf.mxu0
    %v1059 = vpop.f32.mrf.mxu0
    %v1060 = vpop.f32.mrf.mxu0
    %1061 = vdwg.mxu0
    %v1062 = vadd.f32 %v876, %v1057
    %s1063 = scalar_lea.vmem %s4, 256
    %v1064 = vld [vmem:[%s1063] sm:$0xf]
    %v1065 = vld [vmem:[%s1063 + $0x4] sm:$0xf]
    %v1066 = vld [vmem:[%s1063 + $0x8] sm:$0xf]
    %v1067 = vld [vmem:[%s1063 + $0xc] sm:$0xf]
    %v1068 = vld [vmem:[%s1063 + $0x10] sm:$0xf]
    %v1069 = vld [vmem:[%s1063 + $0x14] sm:$0xf]
    %v1070 = vld [vmem:[%s1063 + $0x18] sm:$0xf]
    %v1071 = vld [vmem:[%s1063 + $0x1c] sm:$0xf]
    %v1072 = vld [vmem:[%s1063 + $0x20] sm:$0xf]
    %v1073 = vld [vmem:[%s1063 + $0x24] sm:$0xf]
    %v1074 = vld [vmem:[%s1063 + $0x28] sm:$0xf]
    %v1075 = vld [vmem:[%s1063 + $0x2c] sm:$0xf]
    %v1076 = vld [vmem:[%s1063 + $0x30] sm:$0xf]
    %v1077 = vld [vmem:[%s1063 + $0x34] sm:$0xf]
    %v1078 = vld [vmem:[%s1063 + $0x38] sm:$0xf]
    %v1079 = vld [vmem:[%s1063 + $0x3c] sm:$0xf]
    %v1080 = vld [vmem:[%s1063 + $0x40] sm:$0xf]
    %v1081 = vld [vmem:[%s1063 + $0x44] sm:$0xf]
    %v1082 = vld [vmem:[%s1063 + $0x48] sm:$0xf]
    %v1083 = vld [vmem:[%s1063 + $0x4c] sm:$0xf]
    %v1084 = vld [vmem:[%s1063 + $0x50] sm:$0xf]
    %v1085 = vld [vmem:[%s1063 + $0x54] sm:$0xf]
    %v1086 = vld [vmem:[%s1063 + $0x58] sm:$0xf]
    %v1087 = vld [vmem:[%s1063 + $0x5c] sm:$0xf]
    %v1088 = vld [vmem:[%s1063 + $0x60] sm:$0xf]
    %v1089 = vld [vmem:[%s1063 + $0x64] sm:$0xf]
    %v1090 = vld [vmem:[%s1063 + $0x68] sm:$0xf]
    %v1091 = vld [vmem:[%s1063 + $0x6c] sm:$0xf]
    %v1092 = vld [vmem:[%s1063 + $0x70] sm:$0xf]
    %v1093 = vld [vmem:[%s1063 + $0x74] sm:$0xf]
    %v1094 = vld [vmem:[%s1063 + $0x78] sm:$0xf]
    %v1095 = vld [vmem:[%s1063 + $0x7c] sm:$0xf]
    %v1098 = vrot.slane %v706, 1
    %v1099 = vrot.slane %v707, 1
    %v1134 = vunpack.c.l.b16 %v1064
    %v1135 = vunpack.c.l.b16 %v1065
    %v1136 = vunpack.c.l.b16 %v1066
    %v1137 = vunpack.c.l.b16 %v1067
    %v1138 = vunpack.c.l.b16 %v1068
    %v1139 = vunpack.c.l.b16 %v1069
    %v1140 = vunpack.c.l.b16 %v1070
    %v1141 = vunpack.c.l.b16 %v1071
    %v1142 = vunpack.c.l.b16 %v1072
    %v1143 = vunpack.c.l.b16 %v1073
    %v1144 = vunpack.c.l.b16 %v1074
    %v1145 = vunpack.c.l.b16 %v1075
    %v1146 = vunpack.c.l.b16 %v1076
    %v1147 = vunpack.c.l.b16 %v1077
    %v1148 = vunpack.c.l.b16 %v1078
    %v1149 = vunpack.c.l.b16 %v1079
    %v1150 = vunpack.c.l.b16 %v1080
    %v1151 = vunpack.c.l.b16 %v1081
    %v1152 = vunpack.c.l.b16 %v1082
    %v1153 = vunpack.c.l.b16 %v1083
    %v1154 = vunpack.c.l.b16 %v1084
    %v1155 = vunpack.c.l.b16 %v1085
    %v1156 = vunpack.c.l.b16 %v1086
    %v1157 = vunpack.c.l.b16 %v1087
    %v1158 = vunpack.c.l.b16 %v1088
    %v1159 = vunpack.c.l.b16 %v1089
    %v1160 = vunpack.c.l.b16 %v1090
    %v1161 = vunpack.c.l.b16 %v1091
    %v1162 = vunpack.c.l.b16 %v1092
    %v1163 = vunpack.c.l.b16 %v1093
    %v1164 = vunpack.c.l.b16 %v1094
    %v1165 = vunpack.c.l.b16 %v1095
    %v1166 = vpack.c.b16 %v1135, %v1134
    %v1167 = vpack.c.b16 %v1137, %v1136
    %v1168 = vpack.c.b16 %v1139, %v1138
    %v1169 = vpack.c.b16 %v1141, %v1140
    %v1170 = vpack.c.b16 %v1143, %v1142
    %v1171 = vpack.c.b16 %v1145, %v1144
    %v1172 = vpack.c.b16 %v1147, %v1146
    %v1173 = vpack.c.b16 %v1149, %v1148
    %v1174 = vpack.c.b16 %v1151, %v1150
    %v1175 = vpack.c.b16 %v1153, %v1152
    %v1176 = vpack.c.b16 %v1155, %v1154
    %v1177 = vpack.c.b16 %v1157, %v1156
    %v1178 = vpack.c.b16 %v1159, %v1158
    %v1179 = vpack.c.b16 %v1161, %v1160
    %v1180 = vpack.c.b16 %v1163, %v1162
    %v1181 = vpack.c.b16 %v1165, %v1164
    %1198 = vmatprep.subr.bf16.mxu0 0
    %1199 = vmatpush1.bf16.msra.mxu0 %v1173
    %1200 = vmatprep.subr.bf16.mxu0 0
    %1201 = vmatpush1.bf16.msra.mxu0 %v1172
    %1202 = vmatprep.subr.bf16.mxu0 0
    %1203 = vmatpush1.bf16.msra.mxu0 %v1171
    %1204 = vmatprep.subr.bf16.mxu0 0
    %1205 = vmatpush1.bf16.msra.mxu0 %v1170
    %1206 = vmatprep.subr.bf16.mxu0 0
    %1207 = vmatpush1.bf16.msra.mxu0 %v1169
    %1208 = vmatprep.subr.bf16.mxu0 0
    %1209 = vmatpush1.bf16.msra.mxu0 %v1168
    %1210 = vmatprep.subr.bf16.mxu0 0
    %1211 = vmatpush1.bf16.msra.mxu0 %v1167
    %1212 = vmatprep.subr.bf16.mxu0 0
    %1213 = vmatpush1.bf16.msra.mxu0 %v1166
    %1214 = vmatprep.subr.bf16.mxu0 0
    %1215 = vmatpush2.bf16.msra.mxu0 %v1181
    %1216 = vmatprep.subr.bf16.mxu0 0
    %1217 = vmatpush2.bf16.msra.mxu0 %v1180
    %1218 = vmatprep.subr.bf16.mxu0 0
    %1219 = vmatpush2.bf16.msra.mxu0 %v1179
    %1220 = vmatprep.subr.bf16.mxu0 0
    %1221 = vmatpush2.bf16.msra.mxu0 %v1178
    %1222 = vmatprep.subr.bf16.mxu0 0
    %1223 = vmatpush2.bf16.msra.mxu0 %v1177
    %1224 = vmatprep.subr.bf16.mxu0 0
    %1225 = vmatpush2.bf16.msra.mxu0 %v1176
    %1226 = vmatprep.subr.bf16.mxu0 0
    %1227 = vmatpush2.bf16.msra.mxu0 %v1175
    %1228 = vmatprep.subr.bf16.mxu0 0
    %1229 = vmatpush2.bf16.msra.mxu0 %v1174
    %1230 = vmatprep.mubr.bf16.mxu0 %v1099
    %1231 = vmatmul.mubr.bf16.gmra.mxu0 %v1098
    %v1232 = vpop.f32.mrf.mxu0
    %v1233 = vadd.f32 0.0, %v1232
    %v1234 = vpop.f32.mrf.mxu0
    %v1235 = vpop.f32.mrf.mxu0
    %v1236 = vpop.f32.mrf.mxu0
    %1237 = vdwg.mxu0
    %v1238 = vadd.f32 %v1062, %v1233
    %s1239 = scalar_lea.vmem %s4, 384
    %v1240 = vld [vmem:[%s1239] sm:$0xf]
    %v1241 = vld [vmem:[%s1239 + $0x4] sm:$0xf]
    %v1242 = vld [vmem:[%s1239 + $0x8] sm:$0xf]
    %v1243 = vld [vmem:[%s1239 + $0xc] sm:$0xf]
    %v1244 = vld [vmem:[%s1239 + $0x10] sm:$0xf]
    %v1245 = vld [vmem:[%s1239 + $0x14] sm:$0xf]
    %v1246 = vld [vmem:[%s1239 + $0x18] sm:$0xf]
    %v1247 = vld [vmem:[%s1239 + $0x1c] sm:$0xf]
    %v1248 = vld [vmem:[%s1239 + $0x20] sm:$0xf]
    %v1249 = vld [vmem:[%s1239 + $0x24] sm:$0xf]
    %v1250 = vld [vmem:[%s1239 + $0x28] sm:$0xf]
    %v1251 = vld [vmem:[%s1239 + $0x2c] sm:$0xf]
    %v1252 = vld [vmem:[%s1239 + $0x30] sm:$0xf]
    %v1253 = vld [vmem:[%s1239 + $0x34] sm:$0xf]
    %v1254 = vld [vmem:[%s1239 + $0x38] sm:$0xf]
    %v1255 = vld [vmem:[%s1239 + $0x3c] sm:$0xf]
    %v1256 = vld [vmem:[%s1239 + $0x40] sm:$0xf]
    %v1257 = vld [vmem:[%s1239 + $0x44] sm:$0xf]
    %v1258 = vld [vmem:[%s1239 + $0x48] sm:$0xf]
    %v1259 = vld [vmem:[%s1239 + $0x4c] sm:$0xf]
    %v1260 = vld [vmem:[%s1239 + $0x50] sm:$0xf]
    %v1261 = vld [vmem:[%s1239 + $0x54] sm:$0xf]
    %v1262 = vld [vmem:[%s1239 + $0x58] sm:$0xf]
    %v1263 = vld [vmem:[%s1239 + $0x5c] sm:$0xf]
    %v1264 = vld [vmem:[%s1239 + $0x60] sm:$0xf]
    %v1265 = vld [vmem:[%s1239 + $0x64] sm:$0xf]
    %v1266 = vld [vmem:[%s1239 + $0x68] sm:$0xf]
    %v1267 = vld [vmem:[%s1239 + $0x6c] sm:$0xf]
    %v1268 = vld [vmem:[%s1239 + $0x70] sm:$0xf]
    %v1269 = vld [vmem:[%s1239 + $0x74] sm:$0xf]
    %v1270 = vld [vmem:[%s1239 + $0x78] sm:$0xf]
    %v1271 = vld [vmem:[%s1239 + $0x7c] sm:$0xf]
    %v1272 = vrot.slane %v911, 1
    %v1273 = vrot.slane %v913, 2
    %v1274 = vor.u32 %v1272, %v1273
    %v1275 = vrot.slane %v918, 1
    %v1276 = vrot.slane %v920, 2
    %v1277 = vor.u32 %v1275, %v1276
    %v1312 = vunpack.c.l.b16 %v1240
    %v1313 = vunpack.c.l.b16 %v1241
    %v1314 = vunpack.c.l.b16 %v1242
    %v1315 = vunpack.c.l.b16 %v1243
    %v1316 = vunpack.c.l.b16 %v1244
    %v1317 = vunpack.c.l.b16 %v1245
    %v1318 = vunpack.c.l.b16 %v1246
    %v1319 = vunpack.c.l.b16 %v1247
    %v1320 = vunpack.c.l.b16 %v1248
    %v1321 = vunpack.c.l.b16 %v1249
    %v1322 = vunpack.c.l.b16 %v1250
    %v1323 = vunpack.c.l.b16 %v1251
    %v1324 = vunpack.c.l.b16 %v1252
    %v1325 = vunpack.c.l.b16 %v1253
    %v1326 = vunpack.c.l.b16 %v1254
    %v1327 = vunpack.c.l.b16 %v1255
    %v1328 = vunpack.c.l.b16 %v1256
    %v1329 = vunpack.c.l.b16 %v1257
    %v1330 = vunpack.c.l.b16 %v1258
    %v1331 = vunpack.c.l.b16 %v1259
    %v1332 = vunpack.c.l.b16 %v1260
    %v1333 = vunpack.c.l.b16 %v1261
    %v1334 = vunpack.c.l.b16 %v1262
    %v1335 = vunpack.c.l.b16 %v1263
    %v1336 = vunpack.c.l.b16 %v1264
    %v1337 = vunpack.c.l.b16 %v1265
    %v1338 = vunpack.c.l.b16 %v1266
    %v1339 = vunpack.c.l.b16 %v1267
    %v1340 = vunpack.c.l.b16 %v1268
    %v1341 = vunpack.c.l.b16 %v1269
    %v1342 = vunpack.c.l.b16 %v1270
    %v1343 = vunpack.c.l.b16 %v1271
    %v1344 = vpack.c.b16 %v1313, %v1312
    %v1345 = vpack.c.b16 %v1315, %v1314
    %v1346 = vpack.c.b16 %v1317, %v1316
    %v1347 = vpack.c.b16 %v1319, %v1318
    %v1348 = vpack.c.b16 %v1321, %v1320
    %v1349 = vpack.c.b16 %v1323, %v1322
    %v1350 = vpack.c.b16 %v1325, %v1324
    %v1351 = vpack.c.b16 %v1327, %v1326
    %v1352 = vpack.c.b16 %v1329, %v1328
    %v1353 = vpack.c.b16 %v1331, %v1330
    %v1354 = vpack.c.b16 %v1333, %v1332
    %v1355 = vpack.c.b16 %v1335, %v1334
    %v1356 = vpack.c.b16 %v1337, %v1336
    %v1357 = vpack.c.b16 %v1339, %v1338
    %v1358 = vpack.c.b16 %v1341, %v1340
    %v1359 = vpack.c.b16 %v1343, %v1342
    %1376 = vmatprep.subr.bf16.mxu0 0
    %1377 = vmatpush1.bf16.msra.mxu0 %v1351
    %1378 = vmatprep.subr.bf16.mxu0 0
    %1379 = vmatpush1.bf16.msra.mxu0 %v1350
    %1380 = vmatprep.subr.bf16.mxu0 0
    %1381 = vmatpush1.bf16.msra.mxu0 %v1349
    %1382 = vmatprep.subr.bf16.mxu0 0
    %1383 = vmatpush1.bf16.msra.mxu0 %v1348
    %1384 = vmatprep.subr.bf16.mxu0 0
    %1385 = vmatpush1.bf16.msra.mxu0 %v1347
    %1386 = vmatprep.subr.bf16.mxu0 0
    %1387 = vmatpush1.bf16.msra.mxu0 %v1346
    %1388 = vmatprep.subr.bf16.mxu0 0
    %1389 = vmatpush1.bf16.msra.mxu0 %v1345
    %1390 = vmatprep.subr.bf16.mxu0 0
    %1391 = vmatpush1.bf16.msra.mxu0 %v1344
    %1392 = vmatprep.subr.bf16.mxu0 0
    %1393 = vmatpush2.bf16.msra.mxu0 %v1359
    %1394 = vmatprep.subr.bf16.mxu0 0
    %1395 = vmatpush2.bf16.msra.mxu0 %v1358
    %1396 = vmatprep.subr.bf16.mxu0 0
    %1397 = vmatpush2.bf16.msra.mxu0 %v1357
    %1398 = vmatprep.subr.bf16.mxu0 0
    %1399 = vmatpush2.bf16.msra.mxu0 %v1356
    %1400 = vmatprep.subr.bf16.mxu0 0
    %1401 = vmatpush2.bf16.msra.mxu0 %v1355
    %1402 = vmatprep.subr.bf16.mxu0 0
    %1403 = vmatpush2.bf16.msra.mxu0 %v1354
    %1404 = vmatprep.subr.bf16.mxu0 0
    %1405 = vmatpush2.bf16.msra.mxu0 %v1353
    %1406 = vmatprep.subr.bf16.mxu0 0
    %1407 = vmatpush2.bf16.msra.mxu0 %v1352
    %1408 = vmatprep.mubr.bf16.mxu0 %v1277
    %1409 = vmatmul.mubr.bf16.gmra.mxu0 %v1274
    %v1410 = vpop.f32.mrf.mxu0
    %v1411 = vadd.f32 0.0, %v1410
    %v1412 = vpop.f32.mrf.mxu0
    %v1413 = vpop.f32.mrf.mxu0
    %v1414 = vpop.f32.mrf.mxu0
    %1415 = vdwg.mxu0
    %v1416 = vadd.f32 %v1238, %v1411
    %s1417 = scalar_lea.vmem %s4, 512
    %v1418 = vld [vmem:[%s1417] sm:$0xf]
    %v1419 = vld [vmem:[%s1417 + $0x4] sm:$0xf]
    %v1420 = vld [vmem:[%s1417 + $0x8] sm:$0xf]
    %v1421 = vld [vmem:[%s1417 + $0xc] sm:$0xf]
    %v1422 = vld [vmem:[%s1417 + $0x10] sm:$0xf]
    %v1423 = vld [vmem:[%s1417 + $0x14] sm:$0xf]
    %v1424 = vld [vmem:[%s1417 + $0x18] sm:$0xf]
    %v1425 = vld [vmem:[%s1417 + $0x1c] sm:$0xf]
    %v1426 = vld [vmem:[%s1417 + $0x20] sm:$0xf]
    %v1427 = vld [vmem:[%s1417 + $0x24] sm:$0xf]
    %v1428 = vld [vmem:[%s1417 + $0x28] sm:$0xf]
    %v1429 = vld [vmem:[%s1417 + $0x2c] sm:$0xf]
    %v1430 = vld [vmem:[%s1417 + $0x30] sm:$0xf]
    %v1431 = vld [vmem:[%s1417 + $0x34] sm:$0xf]
    %v1432 = vld [vmem:[%s1417 + $0x38] sm:$0xf]
    %v1433 = vld [vmem:[%s1417 + $0x3c] sm:$0xf]
    %v1434 = vld [vmem:[%s1417 + $0x40] sm:$0xf]
    %v1435 = vld [vmem:[%s1417 + $0x44] sm:$0xf]
    %v1436 = vld [vmem:[%s1417 + $0x48] sm:$0xf]
    %v1437 = vld [vmem:[%s1417 + $0x4c] sm:$0xf]
    %v1438 = vld [vmem:[%s1417 + $0x50] sm:$0xf]
    %v1439 = vld [vmem:[%s1417 + $0x54] sm:$0xf]
    %v1440 = vld [vmem:[%s1417 + $0x58] sm:$0xf]
    %v1441 = vld [vmem:[%s1417 + $0x5c] sm:$0xf]
    %v1442 = vld [vmem:[%s1417 + $0x60] sm:$0xf]
    %v1443 = vld [vmem:[%s1417 + $0x64] sm:$0xf]
    %v1444 = vld [vmem:[%s1417 + $0x68] sm:$0xf]
    %v1445 = vld [vmem:[%s1417 + $0x6c] sm:$0xf]
    %v1446 = vld [vmem:[%s1417 + $0x70] sm:$0xf]
    %v1447 = vld [vmem:[%s1417 + $0x74] sm:$0xf]
    %v1448 = vld [vmem:[%s1417 + $0x78] sm:$0xf]
    %v1449 = vld [vmem:[%s1417 + $0x7c] sm:$0xf]
    %v1450 = vrot.slane %v706, 2
    %v1451 = vrot.slane %v707, 2
    %v1486 = vunpack.c.l.b16 %v1418
    %v1487 = vunpack.c.l.b16 %v1419
    %v1488 = vunpack.c.l.b16 %v1420
    %v1489 = vunpack.c.l.b16 %v1421
    %v1490 = vunpack.c.l.b16 %v1422
    %v1491 = vunpack.c.l.b16 %v1423
    %v1492 = vunpack.c.l.b16 %v1424
    %v1493 = vunpack.c.l.b16 %v1425
    %v1494 = vunpack.c.l.b16 %v1426
    %v1495 = vunpack.c.l.b16 %v1427
    %v1496 = vunpack.c.l.b16 %v1428
    %v1497 = vunpack.c.l.b16 %v1429
    %v1498 = vunpack.c.l.b16 %v1430
    %v1499 = vunpack.c.l.b16 %v1431
    %v1500 = vunpack.c.l.b16 %v1432
    %v1501 = vunpack.c.l.b16 %v1433
    %v1502 = vunpack.c.l.b16 %v1434
    %v1503 = vunpack.c.l.b16 %v1435
    %v1504 = vunpack.c.l.b16 %v1436
    %v1505 = vunpack.c.l.b16 %v1437
    %v1506 = vunpack.c.l.b16 %v1438
    %v1507 = vunpack.c.l.b16 %v1439
    %v1508 = vunpack.c.l.b16 %v1440
    %v1509 = vunpack.c.l.b16 %v1441
    %v1510 = vunpack.c.l.b16 %v1442
    %v1511 = vunpack.c.l.b16 %v1443
    %v1512 = vunpack.c.l.b16 %v1444
    %v1513 = vunpack.c.l.b16 %v1445
    %v1514 = vunpack.c.l.b16 %v1446
    %v1515 = vunpack.c.l.b16 %v1447
    %v1516 = vunpack.c.l.b16 %v1448
    %v1517 = vunpack.c.l.b16 %v1449
    %v1518 = vpack.c.b16 %v1487, %v1486
    %v1519 = vpack.c.b16 %v1489, %v1488
    %v1520 = vpack.c.b16 %v1491, %v1490
    %v1521 = vpack.c.b16 %v1493, %v1492
    %v1522 = vpack.c.b16 %v1495, %v1494
    %v1523 = vpack.c.b16 %v1497, %v1496
    %v1524 = vpack.c.b16 %v1499, %v1498
    %v1525 = vpack.c.b16 %v1501, %v1500
    %v1526 = vpack.c.b16 %v1503, %v1502
    %v1527 = vpack.c.b16 %v1505, %v1504
    %v1528 = vpack.c.b16 %v1507, %v1506
    %v1529 = vpack.c.b16 %v1509, %v1508
    %v1530 = vpack.c.b16 %v1511, %v1510
    %v1531 = vpack.c.b16 %v1513, %v1512
    %v1532 = vpack.c.b16 %v1515, %v1514
    %v1533 = vpack.c.b16 %v1517, %v1516
    %1550 = vmatprep.subr.bf16.mxu0 0
    %1551 = vmatpush1.bf16.msra.mxu0 %v1525
    %1552 = vmatprep.subr.bf16.mxu0 0
    %1553 = vmatpush1.bf16.msra.mxu0 %v1524
    %1554 = vmatprep.subr.bf16.mxu0 0
    %1555 = vmatpush1.bf16.msra.mxu0 %v1523
    %1556 = vmatprep.subr.bf16.mxu0 0
    %1557 = vmatpush1.bf16.msra.mxu0 %v1522
    %1558 = vmatprep.subr.bf16.mxu0 0
    %1559 = vmatpush1.bf16.msra.mxu0 %v1521
    %1560 = vmatprep.subr.bf16.mxu0 0
    %1561 = vmatpush1.bf16.msra.mxu0 %v1520
    %1562 = vmatprep.subr.bf16.mxu0 0
    %1563 = vmatpush1.bf16.msra.mxu0 %v1519
    %1564 = vmatprep.subr.bf16.mxu0 0
    %1565 = vmatpush1.bf16.msra.mxu0 %v1518
    %1566 = vmatprep.subr.bf16.mxu0 0
    %1567 = vmatpush2.bf16.msra.mxu0 %v1533
    %1568 = vmatprep.subr.bf16.mxu0 0
    %1569 = vmatpush2.bf16.msra.mxu0 %v1532
    %1570 = vmatprep.subr.bf16.mxu0 0
    %1571 = vmatpush2.bf16.msra.mxu0 %v1531
    %1572 = vmatprep.subr.bf16.mxu0 0
    %1573 = vmatpush2.bf16.msra.mxu0 %v1530
    %1574 = vmatprep.subr.bf16.mxu0 0
    %1575 = vmatpush2.bf16.msra.mxu0 %v1529
    %1576 = vmatprep.subr.bf16.mxu0 0
    %1577 = vmatpush2.bf16.msra.mxu0 %v1528
    %1578 = vmatprep.subr.bf16.mxu0 0
    %1579 = vmatpush2.bf16.msra.mxu0 %v1527
    %1580 = vmatprep.subr.bf16.mxu0 0
    %1581 = vmatpush2.bf16.msra.mxu0 %v1526
    %1582 = vmatprep.mubr.bf16.mxu0 %v1451
    %1583 = vmatmul.mubr.bf16.gmra.mxu0 %v1450
    %v1584 = vpop.f32.mrf.mxu0
    %v1585 = vadd.f32 0.0, %v1584
    %v1586 = vpop.f32.mrf.mxu0
    %v1587 = vpop.f32.mrf.mxu0
    %v1588 = vpop.f32.mrf.mxu0
    %1589 = vdwg.mxu0
    %v1590 = vadd.f32 %v1416, %v1585
    %v1591 = vmax.f32 %v1590, 0.0
    %v1592 = vrot.slane %v1591, 1
    %v1593 = vmax.f32 %v1591, %v1592
    %1594 = vrot.lane.b32.xlu0 %v1593, 127
    %v1595 = vpop.permute.xlu0 %1594
    %v1596 = vmax.f32 %v1593, %v1595
    %v1597 = vpack.c.bf16 %v1596, %v1596
    %vm1598 = vcmask 64512
    %v1600 = vsel %vm1598, %v81, 0
    %v1603 = vsel %vm656, %v1597, 0
    %1605 = vmatprep.subr.bf16.mxu0 0
    %1606 = vmatpush1.bf16.msra.mxu0 0
    %1607 = vmatprep.subr.bf16.mxu0 0
    %1608 = vmatpush1.bf16.msra.mxu0 0
    %1609 = vmatprep.subr.bf16.mxu0 0
    %1610 = vmatpush1.bf16.msra.mxu0 0
    %1611 = vmatprep.subr.bf16.mxu0 0
    %1612 = vmatpush1.bf16.msra.mxu0 0
    %1613 = vmatprep.subr.bf16.mxu0 0
    %1614 = vmatpush1.bf16.msra.mxu0 0
    %1615 = vmatprep.subr.bf16.mxu0 0
    %1616 = vmatpush1.bf16.msra.mxu0 0
    %1617 = vmatprep.subr.bf16.mxu0 0
    %1618 = vmatpush1.bf16.msra.mxu0 0
    %1619 = vmatprep.subr.bf16.mxu0 0
    %1620 = vmatpush1.bf16.msra.mxu0 %v1603
    %1621 = vmatprep.subr.bf16.mxu0 0
    %1622 = vmatpush2.bf16.msra.mxu0 0
    %1623 = vmatprep.subr.bf16.mxu0 0
    %1624 = vmatpush2.bf16.msra.mxu0 0
    %1625 = vmatprep.subr.bf16.mxu0 0
    %1626 = vmatpush2.bf16.msra.mxu0 0
    %1627 = vmatprep.subr.bf16.mxu0 0
    %1628 = vmatpush2.bf16.msra.mxu0 0
    %1629 = vmatprep.subr.bf16.mxu0 0
    %1630 = vmatpush2.bf16.msra.mxu0 0
    %1631 = vmatprep.subr.bf16.mxu0 0
    %1632 = vmatpush2.bf16.msra.mxu0 0
    %1633 = vmatprep.subr.bf16.mxu0 0
    %1634 = vmatpush2.bf16.msra.mxu0 0
    %1635 = vmatprep.subr.bf16.mxu0 0
    %1636 = vmatpush2.bf16.msra.mxu0 0
    %1637 = vmatprep.mubr.bf16.mxu0 0
    %1638 = vmatmul.mubr.bf16.gmra.mxu0 %v1600
    %v1639 = vpop.f32.mrf.mxu0
    %v1640 = vadd.f32 0.0, %v1639
    %v1641 = vpop.f32.mrf.mxu0
    %v1642 = vpop.f32.mrf.mxu0
    %v1643 = vpop.f32.mrf.mxu0
    %1644 = vdwg.mxu0
    %s1645 = scalar_lea.vmem %s0, 16
    %v1646 = vld [vmem:[%s1645] sm:$0xf]
    %v1647 = vld [vmem:[%s1645 + $0x4] sm:$0xf]
    %v1648 = vld [vmem:[%s1645 + $0x8] sm:$0xf]
    %v1649 = vld [vmem:[%s1645 + $0xc] sm:$0x3]
    %v1653 = vunpack.c.l.b16 %v1646
    %v1654 = vunpack.c.l.b16 %v1647
    %v1655 = vunpack.c.l.b16 %v1648
    %v1656 = vpack.c.b16 %v1654, %v1653
    %v1657 = vpack.c.b16 %v1655, %v1655
    %v1659 = vsel %vm116, %v1656, 0
    %v1662 = vsel %vm116, %v1657, 0
    %1664 = vmatprep.subr.bf16.mxu0 0
    %1665 = vmatpush1.bf16.msra.mxu0 0
    %1666 = vmatprep.subr.bf16.mxu0 0
    %1667 = vmatpush1.bf16.msra.mxu0 0
    %1668 = vmatprep.subr.bf16.mxu0 0
    %1669 = vmatpush1.bf16.msra.mxu0 0
    %1670 = vmatprep.subr.bf16.mxu0 0
    %1671 = vmatpush1.bf16.msra.mxu0 0
    %1672 = vmatprep.subr.bf16.mxu0 0
    %1673 = vmatpush1.bf16.msra.mxu0 0
    %1674 = vmatprep.subr.bf16.mxu0 0
    %1675 = vmatpush1.bf16.msra.mxu0 0
    %1676 = vmatprep.subr.bf16.mxu0 %v128
    %1677 = vmatpush1.bf16.msra.mxu0 %v125
    %1678 = vmatprep.subr.bf16.mxu0 %v111
    %1679 = vmatpush1.bf16.msra.mxu0 %v110
    %1680 = vmatprep.subr.bf16.mxu0 0
    %1681 = vmatpush2.bf16.msra.mxu0 0
    %1682 = vmatprep.subr.bf16.mxu0 0
    %1683 = vmatpush2.bf16.msra.mxu0 0
    %1684 = vmatprep.subr.bf16.mxu0 0
    %1685 = vmatpush2.bf16.msra.mxu0 0
    %1686 = vmatprep.subr.bf16.mxu0 0
    %1687 = vmatpush2.bf16.msra.mxu0 0
    %1688 = vmatprep.subr.bf16.mxu0 0
    %1689 = vmatpush2.bf16.msra.mxu0 0
    %1690 = vmatprep.subr.bf16.mxu0 0
    %1691 = vmatpush2.bf16.msra.mxu0 0
    %1692 = vmatprep.subr.bf16.mxu0 0
    %1693 = vmatpush2.bf16.msra.mxu0 0
    %1694 = vmatprep.subr.bf16.mxu0 0
    %1695 = vmatpush2.bf16.msra.mxu0 0
    %1696 = vmatprep.mubr.bf16.mxu0 0
    %1697 = vmatmul.mubr.bf16.gmra.mxu0 %v1659
    %v1698 = vpop.f32.mrf.mxu0
    %v1699 = vadd.f32 0.0, %v1698
    %v1700 = vpop.f32.mrf.mxu0
    %v1701 = vadd.f32 0.0, %v1700
    %v1702 = vpop.f32.mrf.mxu0
    %v1703 = vadd.f32 0.0, %v1702
    %v1704 = vpop.f32.mrf.mxu0
    %v1705 = vadd.f32 0.0, %v1704
    %1706 = vmatprep.mubr.bf16.mxu0 0
    %1707 = vmatmul.mubr.bf16.gmra.mxu0 %v1662
    %v1708 = vpop.f32.mrf.mxu0
    %v1709 = vadd.f32 0.0, %v1708
    %v1710 = vpop.f32.mrf.mxu0
    %v1711 = vadd.f32 0.0, %v1710
    %v1712 = vpop.f32.mrf.mxu0
    %v1713 = vpop.f32.mrf.mxu0
    %1714 = vdwg.mxu0
    %v1715 = vadd.f32 %v65, %v1699
    %v1716 = vadd.f32 %v69, %v1701
    %v1717 = vadd.f32 %v65, %v1703
    %v1718 = vadd.f32 %v69, %v1705
    %v1719 = vadd.f32 %v65, %v1709
    %v1720 = vadd.f32 %v69, %v1711
    %v1722 = vunpack.c.l.b16 %v1649
    %v1723 = vpack.c.b16 %v1722, %v1655
    %v1724 = vshrl.u32 %v1656, 16
    %v1726 = vshll.u32 %v1656, 16
    %v1728 = vrot.slane %v1726, 1
    %v1729 = vor.u32 %v1724, %v1728
    %v1731 = vshll.u32 %v1723, 16
    %v1733 = vrot.slane %v1731, 1
    %v1734 = vsel %vm195, %v1729, %v1733
    %v1735 = vshrl.u32 %v1723, 16
    %v1737 = vor.u32 %v1735, %v1733
    %v1739 = vsel %vm116, %v1734, 0
    %v1742 = vsel %vm116, %v1737, 0
    %1744 = vmatprep.subr.bf16.mxu0 0
    %1745 = vmatpush1.bf16.msra.mxu0 0
    %1746 = vmatprep.subr.bf16.mxu0 0
    %1747 = vmatpush1.bf16.msra.mxu0 0
    %1748 = vmatprep.subr.bf16.mxu0 0
    %1749 = vmatpush1.bf16.msra.mxu0 0
    %1750 = vmatprep.subr.bf16.mxu0 0
    %1751 = vmatpush1.bf16.msra.mxu0 0
    %1752 = vmatprep.subr.bf16.mxu0 0
    %1753 = vmatpush1.bf16.msra.mxu0 0
    %1754 = vmatprep.subr.bf16.mxu0 0
    %1755 = vmatpush1.bf16.msra.mxu0 0
    %1756 = vmatprep.subr.bf16.mxu0 %v238
    %1757 = vmatpush1.bf16.msra.mxu0 %v235
    %1758 = vmatprep.subr.bf16.mxu0 %v223
    %1759 = vmatpush1.bf16.msra.mxu0 %v222
    %1760 = vmatprep.subr.bf16.mxu0 0
    %1761 = vmatpush2.bf16.msra.mxu0 0
    %1762 = vmatprep.subr.bf16.mxu0 0
    %1763 = vmatpush2.bf16.msra.mxu0 0
    %1764 = vmatprep.subr.bf16.mxu0 0
    %1765 = vmatpush2.bf16.msra.mxu0 0
    %1766 = vmatprep.subr.bf16.mxu0 0
    %1767 = vmatpush2.bf16.msra.mxu0 0
    %1768 = vmatprep.subr.bf16.mxu0 0
    %1769 = vmatpush2.bf16.msra.mxu0 0
    %1770 = vmatprep.subr.bf16.mxu0 0
    %1771 = vmatpush2.bf16.msra.mxu0 0
    %1772 = vmatprep.subr.bf16.mxu0 0
    %1773 = vmatpush2.bf16.msra.mxu0 0
    %1774 = vmatprep.subr.bf16.mxu0 0
    %1775 = vmatpush2.bf16.msra.mxu0 0
    %1776 = vmatprep.mubr.bf16.mxu0 0
    %1777 = vmatmul.mubr.bf16.gmra.mxu0 %v1739
    %v1778 = vpop.f32.mrf.mxu0
    %v1779 = vadd.f32 0.0, %v1778
    %v1780 = vpop.f32.mrf.mxu0
    %v1781 = vadd.f32 0.0, %v1780
    %v1782 = vpop.f32.mrf.mxu0
    %v1783 = vadd.f32 0.0, %v1782
    %v1784 = vpop.f32.mrf.mxu0
    %v1785 = vadd.f32 0.0, %v1784
    %1786 = vmatprep.mubr.bf16.mxu0 0
    %1787 = vmatmul.mubr.bf16.gmra.mxu0 %v1742
    %v1788 = vpop.f32.mrf.mxu0
    %v1789 = vadd.f32 0.0, %v1788
    %v1790 = vpop.f32.mrf.mxu0
    %v1791 = vadd.f32 0.0, %v1790
    %v1792 = vpop.f32.mrf.mxu0
    %v1793 = vpop.f32.mrf.mxu0
    %1794 = vdwg.mxu0
    %v1795 = vadd.f32 %v1715, %v1779
    %v1796 = vadd.f32 %v1716, %v1781
    %v1797 = vadd.f32 %v1717, %v1783
    %v1798 = vadd.f32 %v1718, %v1785
    %v1799 = vadd.f32 %v1719, %v1789
    %v1800 = vadd.f32 %v1720, %v1791
    %v1801 = vrot.slane %v1656, 1
    %v1802 = vrot.slane %v1723, 1
    %v1803 = vsel %vm302, %v1801, %v1802
    %v1805 = vsel %vm116, %v1803, 0
    %v1808 = vsel %vm116, %v1802, 0
    %1810 = vmatprep.subr.bf16.mxu0 0
    %1811 = vmatpush1.bf16.msra.mxu0 0
    %1812 = vmatprep.subr.bf16.mxu0 0
    %1813 = vmatpush1.bf16.msra.mxu0 0
    %1814 = vmatprep.subr.bf16.mxu0 0
    %1815 = vmatpush1.bf16.msra.mxu0 0
    %1816 = vmatprep.subr.bf16.mxu0 0
    %1817 = vmatpush1.bf16.msra.mxu0 0
    %1818 = vmatprep.subr.bf16.mxu0 0
    %1819 = vmatpush1.bf16.msra.mxu0 0
    %1820 = vmatprep.subr.bf16.mxu0 0
    %1821 = vmatpush1.bf16.msra.mxu0 0
    %1822 = vmatprep.subr.bf16.mxu0 %v334
    %1823 = vmatpush1.bf16.msra.mxu0 %v331
    %1824 = vmatprep.subr.bf16.mxu0 %v319
    %1825 = vmatpush1.bf16.msra.mxu0 %v318
    %1826 = vmatprep.subr.bf16.mxu0 0
    %1827 = vmatpush2.bf16.msra.mxu0 0
    %1828 = vmatprep.subr.bf16.mxu0 0
    %1829 = vmatpush2.bf16.msra.mxu0 0
    %1830 = vmatprep.subr.bf16.mxu0 0
    %1831 = vmatpush2.bf16.msra.mxu0 0
    %1832 = vmatprep.subr.bf16.mxu0 0
    %1833 = vmatpush2.bf16.msra.mxu0 0
    %1834 = vmatprep.subr.bf16.mxu0 0
    %1835 = vmatpush2.bf16.msra.mxu0 0
    %1836 = vmatprep.subr.bf16.mxu0 0
    %1837 = vmatpush2.bf16.msra.mxu0 0
    %1838 = vmatprep.subr.bf16.mxu0 0
    %1839 = vmatpush2.bf16.msra.mxu0 0
    %1840 = vmatprep.subr.bf16.mxu0 0
    %1841 = vmatpush2.bf16.msra.mxu0 0
    %1842 = vmatprep.mubr.bf16.mxu0 0
    %1843 = vmatmul.mubr.bf16.gmra.mxu0 %v1805
    %v1844 = vpop.f32.mrf.mxu0
    %v1845 = vadd.f32 0.0, %v1844
    %v1846 = vpop.f32.mrf.mxu0
    %v1847 = vadd.f32 0.0, %v1846
    %v1848 = vpop.f32.mrf.mxu0
    %v1849 = vadd.f32 0.0, %v1848
    %v1850 = vpop.f32.mrf.mxu0
    %v1851 = vadd.f32 0.0, %v1850
    %1852 = vmatprep.mubr.bf16.mxu0 0
    %1853 = vmatmul.mubr.bf16.gmra.mxu0 %v1808
    %v1854 = vpop.f32.mrf.mxu0
    %v1855 = vadd.f32 0.0, %v1854
    %v1856 = vpop.f32.mrf.mxu0
    %v1857 = vadd.f32 0.0, %v1856
    %v1858 = vpop.f32.mrf.mxu0
    %v1859 = vpop.f32.mrf.mxu0
    %1860 = vdwg.mxu0
    %v1861 = vadd.f32 %v1795, %v1845
    %v1862 = vadd.f32 %v1796, %v1847
    %v1863 = vadd.f32 %v1797, %v1849
    %v1864 = vadd.f32 %v1798, %v1851
    %v1865 = vadd.f32 %v1799, %v1855
    %v1866 = vadd.f32 %v1800, %v1857
    %v1867 = vrot.slane %v1724, 1
    %v1868 = vrot.slane %v1726, 2
    %v1869 = vor.u32 %v1867, %v1868
    %v1870 = vrot.slane %v1735, 1
    %v1871 = vrot.slane %v1731, 2
    %v1872 = vor.u32 %v1870, %v1871
    %v1873 = vsel %vm398, %v1869, %v1872
    %v1875 = vsel %vm116, %v1873, 0
    %v1878 = vsel %vm116, %v1872, 0
    %1880 = vmatprep.subr.bf16.mxu0 0
    %1881 = vmatpush1.bf16.msra.mxu0 0
    %1882 = vmatprep.subr.bf16.mxu0 0
    %1883 = vmatpush1.bf16.msra.mxu0 0
    %1884 = vmatprep.subr.bf16.mxu0 0
    %1885 = vmatpush1.bf16.msra.mxu0 0
    %1886 = vmatprep.subr.bf16.mxu0 0
    %1887 = vmatpush1.bf16.msra.mxu0 0
    %1888 = vmatprep.subr.bf16.mxu0 0
    %1889 = vmatpush1.bf16.msra.mxu0 0
    %1890 = vmatprep.subr.bf16.mxu0 0
    %1891 = vmatpush1.bf16.msra.mxu0 0
    %1892 = vmatprep.subr.bf16.mxu0 %v434
    %1893 = vmatpush1.bf16.msra.mxu0 %v431
    %1894 = vmatprep.subr.bf16.mxu0 %v419
    %1895 = vmatpush1.bf16.msra.mxu0 %v418
    %1896 = vmatprep.subr.bf16.mxu0 0
    %1897 = vmatpush2.bf16.msra.mxu0 0
    %1898 = vmatprep.subr.bf16.mxu0 0
    %1899 = vmatpush2.bf16.msra.mxu0 0
    %1900 = vmatprep.subr.bf16.mxu0 0
    %1901 = vmatpush2.bf16.msra.mxu0 0
    %1902 = vmatprep.subr.bf16.mxu0 0
    %1903 = vmatpush2.bf16.msra.mxu0 0
    %1904 = vmatprep.subr.bf16.mxu0 0
    %1905 = vmatpush2.bf16.msra.mxu0 0
    %1906 = vmatprep.subr.bf16.mxu0 0
    %1907 = vmatpush2.bf16.msra.mxu0 0
    %1908 = vmatprep.subr.bf16.mxu0 0
    %1909 = vmatpush2.bf16.msra.mxu0 0
    %1910 = vmatprep.subr.bf16.mxu0 0
    %1911 = vmatpush2.bf16.msra.mxu0 0
    %1912 = vmatprep.mubr.bf16.mxu0 0
    %1913 = vmatmul.mubr.bf16.gmra.mxu0 %v1875
    %v1914 = vpop.f32.mrf.mxu0
    %v1915 = vadd.f32 0.0, %v1914
    %v1916 = vpop.f32.mrf.mxu0
    %v1917 = vadd.f32 0.0, %v1916
    %v1918 = vpop.f32.mrf.mxu0
    %v1919 = vadd.f32 0.0, %v1918
    %v1920 = vpop.f32.mrf.mxu0
    %v1921 = vadd.f32 0.0, %v1920
    %1922 = vmatprep.mubr.bf16.mxu0 0
    %1923 = vmatmul.mubr.bf16.gmra.mxu0 %v1878
    %v1924 = vpop.f32.mrf.mxu0
    %v1925 = vadd.f32 0.0, %v1924
    %v1926 = vpop.f32.mrf.mxu0
    %v1927 = vadd.f32 0.0, %v1926
    %v1928 = vpop.f32.mrf.mxu0
    %v1929 = vpop.f32.mrf.mxu0
    %1930 = vdwg.mxu0
    %v1931 = vadd.f32 %v1861, %v1915
    %v1932 = vadd.f32 %v1862, %v1917
    %v1933 = vadd.f32 %v1863, %v1919
    %v1934 = vadd.f32 %v1864, %v1921
    %v1935 = vadd.f32 %v1865, %v1925
    %v1936 = vadd.f32 %v1866, %v1927
    %v1937 = vrot.slane %v1656, 2
    %v1938 = vrot.slane %v1723, 2
    %v1939 = vsel %vm498, %v1937, %v1938
    %v1941 = vsel %vm116, %v1939, 0
    %v1944 = vsel %vm116, %v1938, 0
    %1946 = vmatprep.subr.bf16.mxu0 0
    %1947 = vmatpush1.bf16.msra.mxu0 0
    %1948 = vmatprep.subr.bf16.mxu0 0
    %1949 = vmatpush1.bf16.msra.mxu0 0
    %1950 = vmatprep.subr.bf16.mxu0 0
    %1951 = vmatpush1.bf16.msra.mxu0 0
    %1952 = vmatprep.subr.bf16.mxu0 0
    %1953 = vmatpush1.bf16.msra.mxu0 0
    %1954 = vmatprep.subr.bf16.mxu0 0
    %1955 = vmatpush1.bf16.msra.mxu0 0
    %1956 = vmatprep.subr.bf16.mxu0 0
    %1957 = vmatpush1.bf16.msra.mxu0 0
    %1958 = vmatprep.subr.bf16.mxu0 %v530
    %1959 = vmatpush1.bf16.msra.mxu0 %v527
    %1960 = vmatprep.subr.bf16.mxu0 %v515
    %1961 = vmatpush1.bf16.msra.mxu0 %v514
    %1962 = vmatprep.subr.bf16.mxu0 0
    %1963 = vmatpush2.bf16.msra.mxu0 0
    %1964 = vmatprep.subr.bf16.mxu0 0
    %1965 = vmatpush2.bf16.msra.mxu0 0
    %1966 = vmatprep.subr.bf16.mxu0 0
    %1967 = vmatpush2.bf16.msra.mxu0 0
    %1968 = vmatprep.subr.bf16.mxu0 0
    %1969 = vmatpush2.bf16.msra.mxu0 0
    %1970 = vmatprep.subr.bf16.mxu0 0
    %1971 = vmatpush2.bf16.msra.mxu0 0
    %1972 = vmatprep.subr.bf16.mxu0 0
    %1973 = vmatpush2.bf16.msra.mxu0 0
    %1974 = vmatprep.subr.bf16.mxu0 0
    %1975 = vmatpush2.bf16.msra.mxu0 0
    %1976 = vmatprep.subr.bf16.mxu0 0
    %1977 = vmatpush2.bf16.msra.mxu0 0
    %1978 = vmatprep.mubr.bf16.mxu0 0
    %1979 = vmatmul.mubr.bf16.gmra.mxu0 %v1941
    %v1980 = vpop.f32.mrf.mxu0
    %v1981 = vadd.f32 0.0, %v1980
    %v1982 = vpop.f32.mrf.mxu0
    %v1983 = vadd.f32 0.0, %v1982
    %v1984 = vpop.f32.mrf.mxu0
    %v1985 = vadd.f32 0.0, %v1984
    %v1986 = vpop.f32.mrf.mxu0
    %v1987 = vadd.f32 0.0, %v1986
    %1988 = vmatprep.mubr.bf16.mxu0 0
    %1989 = vmatmul.mubr.bf16.gmra.mxu0 %v1944
    %v1990 = vpop.f32.mrf.mxu0
    %v1991 = vadd.f32 0.0, %v1990
    %v1992 = vpop.f32.mrf.mxu0
    %v1993 = vadd.f32 0.0, %v1992
    %v1994 = vpop.f32.mrf.mxu0
    %v1995 = vpop.f32.mrf.mxu0
    %1996 = vdwg.mxu0
    %v1997 = vadd.f32 %v1931, %v1981
    %v1998 = vadd.f32 %v1932, %v1983
    %v1999 = vadd.f32 %v1933, %v1985
    %v2000 = vadd.f32 %v1934, %v1987
    %v2001 = vadd.f32 %v1935, %v1991
    %v2002 = vadd.f32 %v1936, %v1993
    %v2003 = vmax.f32 %v1997, 0.0
    %v2004 = vmax.f32 %v1998, 0.0
    %v2005 = vmax.f32 %v1999, 0.0
    %v2006 = vmax.f32 %v2000, 0.0
    %v2007 = vmax.f32 %v2001, 0.0
    %v2008 = vmax.f32 %v2002, 0.0
    %v2009 = vrot.slane %v2003, 1
    %v2010 = vrot.slane %v2004, 1
    %v2011 = vrot.slane %v2005, 1
    %v2012 = vrot.slane %v2006, 1
    %v2013 = vrot.slane %v2007, 1
    %v2014 = vrot.slane %v2008, 1
    %v2015 = vsel %vm603, %v2011, %v2013
    %v2016 = vsel %vm603, %v2012, %v2014
    %v2017 = vsel %vm603, %v2009, %v2011
    %v2018 = vsel %vm603, %v2010, %v2012
    %v2019 = vsel %vm603, %v2013, %v2009
    %v2020 = vsel %vm603, %v2014, %v2010
    %v2021 = vmax.f32 %v2003, %v2017
    %v2022 = vmax.f32 %v2004, %v2018
    %v2023 = vmax.f32 %v2005, %v2015
    %v2024 = vmax.f32 %v2006, %v2016
    %v2025 = vmax.f32 %v2007, %v2019
    %v2026 = vmax.f32 %v2008, %v2020
    %2027 = vrot.lane.b32.xlu0 %v2021, 127
    %v2028 = vpop.permute.xlu0 %2027
    %2029 = vrot.lane.b32.xlu0 %v2023, 127
    %v2030 = vpop.permute.xlu0 %2029
    %2031 = vrot.lane.b32.xlu0 %v2025, 127
    %v2032 = vpop.permute.xlu0 %2031
    %2033 = vrot.lane.b32.xlu0 %v2022, 127
    %v2034 = vpop.permute.xlu0 %2033
    %2035 = vrot.lane.b32.xlu0 %v2024, 127
    %v2036 = vpop.permute.xlu0 %2035
    %2037 = vrot.lane.b32.xlu0 %v2026, 127
    %v2038 = vpop.permute.xlu0 %2037
    %v2039 = vsel %vm630, %v2028, %v2034
    %v2040 = vsel %vm630, %v2030, %v2036
    %v2041 = vsel %vm630, %v2032, %v2038
    %v2042 = vsel %vm630, %v2034, %v2028
    %v2043 = vsel %vm630, %v2036, %v2030
    %v2044 = vsel %vm630, %v2038, %v2032
    %v2045 = vmax.f32 %v2021, %v2039
    %v2046 = vmax.f32 %v2022, %v2042
    %v2047 = vmax.f32 %v2023, %v2040
    %v2048 = vmax.f32 %v2024, %v2043
    %v2049 = vmax.f32 %v2025, %v2041
    %v2050 = vmax.f32 %v2026, %v2044
    %v2051 = vpack.c.bf16 %v2047, %v2045
    %v2052 = vpack.c.bf16 %v2048, %v2046
    %v2053 = vpack.c.bf16 %v2049, %v2049
    %v2054 = vpack.c.bf16 %v2050, %v2050
    %v2056 = vsel %vm656, %v2053, 0
    %v2059 = vsel %vm656, %v2054, 0
    %2061 = vmatprep.subr.bf16.mxu0 0
    %2062 = vmatpush1.bf16.msra.mxu0 0
    %2063 = vmatprep.subr.bf16.mxu0 0
    %2064 = vmatpush1.bf16.msra.mxu0 0
    %2065 = vmatprep.subr.bf16.mxu0 0
    %2066 = vmatpush1.bf16.msra.mxu0 0
    %2067 = vmatprep.subr.bf16.mxu0 0
    %2068 = vmatpush1.bf16.msra.mxu0 0
    %2069 = vmatprep.subr.bf16.mxu0 0
    %2070 = vmatpush1.bf16.msra.mxu0 0
    %2071 = vmatprep.subr.bf16.mxu0 0
    %2072 = vmatpush1.bf16.msra.mxu0 0
    %2073 = vmatprep.subr.bf16.mxu0 %v2059
    %2074 = vmatpush1.bf16.msra.mxu0 %v2056
    %2075 = vmatprep.subr.bf16.mxu0 %v2052
    %2076 = vmatpush1.bf16.msra.mxu0 %v2051
    %2077 = vmatprep.subr.bf16.mxu0 0
    %2078 = vmatpush2.bf16.msra.mxu0 0
    %2079 = vmatprep.subr.bf16.mxu0 0
    %2080 = vmatpush2.bf16.msra.mxu0 0
    %2081 = vmatprep.subr.bf16.mxu0 0
    %2082 = vmatpush2.bf16.msra.mxu0 0
    %2083 = vmatprep.subr.bf16.mxu0 0
    %2084 = vmatpush2.bf16.msra.mxu0 0
    %2085 = vmatprep.subr.bf16.mxu0 0
    %2086 = vmatpush2.bf16.msra.mxu0 0
    %2087 = vmatprep.subr.bf16.mxu0 0
    %2088 = vmatpush2.bf16.msra.mxu0 0
    %2089 = vmatprep.subr.bf16.mxu0 0
    %2090 = vmatpush2.bf16.msra.mxu0 0
    %2091 = vmatprep.subr.bf16.mxu0 0
    %2092 = vmatpush2.bf16.msra.mxu0 0
    %2093 = vmatprep.mubr.bf16.mxu0 0
    %2094 = vmatmul.mubr.bf16.gmra.mxu0 %v654
    %v2095 = vpop.f32.mrf.mxu0
    %v2096 = vadd.f32 0.0, %v2095
    %v2097 = vpop.f32.mrf.mxu0
    %v2098 = vadd.f32 0.0, %v2097
    %v2099 = vpop.f32.mrf.mxu0
    %v2100 = vadd.f32 0.0, %v2099
    %v2101 = vpop.f32.mrf.mxu0
    %v2102 = vadd.f32 0.0, %v2101
    %2103 = vdwg.mxu0
    %v2104 = vpack.c.bf16 %v2100, %v2096
    %v2105 = vpack.c.bf16 %v2102, %v2098
    %2106 = vmatprep.subr.bf16.mxu0 0
    %2107 = vmatpush1.bf16.msra.mxu0 %v811
    %2108 = vmatprep.subr.bf16.mxu0 0
    %2109 = vmatpush1.bf16.msra.mxu0 %v810
    %2110 = vmatprep.subr.bf16.mxu0 0
    %2111 = vmatpush1.bf16.msra.mxu0 %v809
    %2112 = vmatprep.subr.bf16.mxu0 0
    %2113 = vmatpush1.bf16.msra.mxu0 %v808
    %2114 = vmatprep.subr.bf16.mxu0 0
    %2115 = vmatpush1.bf16.msra.mxu0 %v807
    %2116 = vmatprep.subr.bf16.mxu0 0
    %2117 = vmatpush1.bf16.msra.mxu0 %v806
    %2118 = vmatprep.subr.bf16.mxu0 0
    %2119 = vmatpush1.bf16.msra.mxu0 %v805
    %2120 = vmatprep.subr.bf16.mxu0 0
    %2121 = vmatpush1.bf16.msra.mxu0 %v804
    %2122 = vmatprep.subr.bf16.mxu0 0
    %2123 = vmatpush2.bf16.msra.mxu0 %v819
    %2124 = vmatprep.subr.bf16.mxu0 0
    %2125 = vmatpush2.bf16.msra.mxu0 %v818
    %2126 = vmatprep.subr.bf16.mxu0 0
    %2127 = vmatpush2.bf16.msra.mxu0 %v817
    %2128 = vmatprep.subr.bf16.mxu0 0
    %2129 = vmatpush2.bf16.msra.mxu0 %v816
    %2130 = vmatprep.subr.bf16.mxu0 0
    %2131 = vmatpush2.bf16.msra.mxu0 %v815
    %2132 = vmatprep.subr.bf16.mxu0 0
    %2133 = vmatpush2.bf16.msra.mxu0 %v814
    %2134 = vmatprep.subr.bf16.mxu0 0
    %2135 = vmatpush2.bf16.msra.mxu0 %v813
    %2136 = vmatprep.subr.bf16.mxu0 0
    %2137 = vmatpush2.bf16.msra.mxu0 %v812
    %2138 = vmatprep.mubr.bf16.mxu0 %v2105
    %2139 = vmatmul.mubr.bf16.gmra.mxu0 %v2104
    %v2140 = vpop.f32.mrf.mxu0
    %v2141 = vadd.f32 0.0, %v2140
    %v2142 = vpop.f32.mrf.mxu0
    %v2143 = vpop.f32.mrf.mxu0
    %v2144 = vpop.f32.mrf.mxu0
    %2145 = vdwg.mxu0
    %v2146 = vadd.f32 %v77, %v2141
    %v2148 = vshrl.u32 %v2104, 16
    %v2150 = vshll.u32 %v2104, 16
    %v2152 = vrot.slane %v2150, 1
    %v2153 = vor.u32 %v2148, %v2152
    %v2155 = vshrl.u32 %v2105, 16
    %v2157 = vshll.u32 %v2105, 16
    %v2159 = vrot.slane %v2157, 1
    %v2160 = vor.u32 %v2155, %v2159
    %2163 = vmatprep.subr.bf16.mxu0 0
    %2164 = vmatpush1.bf16.msra.mxu0 %v997
    %2165 = vmatprep.subr.bf16.mxu0 0
    %2166 = vmatpush1.bf16.msra.mxu0 %v996
    %2167 = vmatprep.subr.bf16.mxu0 0
    %2168 = vmatpush1.bf16.msra.mxu0 %v995
    %2169 = vmatprep.subr.bf16.mxu0 0
    %2170 = vmatpush1.bf16.msra.mxu0 %v994
    %2171 = vmatprep.subr.bf16.mxu0 0
    %2172 = vmatpush1.bf16.msra.mxu0 %v993
    %2173 = vmatprep.subr.bf16.mxu0 0
    %2174 = vmatpush1.bf16.msra.mxu0 %v992
    %2175 = vmatprep.subr.bf16.mxu0 0
    %2176 = vmatpush1.bf16.msra.mxu0 %v991
    %2177 = vmatprep.subr.bf16.mxu0 0
    %2178 = vmatpush1.bf16.msra.mxu0 %v990
    %2179 = vmatprep.subr.bf16.mxu0 0
    %2180 = vmatpush2.bf16.msra.mxu0 %v1005
    %2181 = vmatprep.subr.bf16.mxu0 0
    %2182 = vmatpush2.bf16.msra.mxu0 %v1004
    %2183 = vmatprep.subr.bf16.mxu0 0
    %2184 = vmatpush2.bf16.msra.mxu0 %v1003
    %2185 = vmatprep.subr.bf16.mxu0 0
    %2186 = vmatpush2.bf16.msra.mxu0 %v1002
    %2187 = vmatprep.subr.bf16.mxu0 0
    %2188 = vmatpush2.bf16.msra.mxu0 %v1001
    %2189 = vmatprep.subr.bf16.mxu0 0
    %2190 = vmatpush2.bf16.msra.mxu0 %v1000
    %2191 = vmatprep.subr.bf16.mxu0 0
    %2192 = vmatpush2.bf16.msra.mxu0 %v999
    %2193 = vmatprep.subr.bf16.mxu0 0
    %2194 = vmatpush2.bf16.msra.mxu0 %v998
    %2195 = vmatprep.mubr.bf16.mxu0 %v2160
    %2196 = vmatmul.mubr.bf16.gmra.mxu0 %v2153
    %v2197 = vpop.f32.mrf.mxu0
    %v2198 = vadd.f32 0.0, %v2197
    %v2199 = vpop.f32.mrf.mxu0
    %v2200 = vpop.f32.mrf.mxu0
    %v2201 = vpop.f32.mrf.mxu0
    %2202 = vdwg.mxu0
    %v2203 = vadd.f32 %v2146, %v2198
    %v2206 = vrot.slane %v2104, 1
    %v2207 = vrot.slane %v2105, 1
    %2210 = vmatprep.subr.bf16.mxu0 0
    %2211 = vmatpush1.bf16.msra.mxu0 %v1173
    %2212 = vmatprep.subr.bf16.mxu0 0
    %2213 = vmatpush1.bf16.msra.mxu0 %v1172
    %2214 = vmatprep.subr.bf16.mxu0 0
    %2215 = vmatpush1.bf16.msra.mxu0 %v1171
    %2216 = vmatprep.subr.bf16.mxu0 0
    %2217 = vmatpush1.bf16.msra.mxu0 %v1170
    %2218 = vmatprep.subr.bf16.mxu0 0
    %2219 = vmatpush1.bf16.msra.mxu0 %v1169
    %2220 = vmatprep.subr.bf16.mxu0 0
    %2221 = vmatpush1.bf16.msra.mxu0 %v1168
    %2222 = vmatprep.subr.bf16.mxu0 0
    %2223 = vmatpush1.bf16.msra.mxu0 %v1167
    %2224 = vmatprep.subr.bf16.mxu0 0
    %2225 = vmatpush1.bf16.msra.mxu0 %v1166
    %2226 = vmatprep.subr.bf16.mxu0 0
    %2227 = vmatpush2.bf16.msra.mxu0 %v1181
    %2228 = vmatprep.subr.bf16.mxu0 0
    %2229 = vmatpush2.bf16.msra.mxu0 %v1180
    %2230 = vmatprep.subr.bf16.mxu0 0
    %2231 = vmatpush2.bf16.msra.mxu0 %v1179
    %2232 = vmatprep.subr.bf16.mxu0 0
    %2233 = vmatpush2.bf16.msra.mxu0 %v1178
    %2234 = vmatprep.subr.bf16.mxu0 0
    %2235 = vmatpush2.bf16.msra.mxu0 %v1177
    %2236 = vmatprep.subr.bf16.mxu0 0
    %2237 = vmatpush2.bf16.msra.mxu0 %v1176
    %2238 = vmatprep.subr.bf16.mxu0 0
    %2239 = vmatpush2.bf16.msra.mxu0 %v1175
    %2240 = vmatprep.subr.bf16.mxu0 0
    %2241 = vmatpush2.bf16.msra.mxu0 %v1174
    %2242 = vmatprep.mubr.bf16.mxu0 %v2207
    %2243 = vmatmul.mubr.bf16.gmra.mxu0 %v2206
    %v2244 = vpop.f32.mrf.mxu0
    %v2245 = vadd.f32 0.0, %v2244
    %v2246 = vpop.f32.mrf.mxu0
    %v2247 = vpop.f32.mrf.mxu0
    %v2248 = vpop.f32.mrf.mxu0
    %2249 = vdwg.mxu0
    %v2250 = vadd.f32 %v2203, %v2245
    %v2251 = vrot.slane %v2148, 1
    %v2252 = vrot.slane %v2150, 2
    %v2253 = vor.u32 %v2251, %v2252
    %v2254 = vrot.slane %v2155, 1
    %v2255 = vrot.slane %v2157, 2
    %v2256 = vor.u32 %v2254, %v2255
    %2259 = vmatprep.subr.bf16.mxu0 0
    %2260 = vmatpush1.bf16.msra.mxu0 %v1351
    %2261 = vmatprep.subr.bf16.mxu0 0
    %2262 = vmatpush1.bf16.msra.mxu0 %v1350
    %2263 = vmatprep.subr.bf16.mxu0 0
    %2264 = vmatpush1.bf16.msra.mxu0 %v1349
    %2265 = vmatprep.subr.bf16.mxu0 0
    %2266 = vmatpush1.bf16.msra.mxu0 %v1348
    %2267 = vmatprep.subr.bf16.mxu0 0
    %2268 = vmatpush1.bf16.msra.mxu0 %v1347
    %2269 = vmatprep.subr.bf16.mxu0 0
    %2270 = vmatpush1.bf16.msra.mxu0 %v1346
    %2271 = vmatprep.subr.bf16.mxu0 0
    %2272 = vmatpush1.bf16.msra.mxu0 %v1345
    %2273 = vmatprep.subr.bf16.mxu0 0
    %2274 = vmatpush1.bf16.msra.mxu0 %v1344
    %2275 = vmatprep.subr.bf16.mxu0 0
    %2276 = vmatpush2.bf16.msra.mxu0 %v1359
    %2277 = vmatprep.subr.bf16.mxu0 0
    %2278 = vmatpush2.bf16.msra.mxu0 %v1358
    %2279 = vmatprep.subr.bf16.mxu0 0
    %2280 = vmatpush2.bf16.msra.mxu0 %v1357
    %2281 = vmatprep.subr.bf16.mxu0 0
    %2282 = vmatpush2.bf16.msra.mxu0 %v1356
    %2283 = vmatprep.subr.bf16.mxu0 0
    %2284 = vmatpush2.bf16.msra.mxu0 %v1355
    %2285 = vmatprep.subr.bf16.mxu0 0
    %2286 = vmatpush2.bf16.msra.mxu0 %v1354
    %2287 = vmatprep.subr.bf16.mxu0 0
    %2288 = vmatpush2.bf16.msra.mxu0 %v1353
    %2289 = vmatprep.subr.bf16.mxu0 0
    %2290 = vmatpush2.bf16.msra.mxu0 %v1352
    %2291 = vmatprep.mubr.bf16.mxu0 %v2256
    %2292 = vmatmul.mubr.bf16.gmra.mxu0 %v2253
    %v2293 = vpop.f32.mrf.mxu0
    %v2294 = vadd.f32 0.0, %v2293
    %v2295 = vpop.f32.mrf.mxu0
    %v2296 = vpop.f32.mrf.mxu0
    %v2297 = vpop.f32.mrf.mxu0
    %2298 = vdwg.mxu0
    %v2299 = vadd.f32 %v2250, %v2294
    %v2300 = vrot.slane %v2104, 2
    %v2301 = vrot.slane %v2105, 2
    %2304 = vmatprep.subr.bf16.mxu0 0
    %2305 = vmatpush1.bf16.msra.mxu0 %v1525
    %2306 = vmatprep.subr.bf16.mxu0 0
    %2307 = vmatpush1.bf16.msra.mxu0 %v1524
    %2308 = vmatprep.subr.bf16.mxu0 0
    %2309 = vmatpush1.bf16.msra.mxu0 %v1523
    %2310 = vmatprep.subr.bf16.mxu0 0
    %2311 = vmatpush1.bf16.msra.mxu0 %v1522
    %2312 = vmatprep.subr.bf16.mxu0 0
    %2313 = vmatpush1.bf16.msra.mxu0 %v1521
    %2314 = vmatprep.subr.bf16.mxu0 0
    %2315 = vmatpush1.bf16.msra.mxu0 %v1520
    %2316 = vmatprep.subr.bf16.mxu0 0
    %2317 = vmatpush1.bf16.msra.mxu0 %v1519
    %2318 = vmatprep.subr.bf16.mxu0 0
    %2319 = vmatpush1.bf16.msra.mxu0 %v1518
    %2320 = vmatprep.subr.bf16.mxu0 0
    %2321 = vmatpush2.bf16.msra.mxu0 %v1533
    %2322 = vmatprep.subr.bf16.mxu0 0
    %2323 = vmatpush2.bf16.msra.mxu0 %v1532
    %2324 = vmatprep.subr.bf16.mxu0 0
    %2325 = vmatpush2.bf16.msra.mxu0 %v1531
    %2326 = vmatprep.subr.bf16.mxu0 0
    %2327 = vmatpush2.bf16.msra.mxu0 %v1530
    %2328 = vmatprep.subr.bf16.mxu0 0
    %2329 = vmatpush2.bf16.msra.mxu0 %v1529
    %2330 = vmatprep.subr.bf16.mxu0 0
    %2331 = vmatpush2.bf16.msra.mxu0 %v1528
    %2332 = vmatprep.subr.bf16.mxu0 0
    %2333 = vmatpush2.bf16.msra.mxu0 %v1527
    %2334 = vmatprep.subr.bf16.mxu0 0
    %2335 = vmatpush2.bf16.msra.mxu0 %v1526
    %2336 = vmatprep.mubr.bf16.mxu0 %v2301
    %2337 = vmatmul.mubr.bf16.gmra.mxu0 %v2300
    %v2338 = vpop.f32.mrf.mxu0
    %v2339 = vadd.f32 0.0, %v2338
    %v2340 = vpop.f32.mrf.mxu0
    %v2341 = vpop.f32.mrf.mxu0
    %v2342 = vpop.f32.mrf.mxu0
    %2343 = vdwg.mxu0
    %v2344 = vadd.f32 %v2299, %v2339
    %v2345 = vmax.f32 %v2344, 0.0
    %v2346 = vrot.slane %v2345, 1
    %v2347 = vmax.f32 %v2345, %v2346
    %2348 = vrot.lane.b32.xlu0 %v2347, 127
    %v2349 = vpop.permute.xlu0 %2348
    %v2350 = vmax.f32 %v2347, %v2349
    %v2351 = vpack.c.bf16 %v2350, %v2350
    %v2353 = vsel %vm656, %v2351, 0
    %2355 = vmatprep.subr.bf16.mxu0 0
    %2356 = vmatpush1.bf16.msra.mxu0 0
    %2357 = vmatprep.subr.bf16.mxu0 0
    %2358 = vmatpush1.bf16.msra.mxu0 0
    %2359 = vmatprep.subr.bf16.mxu0 0
    %2360 = vmatpush1.bf16.msra.mxu0 0
    %2361 = vmatprep.subr.bf16.mxu0 0
    %2362 = vmatpush1.bf16.msra.mxu0 0
    %2363 = vmatprep.subr.bf16.mxu0 0
    %2364 = vmatpush1.bf16.msra.mxu0 0
    %2365 = vmatprep.subr.bf16.mxu0 0
    %2366 = vmatpush1.bf16.msra.mxu0 0
    %2367 = vmatprep.subr.bf16.mxu0 0
    %2368 = vmatpush1.bf16.msra.mxu0 0
    %2369 = vmatprep.subr.bf16.mxu0 0
    %2370 = vmatpush1.bf16.msra.mxu0 %v2353
    %2371 = vmatprep.subr.bf16.mxu0 0
    %2372 = vmatpush2.bf16.msra.mxu0 0
    %2373 = vmatprep.subr.bf16.mxu0 0
    %2374 = vmatpush2.bf16.msra.mxu0 0
    %2375 = vmatprep.subr.bf16.mxu0 0
    %2376 = vmatpush2.bf16.msra.mxu0 0
    %2377 = vmatprep.subr.bf16.mxu0 0
    %2378 = vmatpush2.bf16.msra.mxu0 0
    %2379 = vmatprep.subr.bf16.mxu0 0
    %2380 = vmatpush2.bf16.msra.mxu0 0
    %2381 = vmatprep.subr.bf16.mxu0 0
    %2382 = vmatpush2.bf16.msra.mxu0 0
    %2383 = vmatprep.subr.bf16.mxu0 0
    %2384 = vmatpush2.bf16.msra.mxu0 0
    %2385 = vmatprep.subr.bf16.mxu0 0
    %2386 = vmatpush2.bf16.msra.mxu0 0
    %2387 = vmatprep.mubr.bf16.mxu0 0
    %2388 = vmatmul.mubr.bf16.gmra.mxu0 %v1600
    %v2389 = vpop.f32.mrf.mxu0
    %v2390 = vadd.f32 0.0, %v2389
    %v2391 = vpop.f32.mrf.mxu0
    %v2392 = vpop.f32.mrf.mxu0
    %v2393 = vpop.f32.mrf.mxu0
    %2394 = vdwg.mxu0
    %v2395 = vld [vmem:[%s8] sm:$0x1]
    %v2397 = vlaneseq
    %v2398 = vshrl.u32 %v2397, 7
    %v2399 = vsub.s32 0, %v2398
    %v2400 = vrot.slane %v2395, %v2399
    %v2403 = vrot.slane %v2390, 7
    %vm2405 = vcmask 1040384
    %v2406 = vsel %vm2405, %v1640, %v2403
    %v2407 = vpack.c.bf16 %v2406, %v2406
    %v2408 = vld [vmem:[%s7] sm:$0xf]
    %v2409 = vld [vmem:[%s7 + $0x4] sm:$0xf]
    %v2410 = vld [vmem:[%s7 + $0x8] sm:$0xf]
    %v2411 = vld [vmem:[%s7 + $0xc] sm:$0xf]
    %v2412 = vld [vmem:[%s7 + $0x10] sm:$0xf]
    %v2413 = vld [vmem:[%s7 + $0x14] sm:$0xf]
    %v2414 = vld [vmem:[%s7 + $0x18] sm:$0xf]
    %v2415 = vld [vmem:[%s7 + $0x1c] sm:$0xf]
    %v2416 = vld [vmem:[%s7 + $0x20] sm:$0xf]
    %v2417 = vld [vmem:[%s7 + $0x24] sm:$0xf]
    %v2418 = vld [vmem:[%s7 + $0x28] sm:$0xf]
    %v2419 = vld [vmem:[%s7 + $0x2c] sm:$0xf]
    %v2420 = vld [vmem:[%s7 + $0x30] sm:$0xf]
    %v2421 = vld [vmem:[%s7 + $0x34] sm:$0xf]
    %v2422 = vld [vmem:[%s7 + $0x38] sm:$0xf]
    %v2423 = vld [vmem:[%s7 + $0x3c] sm:$0xf]
    %v2440 = vunpack.c.l.b16 %v2408
    %v2441 = vunpack.c.l.b16 %v2409
    %v2442 = vunpack.c.l.b16 %v2410
    %v2443 = vunpack.c.l.b16 %v2411
    %v2444 = vunpack.c.l.b16 %v2412
    %v2445 = vunpack.c.l.b16 %v2413
    %v2446 = vunpack.c.l.b16 %v2414
    %v2447 = vunpack.c.l.b16 %v2415
    %v2448 = vunpack.c.l.b16 %v2416
    %v2449 = vunpack.c.l.b16 %v2417
    %v2450 = vunpack.c.l.b16 %v2418
    %v2451 = vunpack.c.l.b16 %v2419
    %v2452 = vunpack.c.l.b16 %v2420
    %v2453 = vunpack.c.l.b16 %v2421
    %v2454 = vunpack.c.l.b16 %v2422
    %v2455 = vunpack.c.l.b16 %v2423
    %v2456 = vpack.c.b16 %v2441, %v2440
    %v2457 = vpack.c.b16 %v2443, %v2442
    %v2458 = vpack.c.b16 %v2445, %v2444
    %v2459 = vpack.c.b16 %v2447, %v2446
    %v2460 = vpack.c.b16 %v2449, %v2448
    %v2461 = vpack.c.b16 %v2451, %v2450
    %v2462 = vpack.c.b16 %v2453, %v2452
    %v2463 = vpack.c.b16 %v2455, %v2454
    %2472 = vmatprep.subr.bf16.mxu0 0
    %2473 = vmatpush1.bf16.msra.mxu0 %v2463
    %2474 = vmatprep.subr.bf16.mxu0 0
    %2475 = vmatpush1.bf16.msra.mxu0 %v2462
    %2476 = vmatprep.subr.bf16.mxu0 0
    %2477 = vmatpush1.bf16.msra.mxu0 %v2461
    %2478 = vmatprep.subr.bf16.mxu0 0
    %2479 = vmatpush1.bf16.msra.mxu0 %v2460
    %2480 = vmatprep.subr.bf16.mxu0 0
    %2481 = vmatpush1.bf16.msra.mxu0 %v2459
    %2482 = vmatprep.subr.bf16.mxu0 0
    %2483 = vmatpush1.bf16.msra.mxu0 %v2458
    %2484 = vmatprep.subr.bf16.mxu0 0
    %2485 = vmatpush1.bf16.msra.mxu0 %v2457
    %2486 = vmatprep.subr.bf16.mxu0 0
    %2487 = vmatpush1.bf16.msra.mxu0 %v2456
    %2488 = vmatprep.subr.bf16.mxu0 0
    %2489 = vmatpush2.bf16.msra.mxu0 0
    %2490 = vmatprep.subr.bf16.mxu0 0
    %2491 = vmatpush2.bf16.msra.mxu0 0
    %2492 = vmatprep.subr.bf16.mxu0 0
    %2493 = vmatpush2.bf16.msra.mxu0 0
    %2494 = vmatprep.subr.bf16.mxu0 0
    %2495 = vmatpush2.bf16.msra.mxu0 0
    %2496 = vmatprep.subr.bf16.mxu0 0
    %2497 = vmatpush2.bf16.msra.mxu0 0
    %2498 = vmatprep.subr.bf16.mxu0 0
    %2499 = vmatpush2.bf16.msra.mxu0 0
    %2500 = vmatprep.subr.bf16.mxu0 0
    %2501 = vmatpush2.bf16.msra.mxu0 0
    %2502 = vmatprep.subr.bf16.mxu0 0
    %2503 = vmatpush2.bf16.msra.mxu0 0
    %2504 = vmatprep.mubr.bf16.mxu0 0
    %2505 = vmatmul.mubr.bf16.gmra.mxu0 %v2407
    %v2506 = vpop.f32.mrf.mxu0
    %v2507 = vadd.f32 0.0, %v2506
    %v2508 = vpop.f32.mrf.mxu0
    %v2509 = vpop.f32.mrf.mxu0
    %v2510 = vpop.f32.mrf.mxu0
    %2511 = vdwg.mxu0
    %v2512 = vadd.f32 %v2400, %v2507
    %v2514 = vrot.slane %v1640, 1
    %v2516 = vsel %vm2405, %v2514, %v2390
    %v2517 = vpack.c.bf16 %v2516, %v2516
    %s2518 = scalar_lea.vmem %s7, 64
    %v2519 = vld [vmem:[%s2518] sm:$0xf]
    %v2520 = vld [vmem:[%s2518 + $0x4] sm:$0xf]
    %v2521 = vld [vmem:[%s2518 + $0x8] sm:$0xf]
    %v2522 = vld [vmem:[%s2518 + $0xc] sm:$0xf]
    %v2523 = vld [vmem:[%s2518 + $0x10] sm:$0xf]
    %v2524 = vld [vmem:[%s2518 + $0x14] sm:$0xf]
    %v2525 = vld [vmem:[%s2518 + $0x18] sm:$0xf]
    %v2526 = vld [vmem:[%s2518 + $0x1c] sm:$0xf]
    %v2527 = vld [vmem:[%s2518 + $0x20] sm:$0xf]
    %v2528 = vld [vmem:[%s2518 + $0x24] sm:$0xf]
    %v2529 = vld [vmem:[%s2518 + $0x28] sm:$0xf]
    %v2530 = vld [vmem:[%s2518 + $0x2c] sm:$0xf]
    %v2531 = vld [vmem:[%s2518 + $0x30] sm:$0xf]
    %v2532 = vld [vmem:[%s2518 + $0x34] sm:$0xf]
    %v2533 = vld [vmem:[%s2518 + $0x38] sm:$0xf]
    %v2534 = vld [vmem:[%s2518 + $0x3c] sm:$0xf]
    %v2551 = vunpack.c.l.b16 %v2519
    %v2552 = vunpack.c.l.b16 %v2520
    %v2553 = vunpack.c.l.b16 %v2521
    %v2554 = vunpack.c.l.b16 %v2522
    %v2555 = vunpack.c.l.b16 %v2523
    %v2556 = vunpack.c.l.b16 %v2524
    %v2557 = vunpack.c.l.b16 %v2525
    %v2558 = vunpack.c.l.b16 %v2526
    %v2559 = vunpack.c.l.b16 %v2527
    %v2560 = vunpack.c.l.b16 %v2528
    %v2561 = vunpack.c.l.b16 %v2529
    %v2562 = vunpack.c.l.b16 %v2530
    %v2563 = vunpack.c.l.b16 %v2531
    %v2564 = vunpack.c.l.b16 %v2532
    %v2565 = vunpack.c.l.b16 %v2533
    %v2566 = vunpack.c.l.b16 %v2534
    %v2567 = vpack.c.b16 %v2552, %v2551
    %v2568 = vpack.c.b16 %v2554, %v2553
    %v2569 = vpack.c.b16 %v2556, %v2555
    %v2570 = vpack.c.b16 %v2558, %v2557
    %v2571 = vpack.c.b16 %v2560, %v2559
    %v2572 = vpack.c.b16 %v2562, %v2561
    %v2573 = vpack.c.b16 %v2564, %v2563
    %v2574 = vpack.c.b16 %v2566, %v2565
    %2583 = vmatprep.subr.bf16.mxu0 0
    %2584 = vmatpush1.bf16.msra.mxu0 %v2574
    %2585 = vmatprep.subr.bf16.mxu0 0
    %2586 = vmatpush1.bf16.msra.mxu0 %v2573
    %2587 = vmatprep.subr.bf16.mxu0 0
    %2588 = vmatpush1.bf16.msra.mxu0 %v2572
    %2589 = vmatprep.subr.bf16.mxu0 0
    %2590 = vmatpush1.bf16.msra.mxu0 %v2571
    %2591 = vmatprep.subr.bf16.mxu0 0
    %2592 = vmatpush1.bf16.msra.mxu0 %v2570
    %2593 = vmatprep.subr.bf16.mxu0 0
    %2594 = vmatpush1.bf16.msra.mxu0 %v2569
    %2595 = vmatprep.subr.bf16.mxu0 0
    %2596 = vmatpush1.bf16.msra.mxu0 %v2568
    %2597 = vmatprep.subr.bf16.mxu0 0
    %2598 = vmatpush1.bf16.msra.mxu0 %v2567
    %2599 = vmatprep.subr.bf16.mxu0 0
    %2600 = vmatpush2.bf16.msra.mxu0 0
    %2601 = vmatprep.subr.bf16.mxu0 0
    %2602 = vmatpush2.bf16.msra.mxu0 0
    %2603 = vmatprep.subr.bf16.mxu0 0
    %2604 = vmatpush2.bf16.msra.mxu0 0
    %2605 = vmatprep.subr.bf16.mxu0 0
    %2606 = vmatpush2.bf16.msra.mxu0 0
    %2607 = vmatprep.subr.bf16.mxu0 0
    %2608 = vmatpush2.bf16.msra.mxu0 0
    %2609 = vmatprep.subr.bf16.mxu0 0
    %2610 = vmatpush2.bf16.msra.mxu0 0
    %2611 = vmatprep.subr.bf16.mxu0 0
    %2612 = vmatpush2.bf16.msra.mxu0 0
    %2613 = vmatprep.subr.bf16.mxu0 0
    %2614 = vmatpush2.bf16.msra.mxu0 0
    %2615 = vmatprep.mubr.bf16.mxu0 0
    %2616 = vmatmul.mubr.bf16.gmra.mxu0 %v2517
    %v2617 = vpop.f32.mrf.mxu0
    %v2618 = vadd.f32 0.0, %v2617
    %v2619 = vpop.f32.mrf.mxu0
    %v2620 = vpop.f32.mrf.mxu0
    %v2621 = vpop.f32.mrf.mxu0
    %2622 = vdwg.mxu0
    %v2623 = vadd.f32 %v2512, %v2618
    %v2624 = vrot.slane %v1640, 2
    %v2626 = vrot.slane %v2390, 1
    %v2628 = vsel %vm2405, %v2624, %v2626
    %v2629 = vpack.c.bf16 %v2628, %v2628
    %s2630 = scalar_lea.vmem %s7, 128
    %v2631 = vld [vmem:[%s2630] sm:$0xf]
    %v2632 = vld [vmem:[%s2630 + $0x4] sm:$0xf]
    %v2633 = vld [vmem:[%s2630 + $0x8] sm:$0xf]
    %v2634 = vld [vmem:[%s2630 + $0xc] sm:$0xf]
    %v2635 = vld [vmem:[%s2630 + $0x10] sm:$0xf]
    %v2636 = vld [vmem:[%s2630 + $0x14] sm:$0xf]
    %v2637 = vld [vmem:[%s2630 + $0x18] sm:$0xf]
    %v2638 = vld [vmem:[%s2630 + $0x1c] sm:$0xf]
    %v2639 = vld [vmem:[%s2630 + $0x20] sm:$0xf]
    %v2640 = vld [vmem:[%s2630 + $0x24] sm:$0xf]
    %v2641 = vld [vmem:[%s2630 + $0x28] sm:$0xf]
    %v2642 = vld [vmem:[%s2630 + $0x2c] sm:$0xf]
    %v2643 = vld [vmem:[%s2630 + $0x30] sm:$0xf]
    %v2644 = vld [vmem:[%s2630 + $0x34] sm:$0xf]
    %v2645 = vld [vmem:[%s2630 + $0x38] sm:$0xf]
    %v2646 = vld [vmem:[%s2630 + $0x3c] sm:$0xf]
    %v2663 = vunpack.c.l.b16 %v2631
    %v2664 = vunpack.c.l.b16 %v2632
    %v2665 = vunpack.c.l.b16 %v2633
    %v2666 = vunpack.c.l.b16 %v2634
    %v2667 = vunpack.c.l.b16 %v2635
    %v2668 = vunpack.c.l.b16 %v2636
    %v2669 = vunpack.c.l.b16 %v2637
    %v2670 = vunpack.c.l.b16 %v2638
    %v2671 = vunpack.c.l.b16 %v2639
    %v2672 = vunpack.c.l.b16 %v2640
    %v2673 = vunpack.c.l.b16 %v2641
    %v2674 = vunpack.c.l.b16 %v2642
    %v2675 = vunpack.c.l.b16 %v2643
    %v2676 = vunpack.c.l.b16 %v2644
    %v2677 = vunpack.c.l.b16 %v2645
    %v2678 = vunpack.c.l.b16 %v2646
    %v2679 = vpack.c.b16 %v2664, %v2663
    %v2680 = vpack.c.b16 %v2666, %v2665
    %v2681 = vpack.c.b16 %v2668, %v2667
    %v2682 = vpack.c.b16 %v2670, %v2669
    %v2683 = vpack.c.b16 %v2672, %v2671
    %v2684 = vpack.c.b16 %v2674, %v2673
    %v2685 = vpack.c.b16 %v2676, %v2675
    %v2686 = vpack.c.b16 %v2678, %v2677
    %2695 = vmatprep.subr.bf16.mxu0 0
    %2696 = vmatpush1.bf16.msra.mxu0 %v2686
    %2697 = vmatprep.subr.bf16.mxu0 0
    %2698 = vmatpush1.bf16.msra.mxu0 %v2685
    %2699 = vmatprep.subr.bf16.mxu0 0
    %2700 = vmatpush1.bf16.msra.mxu0 %v2684
    %2701 = vmatprep.subr.bf16.mxu0 0
    %2702 = vmatpush1.bf16.msra.mxu0 %v2683
    %2703 = vmatprep.subr.bf16.mxu0 0
    %2704 = vmatpush1.bf16.msra.mxu0 %v2682
    %2705 = vmatprep.subr.bf16.mxu0 0
    %2706 = vmatpush1.bf16.msra.mxu0 %v2681
    %2707 = vmatprep.subr.bf16.mxu0 0
    %2708 = vmatpush1.bf16.msra.mxu0 %v2680
    %2709 = vmatprep.subr.bf16.mxu0 0
    %2710 = vmatpush1.bf16.msra.mxu0 %v2679
    %2711 = vmatprep.subr.bf16.mxu0 0
    %2712 = vmatpush2.bf16.msra.mxu0 0
    %2713 = vmatprep.subr.bf16.mxu0 0
    %2714 = vmatpush2.bf16.msra.mxu0 0
    %2715 = vmatprep.subr.bf16.mxu0 0
    %2716 = vmatpush2.bf16.msra.mxu0 0
    %2717 = vmatprep.subr.bf16.mxu0 0
    %2718 = vmatpush2.bf16.msra.mxu0 0
    %2719 = vmatprep.subr.bf16.mxu0 0
    %2720 = vmatpush2.bf16.msra.mxu0 0
    %2721 = vmatprep.subr.bf16.mxu0 0
    %2722 = vmatpush2.bf16.msra.mxu0 0
    %2723 = vmatprep.subr.bf16.mxu0 0
    %2724 = vmatpush2.bf16.msra.mxu0 0
    %2725 = vmatprep.subr.bf16.mxu0 0
    %2726 = vmatpush2.bf16.msra.mxu0 0
    %2727 = vmatprep.mubr.bf16.mxu0 0
    %2728 = vmatmul.mubr.bf16.gmra.mxu0 %v2629
    %v2729 = vpop.f32.mrf.mxu0
    %v2730 = vadd.f32 0.0, %v2729
    %v2731 = vpop.f32.mrf.mxu0
    %v2732 = vpop.f32.mrf.mxu0
    %v2733 = vpop.f32.mrf.mxu0
    %2734 = vdwg.mxu0
    %v2735 = vadd.f32 %v2623, %v2730
    %v2736 = vrot.slane %v1640, 3
    %v2738 = vrot.slane %v2390, 2
    %v2740 = vsel %vm2405, %v2736, %v2738
    %v2741 = vpack.c.bf16 %v2740, %v2740
    %s2742 = scalar_lea.vmem %s7, 192
    %v2743 = vld [vmem:[%s2742] sm:$0xf]
    %v2744 = vld [vmem:[%s2742 + $0x4] sm:$0xf]
    %v2745 = vld [vmem:[%s2742 + $0x8] sm:$0xf]
    %v2746 = vld [vmem:[%s2742 + $0xc] sm:$0xf]
    %v2747 = vld [vmem:[%s2742 + $0x10] sm:$0xf]
    %v2748 = vld [vmem:[%s2742 + $0x14] sm:$0xf]
    %v2749 = vld [vmem:[%s2742 + $0x18] sm:$0xf]
    %v2750 = vld [vmem:[%s2742 + $0x1c] sm:$0xf]
    %v2751 = vld [vmem:[%s2742 + $0x20] sm:$0xf]
    %v2752 = vld [vmem:[%s2742 + $0x24] sm:$0xf]
    %v2753 = vld [vmem:[%s2742 + $0x28] sm:$0xf]
    %v2754 = vld [vmem:[%s2742 + $0x2c] sm:$0xf]
    %v2755 = vld [vmem:[%s2742 + $0x30] sm:$0xf]
    %v2756 = vld [vmem:[%s2742 + $0x34] sm:$0xf]
    %v2757 = vld [vmem:[%s2742 + $0x38] sm:$0xf]
    %v2758 = vld [vmem:[%s2742 + $0x3c] sm:$0xf]
    %v2775 = vunpack.c.l.b16 %v2743
    %v2776 = vunpack.c.l.b16 %v2744
    %v2777 = vunpack.c.l.b16 %v2745
    %v2778 = vunpack.c.l.b16 %v2746
    %v2779 = vunpack.c.l.b16 %v2747
    %v2780 = vunpack.c.l.b16 %v2748
    %v2781 = vunpack.c.l.b16 %v2749
    %v2782 = vunpack.c.l.b16 %v2750
    %v2783 = vunpack.c.l.b16 %v2751
    %v2784 = vunpack.c.l.b16 %v2752
    %v2785 = vunpack.c.l.b16 %v2753
    %v2786 = vunpack.c.l.b16 %v2754
    %v2787 = vunpack.c.l.b16 %v2755
    %v2788 = vunpack.c.l.b16 %v2756
    %v2789 = vunpack.c.l.b16 %v2757
    %v2790 = vunpack.c.l.b16 %v2758
    %v2791 = vpack.c.b16 %v2776, %v2775
    %v2792 = vpack.c.b16 %v2778, %v2777
    %v2793 = vpack.c.b16 %v2780, %v2779
    %v2794 = vpack.c.b16 %v2782, %v2781
    %v2795 = vpack.c.b16 %v2784, %v2783
    %v2796 = vpack.c.b16 %v2786, %v2785
    %v2797 = vpack.c.b16 %v2788, %v2787
    %v2798 = vpack.c.b16 %v2790, %v2789
    %2807 = vmatprep.subr.bf16.mxu0 0
    %2808 = vmatpush1.bf16.msra.mxu0 %v2798
    %2809 = vmatprep.subr.bf16.mxu0 0
    %2810 = vmatpush1.bf16.msra.mxu0 %v2797
    %2811 = vmatprep.subr.bf16.mxu0 0
    %2812 = vmatpush1.bf16.msra.mxu0 %v2796
    %2813 = vmatprep.subr.bf16.mxu0 0
    %2814 = vmatpush1.bf16.msra.mxu0 %v2795
    %2815 = vmatprep.subr.bf16.mxu0 0
    %2816 = vmatpush1.bf16.msra.mxu0 %v2794
    %2817 = vmatprep.subr.bf16.mxu0 0
    %2818 = vmatpush1.bf16.msra.mxu0 %v2793
    %2819 = vmatprep.subr.bf16.mxu0 0
    %2820 = vmatpush1.bf16.msra.mxu0 %v2792
    %2821 = vmatprep.subr.bf16.mxu0 0
    %2822 = vmatpush1.bf16.msra.mxu0 %v2791
    %2823 = vmatprep.subr.bf16.mxu0 0
    %2824 = vmatpush2.bf16.msra.mxu0 0
    %2825 = vmatprep.subr.bf16.mxu0 0
    %2826 = vmatpush2.bf16.msra.mxu0 0
    %2827 = vmatprep.subr.bf16.mxu0 0
    %2828 = vmatpush2.bf16.msra.mxu0 0
    %2829 = vmatprep.subr.bf16.mxu0 0
    %2830 = vmatpush2.bf16.msra.mxu0 0
    %2831 = vmatprep.subr.bf16.mxu0 0
    %2832 = vmatpush2.bf16.msra.mxu0 0
    %2833 = vmatprep.subr.bf16.mxu0 0
    %2834 = vmatpush2.bf16.msra.mxu0 0
    %2835 = vmatprep.subr.bf16.mxu0 0
    %2836 = vmatpush2.bf16.msra.mxu0 0
    %2837 = vmatprep.subr.bf16.mxu0 0
    %2838 = vmatpush2.bf16.msra.mxu0 0
    %2839 = vmatprep.mubr.bf16.mxu0 0
    %2840 = vmatmul.mubr.bf16.gmra.mxu0 %v2741
    %v2841 = vpop.f32.mrf.mxu0
    %v2842 = vadd.f32 0.0, %v2841
    %v2843 = vpop.f32.mrf.mxu0
    %v2844 = vpop.f32.mrf.mxu0
    %v2845 = vpop.f32.mrf.mxu0
    %2846 = vdwg.mxu0
    %v2847 = vadd.f32 %v2735, %v2842
    %v2848 = vmax.f32 %v2847, 0.0
    %v2849 = vpack.c.bf16 %v2848, %v2848
    %v2850 = vld [vmem:[%s9] sm:$0xf]
    %v2851 = vld [vmem:[%s9 + $0x4] sm:$0xf]
    %v2852 = vld [vmem:[%s9 + $0x8] sm:$0xf]
    %v2853 = vld [vmem:[%s9 + $0xc] sm:$0xf]
    %v2854 = vld [vmem:[%s9 + $0x10] sm:$0xf]
    %v2855 = vld [vmem:[%s9 + $0x14] sm:$0xf]
    %v2856 = vld [vmem:[%s9 + $0x18] sm:$0xf]
    %v2857 = vld [vmem:[%s9 + $0x1c] sm:$0xf]
    %v2858 = vld [vmem:[%s9 + $0x20] sm:$0xf]
    %v2859 = vld [vmem:[%s9 + $0x24] sm:$0xf]
    %v2860 = vld [vmem:[%s9 + $0x28] sm:$0xf]
    %v2861 = vld [vmem:[%s9 + $0x2c] sm:$0xf]
    %v2862 = vld [vmem:[%s9 + $0x30] sm:$0xf]
    %v2863 = vld [vmem:[%s9 + $0x34] sm:$0xf]
    %v2864 = vld [vmem:[%s9 + $0x38] sm:$0xf]
    %v2865 = vld [vmem:[%s10] sm:$0x1]
    %v2867 = vlaneseq
    %v2868 = vshrl.u32 %v2867, 7
    %v2869 = vsub.s32 0, %v2868
    %v2870 = vrot.slane %v2865, %v2869
    %v2887 = vunpack.c.l.b16 %v2850
    %v2888 = vunpack.c.l.b16 %v2851
    %v2889 = vunpack.c.l.b16 %v2852
    %v2890 = vunpack.c.l.b16 %v2853
    %v2891 = vunpack.c.l.b16 %v2854
    %v2892 = vunpack.c.l.b16 %v2855
    %v2893 = vunpack.c.l.b16 %v2856
    %v2894 = vunpack.c.l.b16 %v2857
    %v2895 = vunpack.c.l.b16 %v2858
    %v2896 = vunpack.c.l.b16 %v2859
    %v2897 = vunpack.c.l.b16 %v2860
    %v2898 = vunpack.c.l.b16 %v2861
    %v2899 = vunpack.c.l.b16 %v2862
    %v2900 = vunpack.c.l.b16 %v2863
    %v2901 = vunpack.c.l.b16 %v2864
    %v2902 = vpack.c.b16 %v2888, %v2887
    %v2903 = vpack.c.b16 %v2890, %v2889
    %v2904 = vpack.c.b16 %v2892, %v2891
    %v2905 = vpack.c.b16 %v2894, %v2893
    %v2906 = vpack.c.b16 %v2896, %v2895
    %v2907 = vpack.c.b16 %v2898, %v2897
    %v2908 = vpack.c.b16 %v2900, %v2899
    %v2909 = vpack.c.b16 %v2901, %v2901
    %vm2917 = vcmask 982016
    %v2919 = vsel %vm2917, %v2849, 0
    %v2922 = vsel %vm656, %v2909, 0
    %2924 = vmatprep.subr.bf16.mxu0 0
    %2925 = vmatpush1.bf16.msra.mxu0 %v2922
    %2926 = vmatprep.subr.bf16.mxu0 0
    %2927 = vmatpush1.bf16.msra.mxu0 %v2908
    %2928 = vmatprep.subr.bf16.mxu0 0
    %2929 = vmatpush1.bf16.msra.mxu0 %v2907
    %2930 = vmatprep.subr.bf16.mxu0 0
    %2931 = vmatpush1.bf16.msra.mxu0 %v2906
    %2932 = vmatprep.subr.bf16.mxu0 0
    %2933 = vmatpush1.bf16.msra.mxu0 %v2905
    %2934 = vmatprep.subr.bf16.mxu0 0
    %2935 = vmatpush1.bf16.msra.mxu0 %v2904
    %2936 = vmatprep.subr.bf16.mxu0 0
    %2937 = vmatpush1.bf16.msra.mxu0 %v2903
    %2938 = vmatprep.subr.bf16.mxu0 0
    %2939 = vmatpush1.bf16.msra.mxu0 %v2902
    %2940 = vmatprep.subr.bf16.mxu0 0
    %2941 = vmatpush2.bf16.msra.mxu0 0
    %2942 = vmatprep.subr.bf16.mxu0 0
    %2943 = vmatpush2.bf16.msra.mxu0 0
    %2944 = vmatprep.subr.bf16.mxu0 0
    %2945 = vmatpush2.bf16.msra.mxu0 0
    %2946 = vmatprep.subr.bf16.mxu0 0
    %2947 = vmatpush2.bf16.msra.mxu0 0
    %2948 = vmatprep.subr.bf16.mxu0 0
    %2949 = vmatpush2.bf16.msra.mxu0 0
    %2950 = vmatprep.subr.bf16.mxu0 0
    %2951 = vmatpush2.bf16.msra.mxu0 0
    %2952 = vmatprep.subr.bf16.mxu0 0
    %2953 = vmatpush2.bf16.msra.mxu0 0
    %2954 = vmatprep.subr.bf16.mxu0 0
    %2955 = vmatpush2.bf16.msra.mxu0 0
    %2956 = vmatprep.mubr.bf16.mxu0 0
    %2957 = vmatmul.mubr.bf16.gmra.mxu0 %v2919
    %v2958 = vpop.f32.mrf.mxu0
    %v2959 = vadd.f32 %v2870, %v2958
    %v2960 = vpop.f32.mrf.mxu0
    %v2961 = vpop.f32.mrf.mxu0
    %v2962 = vpop.f32.mrf.mxu0
    %2963 = vdwg.mxu0
    %v2964 = vmax.f32 %v2959, 0.0
    %v2965 = vpack.c.bf16 %v2964, %v2964
    %v2966 = vld [vmem:[%s11] sm:$0xf]
    %v2967 = vld [vmem:[%s11 + $0x4] sm:$0xf]
    %v2968 = vld [vmem:[%s11 + $0x8] sm:$0xf]
    %v2969 = vld [vmem:[%s11 + $0xc] sm:$0xf]
    %v2970 = vld [vmem:[%s11 + $0x10] sm:$0xf]
    %v2971 = vld [vmem:[%s11 + $0x14] sm:$0xf]
    %v2972 = vld [vmem:[%s11 + $0x18] sm:$0xf]
    %v2973 = vld [vmem:[%s11 + $0x1c] sm:$0xf]
    %v2974 = vld [vmem:[%s11 + $0x20] sm:$0xf]
    %v2975 = vld [vmem:[%s11 + $0x24] sm:$0xf]
    %v2976 = vld [vmem:[%s11 + $0x28] sm:$0x3]
    %v2977 = vld [vmem:[%s12] sm:$0x1]
    %v2979 = vlaneseq
    %v2980 = vshrl.u32 %v2979, 7
    %v2981 = vsub.s32 0, %v2980
    %v2982 = vrot.slane %v2977, %v2981
    %v2995 = vunpack.c.l.b16 %v2966
    %v2996 = vunpack.c.l.b16 %v2967
    %v2997 = vunpack.c.l.b16 %v2968
    %v2998 = vunpack.c.l.b16 %v2969
    %v2999 = vunpack.c.l.b16 %v2970
    %v3000 = vunpack.c.l.b16 %v2971
    %v3001 = vunpack.c.l.b16 %v2972
    %v3002 = vunpack.c.l.b16 %v2973
    %v3003 = vunpack.c.l.b16 %v2974
    %v3004 = vunpack.c.l.b16 %v2975
    %v3005 = vunpack.c.l.b16 %v2976
    %v3006 = vpack.c.b16 %v2996, %v2995
    %v3007 = vpack.c.b16 %v2998, %v2997
    %v3008 = vpack.c.b16 %v3000, %v2999
    %v3009 = vpack.c.b16 %v3002, %v3001
    %v3010 = vpack.c.b16 %v3004, %v3003
    %v3011 = vpack.c.b16 %v3005, %v3005
    %vm3017 = vcmask 687104
    %v3019 = vsel %vm3017, %v2965, 0
    %vm3021 = vcmask 1041408
    %v3023 = vsel %vm3021, %v3011, 0
    %3025 = vmatprep.subr.bf16.mxu0 0
    %3026 = vmatpush1.bf16.msra.mxu0 0
    %3027 = vmatprep.subr.bf16.mxu0 0
    %3028 = vmatpush1.bf16.msra.mxu0 0
    %3029 = vmatprep.subr.bf16.mxu0 0
    %3030 = vmatpush1.bf16.msra.mxu0 %v3023
    %3031 = vmatprep.subr.bf16.mxu0 0
    %3032 = vmatpush1.bf16.msra.mxu0 %v3010
    %3033 = vmatprep.subr.bf16.mxu0 0
    %3034 = vmatpush1.bf16.msra.mxu0 %v3009
    %3035 = vmatprep.subr.bf16.mxu0 0
    %3036 = vmatpush1.bf16.msra.mxu0 %v3008
    %3037 = vmatprep.subr.bf16.mxu0 0
    %3038 = vmatpush1.bf16.msra.mxu0 %v3007
    %3039 = vmatprep.subr.bf16.mxu0 0
    %3040 = vmatpush1.bf16.msra.mxu0 %v3006
    %3041 = vmatprep.subr.bf16.mxu0 0
    %3042 = vmatpush2.bf16.msra.mxu0 0
    %3043 = vmatprep.subr.bf16.mxu0 0
    %3044 = vmatpush2.bf16.msra.mxu0 0
    %3045 = vmatprep.subr.bf16.mxu0 0
    %3046 = vmatpush2.bf16.msra.mxu0 0
    %3047 = vmatprep.subr.bf16.mxu0 0
    %3048 = vmatpush2.bf16.msra.mxu0 0
    %3049 = vmatprep.subr.bf16.mxu0 0
    %3050 = vmatpush2.bf16.msra.mxu0 0
    %3051 = vmatprep.subr.bf16.mxu0 0
    %3052 = vmatpush2.bf16.msra.mxu0 0
    %3053 = vmatprep.subr.bf16.mxu0 0
    %3054 = vmatpush2.bf16.msra.mxu0 0
    %3055 = vmatprep.subr.bf16.mxu0 0
    %3056 = vmatpush2.bf16.msra.mxu0 0
    %3057 = vmatprep.mubr.bf16.mxu0 0
    %3058 = vmatmul.mubr.bf16.gmra.mxu0 %v3019
    %v3059 = vpop.f32.mrf.mxu0
    %v3060 = vadd.f32 %v2982, %v3059
    %v3061 = vpop.f32.mrf.mxu0
    %v3062 = vpop.f32.mrf.mxu0
    %v3063 = vpop.f32.mrf.mxu0
    %3064 = vdwg.mxu0
    %vm3065 = vcmask 74752
    %v3066 = vsel %vm3065, %v3060, -inf
    %3067 = vmax.xlane.f32.xlu0 %v3066
    %v3068 = vpop.xlane.xlu0 %3067
    %v3069 = vsub.f32 %v3060, %v3068
    %v3070 = vmul.f32 %v3069, 1.442695
    %v3071 = vpow.pop %v3070
    %v3072 = vsel %vm3065, %v3071, 0.0
    %3073 = vadd.xlane.f32.xlu0 %v3072
    %v3074 = vpop.xlane.xlu0 %3073
    %v3075 = vrcp.pop %v3074
    %v3076 = vmul.f32 %v3071, %v3075
    %3077 = vst.msk [vmem:[#allocation5] sm:$0x3] %vm3065, %v3076
    // Predicated region
    $region58: #{lenet_forward.1} parent=1 // pred_check
      _
    $region59: #{lenet_forward.1} parent=1 // pred_check_branch
      %3079 = sbr.rel (0) target = $region61
    $region60: #{lenet_forward.1} parent=1 // pred_region
      %s3081 = ssub.s32 32, 32
      %3082 = vsyncadd [#allocation4], %s3081
      %s3084 = sshll.u32 [#allocation5], 4
      %s3085 = int_to_ptr.vmem [resolvable:$true] %s3084
      %3087 = dma.vmem_to_hbm [thread:$0]  %s3085, 32, %s13, [#allocation4]
    $region61: #{lenet_forward.1} parent=1 // pred_fallthru
      _
    // Predicated region
    $region62: #{lenet_forward.1} parent=1 // pred_check
      _
    $region63: #{lenet_forward.1} parent=1 // pred_check_branch
      %3089 = sbr.rel (0) target = $region65
    $region64: #{lenet_forward.1} parent=1 // pred_region
      %3090 = dma.done [#allocation4], 32
    $region65: #{lenet_forward.1} parent=1 // pred_fallthru
      _
    %3091 = vsyncpa [#allocation3], 1
    %3092 = vsyncpa [#allocation4], 1

</llo_original>
